<compile_context>
chip_gen: v7x
topology: tpu7x:2x2x1
jax: 0.10.0
libtpu: 0.0.40
codegen_flags: <defaults>
</compile_context>

<pallas_src>
import functools

import jax
import jax.numpy as jnp
from jax.experimental import pallas as pl
from jax.experimental.pallas import tpu as pltpu


def _round_up(x, m):
    return (x + m - 1) // m * m


_PAD = 16  # left zero-pad (columns) of the mid buffer -> 16-aligned bf16 stores


def _double_conv_kernel(x_hbm, w1_ref, b1_ref, w2_ref, b2_ref, o_ref,
                        xw_ref, mid_ref, dma_sem, *, W, WO, TH, Cout_p):
    """One (image n, row-tile t) grid step.

    x_hbm  : (N, H+4, WWI, Cin_p)    bf16  zero-padded input, left in HBM (pl.ANY)
    w1_ref : (3, 3*Cin_p,  Cout_p)   bf16  stage-1 weights, BN scale folded,
                                           K rows ordered (dx, cin)
    w2_ref : (3, 3*Cout_p, Cout_p)   bf16  stage-2 weights, same packing
    b1/b2  : (1, Cout_p)             f32   folded BN bias
    o_ref  : (1, TH, W, Cout_p)      bf16  output block
    xw_ref : (2, TH+4, WWI, Cin_p)   bf16  double-buffered input row window
    mid_ref: (TH+2, WM, Cout_p)      bf16  stage-1 out (+1 row halo each side;
                                           real cols at [_PAD, _PAD+W))
    """
    n = pl.program_id(0)
    t = pl.program_id(1)
    T = pl.num_programs(1)
    slot = t % 2
    R1 = TH + 2                       # stage-1 rows (incl. stage-2 row halo)
    WM = mid_ref.shape[1]

    # ---- double-buffered fetch of the (TH+4)-row input halo window ----------
    def fetch(tile, buf):
        start = pl.multiple_of(tile * TH, TH)
        pltpu.make_async_copy(x_hbm.at[n, pl.ds(start, TH + 4)],
                              xw_ref.at[buf], dma_sem.at[buf]).start()

    @pl.when(t == 0)                  # first tile of this image: nothing prefetched
    def _():
        fetch(t, slot)

    @pl.when(t + 1 < T)               # prefetch next row tile (hidden by this tile's MXU work)
    def _():
        fetch(t + 1, 1 - slot)

    pltpu.make_async_copy(x_hbm.at[n, pl.ds(0, TH + 4)],
                          xw_ref.at[slot], dma_sem.at[slot]).wait()

    # ---- stage 1: conv3x3 (+ folded BN) -> ReLU over TH+2 rows ---------------
    # im2col along dx only: xcol1[i, c, dx*Cin_p:...] = xw[i, c+dx, :].  The dy
    # taps are free row slices of xcol1, giving 3 matmuls with K = 3*Cin_p into
    # a single f32 accumulator initialised with the BN bias.
    xw = xw_ref[slot]
    xcol1 = jnp.concatenate(
        [xw[:, 0:WO, :], xw[:, 1:1 + WO, :], xw[:, 2:2 + WO, :]], axis=-1)
    L1 = R1 * WO
    acc1 = jnp.broadcast_to(b1_ref[...], (L1, Cout_p))
    for dy in range(3):
        slab = xcol1[dy:dy + R1].reshape(L1, xcol1.shape[-1])
        acc1 = acc1 + jnp.dot(slab, w1_ref[dy],
                              preferred_element_type=jnp.float32)
    y1 = jnp.maximum(acc1, 0.0).reshape(R1, WO, Cout_p)

    # Aligned (offset-16) store of stage-1 rows; re-zero only the halo/padding
    # column blocks.  Boundary row tiles also zero the row halos (stage 2 sees
    # zero padding outside the image, not conv-of-padding).
    mid_ref[:, _PAD:_PAD + WO, :] = y1.astype(mid_ref.dtype)
    mid_ref[:, 0:_PAD, :] = jnp.zeros((R1, _PAD, Cout_p), mid_ref.dtype)
    mid_ref[:, _PAD + W:WM, :] = jnp.zeros((R1, WM - (_PAD + W), Cout_p),
                                           mid_ref.dtype)

    @pl.when(t == 0)
    def _():
        mid_ref[0:1] = jnp.zeros((1, WM, Cout_p), mid_ref.dtype)

    @pl.when(t == T - 1)
    def _():
        mid_ref[R1 - 1:R1] = jnp.zeros((1, WM, Cout_p), mid_ref.dtype)

    # ---- stage 2: conv3x3 (+ folded BN) -> ReLU over the TH output rows ------
    midv = mid_ref[...]
    xcol2 = jnp.concatenate(
        [midv[:, _PAD - 1:_PAD - 1 + WO, :],
         midv[:, _PAD:_PAD + WO, :],
         midv[:, _PAD + 1:_PAD + 1 + WO, :]], axis=-1)
    L2 = TH * WO
    acc2 = jnp.broadcast_to(b2_ref[...], (L2, Cout_p))
    for dy in range(3):
        slab = xcol2[dy:dy + TH].reshape(L2, xcol2.shape[-1])
        acc2 = acc2 + jnp.dot(slab, w2_ref[dy],
                              preferred_element_type=jnp.float32)
    y2 = jnp.maximum(acc2, 0.0).reshape(TH, WO, Cout_p)
    o_ref[0] = y2[:, :W, :].astype(o_ref.dtype)


def _vmem_limit_bytes():
    """Per-core VMEM limit for this kernel (generation aware, safe fallback)."""
    try:
        cap = int(pltpu.get_tpu_info().vmem_capacity_bytes)
    except Exception:                       # conservative fallback = v7x-sized VMEM
        cap = 64 * 1024 * 1024
    return min(96 * 1024 * 1024, (cap * 3) // 4)


def _pick_tile_h(N, H, W, Cin_p, Cout_p, budget):
    """Largest divisor of H whose per-step VMEM working set fits the budget."""
    WO = _round_up(W, 16)
    WWI = WO + 16
    WM = WO + 32

    def est(th):
        return (2 * (th + 4) * WWI * Cin_p * 2            # input window (x2 slots)
                + (th + 2) * WM * Cout_p * 2              # mid buffer
                + 2 * th * W * Cout_p * 2                 # output block (pipelined x2)
                + 2 * 9 * (Cin_p + Cout_p) * Cout_p * 2   # weights (x2 buffers)
                + (th + 4) * WO * 3 * Cin_p * 2           # stage-1 im2col
                + (th + 2) * WO * 3 * Cout_p * 2          # stage-2 im2col
                + (th + 2) * WO * Cout_p * 4)             # f32 accumulator

    fitting = [d for d in range(1, H + 1) if H % d == 0 and est(d) <= budget]
    if not fitting:
        return 1
    th = max(fitting)
    if N == 1 and th == H:
        # Keep >= 2 row tiles so the cross-step DMA prefetch has work to hide
        # behind (and the pipeline has more than one step at all).
        smaller = [d for d in fitting if d < H]
        if smaller:
            th = max(smaller)
    return th


def double_conv(x_nchw, w1, g1, beta1, mean1, var1, w2, g2, beta2, mean2, var2,
                eps=1e-5, tile_h=None):
    """Pallas DoubleConv.  x_nchw: (N, Cin, H, W) f32 -> (N, Cout, H, W) f32."""
    N, Cin, H, W = x_nchw.shape
    Cout = w1.shape[0]

    Cin_p = _round_up(Cin, 128)        # lane-dense channels (MXU K, loads)
    Cout_p = _round_up(Cout, 128)      # lane-dense channels (MXU N, stores)
    WO = _round_up(W, 16)              # 16-aligned compute width (bf16 sublanes)
    WWI = WO + 16                      # padded input width (1 left + >=15 right zeros)
    WM = WO + 32                       # mid width (16 left + >=16 right zero cols)

    vmem_limit = _vmem_limit_bytes()
    if tile_h is None:
        tile_h = _pick_tile_h(N, H, W, Cin_p, Cout_p, budget=(vmem_limit * 3) // 5)
    TH = int(tile_h)
    if H % TH != 0:
        raise ValueError(f"tile_h={TH} must divide H={H}")
    T = H // TH

    f32, bf16 = jnp.float32, jnp.bfloat16

    # Fold BatchNorm (eval mode): scale goes into the bf16 weights, bias
    # initialises the MXU accumulator inside the kernel.
    def fold(g, beta, mean, var):
        s = (g * jax.lax.rsqrt(var + eps)).astype(f32)
        b = (beta - mean * s).astype(f32)
        return s, jnp.pad(b, (0, Cout_p - Cout)).reshape(1, Cout_p)

    s1, b1 = fold(g1, beta1, mean1, var1)
    s2, b2 = fold(g2, beta2, mean2, var2)

    # PyTorch OIHW -> (ky, kx*Cin_p + ci, co), BN scale folded, channel padded,
    # bf16 (matches the kernel's dx-packed K = 3*C matmuls).
    def prep_w(w, scale, cin, cin_p):
        w = w.astype(f32) * scale[:, None, None, None]
        w = jnp.transpose(w, (2, 3, 1, 0))                  # (ky, kx, ci, co)
        w = jnp.pad(w, ((0, 0), (0, 0), (0, cin_p - cin), (0, Cout_p - Cout)))
        return w.reshape(3, 3 * cin_p, Cout_p).astype(bf16)

    w1_p = prep_w(w1, s1, Cin, Cin_p)
    w2_p = prep_w(w2, s2, Cout, Cout_p)

    # NCHW -> NHWC; pad rows by 2, cols by (1, WWI-1-W), channels to Cin_p; bf16.
    # TODO(synk): these prep / post layout passes disappear if activations stay
    #             NHWC bf16 (channel padded) end-to-end across DoubleConv blocks.
    x = jnp.transpose(x_nchw, (0, 2, 3, 1))
    x = jnp.pad(x, ((0, 0), (2, 2), (1, WWI - 1 - W), (0, Cin_p - Cin)))
    x = x.astype(bf16)                                      # (N, H+4, WWI, Cin_p)

    kernel = functools.partial(_double_conv_kernel, W=W, WO=WO, TH=TH,
                               Cout_p=Cout_p)

    out = pl.pallas_call(
        kernel,
        out_shape=jax.ShapeDtypeStruct((N, H, W, Cout_p), bf16),
        grid_spec=pltpu.PrefetchScalarGridSpec(
            num_scalar_prefetch=0,
            grid=(N, T),
            in_specs=[
                pl.BlockSpec(memory_space=pl.ANY),          # x stays in HBM
                pl.BlockSpec((3, 3 * Cin_p, Cout_p), lambda n, t: (0, 0, 0)),
                pl.BlockSpec((1, Cout_p), lambda n, t: (0, 0)),
                pl.BlockSpec((3, 3 * Cout_p, Cout_p), lambda n, t: (0, 0, 0)),
                pl.BlockSpec((1, Cout_p), lambda n, t: (0, 0)),
            ],
            out_specs=pl.BlockSpec((1, TH, W, Cout_p), lambda n, t: (n, t, 0, 0)),
            scratch_shapes=[
                pltpu.VMEM((2, TH + 4, WWI, Cin_p), bf16),  # double-buffered window
                pltpu.VMEM((TH + 2, WM, Cout_p), bf16),     # stage-1 out + halos
                pltpu.SemaphoreType.DMA((2,)),
            ],
        ),
        compiler_params=pltpu.CompilerParams(
            # t carries the DMA double-buffer state across steps -> "arbitrary";
            # n is independent and feeds both TensorCores on megacore parts.
            dimension_semantics=("parallel", "arbitrary"),
            vmem_limit_bytes=vmem_limit),
    )(x, w1_p, b1, w2_p, b2)

    # Strip channel padding, NHWC -> NCHW, back to f32 (one fused pass).
    return jnp.transpose(out[:, :, :, :Cout], (0, 3, 1, 2)).astype(f32)


def _reference(x_nchw, w1, g1, beta1, mean1, var1, w2, g2, beta2, mean2, var2,
               eps=1e-5):
    """Pure-JAX reference mirroring the kernel's bf16 quantisation points."""
    f32, bf16 = jnp.float32, jnp.bfloat16

    def conv(x, w):
        return jax.lax.conv_general_dilated(
            x.astype(bf16).astype(f32), w.astype(bf16).astype(f32),
            window_strides=(1, 1), padding=((1, 1), (1, 1)),
            dimension_numbers=("NCHW", "OIHW", "NCHW"))

    def fold(g, beta, mean, var):
        s = g * jax.lax.rsqrt(var + eps)
        return s, beta - mean * s

    s1, b1 = fold(g1, beta1, mean1, var1)
    s2, b2 = fold(g2, beta2, mean2, var2)
    y = jax.nn.relu(conv(x_nchw, w1 * s1[:, None, None, None])
                    + b1.reshape(1, -1, 1, 1))
    y = jax.nn.relu(conv(y, w2 * s2[:, None, None, None])
                    + b2.reshape(1, -1, 1, 1))
    return y


if __name__ == "__main__":
    N, Cin, Cout, H, W = 2, 4, 8, 16, 16

    key = jax.random.PRNGKey(0)
    k_x, k_w1, k_w2 = jax.random.split(key, 3)

    x = jax.random.normal(k_x, (N, Cin, H, W), dtype=jnp.float32)

    # Conv weights (OIHW, bias=False), deterministic.
    w1 = jax.random.normal(k_w1, (Cout, Cin, 3, 3), dtype=jnp.float32) * 0.1
    w2 = jax.random.normal(k_w2, (Cout, Cout, 3, 3), dtype=jnp.float32) * 0.1

    # BatchNorm params / running stats, deterministic and non-trivial.
    g1 = 1.0 + 0.1 * jnp.arange(Cout, dtype=jnp.float32)
    beta1 = 0.05 * jnp.arange(Cout, dtype=jnp.float32)
    mean1 = 0.01 * jnp.arange(Cout, dtype=jnp.float32)
    var1 = 1.0 + 0.02 * jnp.arange(Cout, dtype=jnp.float32)

    g2 = 1.0 - 0.05 * jnp.arange(Cout, dtype=jnp.float32)
    beta2 = -0.03 * jnp.arange(Cout, dtype=jnp.float32)
    mean2 = 0.02 * jnp.arange(Cout, dtype=jnp.float32)
    var2 = 1.0 + 0.01 * jnp.arange(Cout, dtype=jnp.float32)

    args = (x, w1, g1, beta1, mean1, var1, w2, g2, beta2, mean2, var2)
    ref = _reference(*args)

    # Default tile (heuristic -> TH == H here, single row tile per image).
    out_full = jax.block_until_ready(jax.jit(double_conv)(*args))
    # Explicit 2-tile run: exercises the double-buffered DMA prefetch path and
    # the cross-tile stage-1 halo recompute / boundary-row zeroing.
    out_tiled = jax.block_until_ready(
        jax.jit(functools.partial(double_conv, tile_h=8))(*args))

    assert out_full.shape == (N, Cout, H, W)
    assert out_tiled.shape == (N, Cout, H, W)
    assert jnp.allclose(out_full, ref, atol=1e-2, rtol=1e-2), "mismatch (TH=H)"
    assert jnp.allclose(out_tiled, ref, atol=1e-2, rtol=1e-2), "mismatch (TH=8)"

    print("KERNEL_OK")
</pallas_src>

<mosaic_0001>
module attributes {stable_mosaic.version = 11 : i64} {
  func.func @_double_conv_kernel(%arg0: i32, %arg1: i32, %arg2: memref<2x20x32x128xbf16, #tpu.memory_space<any>>, %arg3: memref<3x384x128xbf16, #tpu.memory_space<vmem>>, %arg4: memref<1x128xf32, #tpu.memory_space<vmem>>, %arg5: memref<3x384x128xbf16, #tpu.memory_space<vmem>>, %arg6: memref<1x128xf32, #tpu.memory_space<vmem>>, %arg7: memref<1x16x16x128xbf16, #tpu.memory_space<vmem>>, %arg8: memref<2x20x32x128xbf16, #tpu.memory_space<vmem>>, %arg9: memref<18x48x128xbf16, #tpu.memory_space<vmem>>, %arg10: memref<2x!tpu.dma_semaphore, #tpu.memory_space<semaphore_mem>>) attributes {dimension_semantics = [#tpu.dimension_semantics<parallel>, #tpu.dimension_semantics<arbitrary>], iteration_bounds = array<i64: 2, 1>, scalar_prefetch = 0 : i64, scratch_operands = 3 : i64, tpu.core_type = #tpu.core_type<tc>, window_params = [{}, {pipeline_mode = #tpu.pipeline_mode<synchronous>, transform_indices = @transform_1, window_bounds = array<i64: 3, 384, 128>}, {pipeline_mode = #tpu.pipeline_mode<synchronous>, transform_indices = @transform_2, window_bounds = array<i64: 1, 128>}, {pipeline_mode = #tpu.pipeline_mode<synchronous>, transform_indices = @transform_3, window_bounds = array<i64: 3, 384, 128>}, {pipeline_mode = #tpu.pipeline_mode<synchronous>, transform_indices = @transform_4, window_bounds = array<i64: 1, 128>}, {transform_indices = @transform_5, window_bounds = array<i64: 1, 16, 16, 128>}]} {
    %c2_i32 = arith.constant 2 : i32
    %c0_i32 = arith.constant 0 : i32
    %0 = arith.cmpi eq, %c2_i32, %c0_i32 : i32
    %c1_i32 = arith.constant 1 : i32
    %1 = arith.select %0, %c1_i32, %c2_i32 : i32
    %2 = arith.remsi %arg1, %1 : i32
    %c0_i32_0 = arith.constant 0 : i32
    %3 = arith.cmpi ne, %2, %c0_i32_0 : i32
    %c0_i32_1 = arith.constant 0 : i32
    %4 = arith.cmpi slt, %2, %c0_i32_1 : i32
    %c0_i32_2 = arith.constant 0 : i32
    %5 = arith.cmpi slt, %1, %c0_i32_2 : i32
    %6 = arith.xori %4, %5 : i1
    %7 = arith.andi %6, %3 : i1
    %8 = arith.addi %2, %1 : i32
    %9 = arith.select %7, %8, %2 : i32
    %c0_i32_3 = arith.constant 0 : i32
    %10 = arith.cmpi eq, %arg1, %c0_i32_3 : i32
    %11 = arith.extui %10 : i1 to i32
    %c0_i32_4 = arith.constant 0 : i32
    %12 = arith.cmpi ne, %11, %c0_i32_4 : i32
    scf.if %12 {
      %c16_i32 = arith.constant 16 : i32
      %99 = arith.muli %arg1, %c16_i32 : i32
      %100 = tpu.assume_multiple %99, 16 : i32
      %c0_i32_63 = arith.constant 0 : i32
      %c0_i32_64 = arith.constant 0 : i32
      %101 = tpu.memref_slice %arg2[%arg0, %100, %c0_i32_63, %c0_i32_64] : memref<2x20x32x128xbf16, #tpu.memory_space<any>> -> memref<1x20x32x128xbf16, #tpu.memory_space<any>>
      %102 = tpu.memref_squeeze %101 : memref<1x20x32x128xbf16, #tpu.memory_space<any>> -> memref<20x32x128xbf16, #tpu.memory_space<any>>
      %c0_i32_65 = arith.constant 0 : i32
      %c0_i32_66 = arith.constant 0 : i32
      %c0_i32_67 = arith.constant 0 : i32
      %103 = tpu.memref_slice %arg8[%9, %c0_i32_65, %c0_i32_66, %c0_i32_67] : memref<2x20x32x128xbf16, #tpu.memory_space<vmem>> -> memref<1x20x32x128xbf16, #tpu.memory_space<vmem>>
      %104 = tpu.memref_squeeze %103 : memref<1x20x32x128xbf16, #tpu.memory_space<vmem>> -> memref<20x32x128xbf16, #tpu.memory_space<vmem>>
      %105 = tpu.memref_slice %arg10[%9] : memref<2x!tpu.dma_semaphore, #tpu.memory_space<semaphore_mem>> -> memref<1x!tpu.dma_semaphore, #tpu.memory_space<semaphore_mem>>
      %106 = tpu.memref_squeeze %105 : memref<1x!tpu.dma_semaphore, #tpu.memory_space<semaphore_mem>> -> memref<!tpu.dma_semaphore, #tpu.memory_space<semaphore_mem>>
      tpu.enqueue_dma source(%102 : memref<20x32x128xbf16, #tpu.memory_space<any>>) target(%104 : memref<20x32x128xbf16, #tpu.memory_space<vmem>>) target_semaphore(%106 : memref<!tpu.dma_semaphore, #tpu.memory_space<semaphore_mem>>)
    } else {
    }
    %c1_i32_5 = arith.constant 1 : i32
    %13 = arith.addi %arg1, %c1_i32_5 : i32
    %c1_i32_6 = arith.constant 1 : i32
    %14 = arith.cmpi slt, %13, %c1_i32_6 : i32
    %15 = arith.extui %14 : i1 to i32
    %c0_i32_7 = arith.constant 0 : i32
    %16 = arith.cmpi ne, %15, %c0_i32_7 : i32
    scf.if %16 {
      %c1_i32_63 = arith.constant 1 : i32
      %99 = arith.addi %arg1, %c1_i32_63 : i32
      %c1_i32_64 = arith.constant 1 : i32
      %100 = arith.subi %c1_i32_64, %9 : i32
      %c16_i32 = arith.constant 16 : i32
      %101 = arith.muli %99, %c16_i32 : i32
      %102 = tpu.assume_multiple %101, 16 : i32
      %c0_i32_65 = arith.constant 0 : i32
      %c0_i32_66 = arith.constant 0 : i32
      %103 = tpu.memref_slice %arg2[%arg0, %102, %c0_i32_65, %c0_i32_66] : memref<2x20x32x128xbf16, #tpu.memory_space<any>> -> memref<1x20x32x128xbf16, #tpu.memory_space<any>>
      %104 = tpu.memref_squeeze %103 : memref<1x20x32x128xbf16, #tpu.memory_space<any>> -> memref<20x32x128xbf16, #tpu.memory_space<any>>
      %c0_i32_67 = arith.constant 0 : i32
      %c0_i32_68 = arith.constant 0 : i32
      %c0_i32_69 = arith.constant 0 : i32
      %105 = tpu.memref_slice %arg8[%100, %c0_i32_67, %c0_i32_68, %c0_i32_69] : memref<2x20x32x128xbf16, #tpu.memory_space<vmem>> -> memref<1x20x32x128xbf16, #tpu.memory_space<vmem>>
      %106 = tpu.memref_squeeze %105 : memref<1x20x32x128xbf16, #tpu.memory_space<vmem>> -> memref<20x32x128xbf16, #tpu.memory_space<vmem>>
      %107 = tpu.memref_slice %arg10[%100] : memref<2x!tpu.dma_semaphore, #tpu.memory_space<semaphore_mem>> -> memref<1x!tpu.dma_semaphore, #tpu.memory_space<semaphore_mem>>
      %108 = tpu.memref_squeeze %107 : memref<1x!tpu.dma_semaphore, #tpu.memory_space<semaphore_mem>> -> memref<!tpu.dma_semaphore, #tpu.memory_space<semaphore_mem>>
      tpu.enqueue_dma source(%104 : memref<20x32x128xbf16, #tpu.memory_space<any>>) target(%106 : memref<20x32x128xbf16, #tpu.memory_space<vmem>>) target_semaphore(%108 : memref<!tpu.dma_semaphore, #tpu.memory_space<semaphore_mem>>)
    } else {
    }
    %c0_i32_8 = arith.constant 0 : i32
    %c0_i32_9 = arith.constant 0 : i32
    %c0_i32_10 = arith.constant 0 : i32
    %17 = tpu.memref_slice %arg2[%arg0, %c0_i32_8, %c0_i32_9, %c0_i32_10] : memref<2x20x32x128xbf16, #tpu.memory_space<any>> -> memref<1x20x32x128xbf16, #tpu.memory_space<any>>
    %18 = tpu.memref_squeeze %17 : memref<1x20x32x128xbf16, #tpu.memory_space<any>> -> memref<20x32x128xbf16, #tpu.memory_space<any>>
    %c0_i32_11 = arith.constant 0 : i32
    %c0_i32_12 = arith.constant 0 : i32
    %c0_i32_13 = arith.constant 0 : i32
    %19 = tpu.memref_slice %arg8[%9, %c0_i32_11, %c0_i32_12, %c0_i32_13] : memref<2x20x32x128xbf16, #tpu.memory_space<vmem>> -> memref<1x20x32x128xbf16, #tpu.memory_space<vmem>>
    %20 = tpu.memref_squeeze %19 : memref<1x20x32x128xbf16, #tpu.memory_space<vmem>> -> memref<20x32x128xbf16, #tpu.memory_space<vmem>>
    %21 = tpu.memref_slice %arg10[%9] : memref<2x!tpu.dma_semaphore, #tpu.memory_space<semaphore_mem>> -> memref<1x!tpu.dma_semaphore, #tpu.memory_space<semaphore_mem>>
    %22 = tpu.memref_squeeze %21 : memref<1x!tpu.dma_semaphore, #tpu.memory_space<semaphore_mem>> -> memref<!tpu.dma_semaphore, #tpu.memory_space<semaphore_mem>>
    tpu.wait_dma2 semaphore(%22 : memref<!tpu.dma_semaphore, #tpu.memory_space<semaphore_mem>>) src(%18 : memref<20x32x128xbf16, #tpu.memory_space<any>>) dst(%20 : memref<20x32x128xbf16, #tpu.memory_space<vmem>>)
    %23 = arith.index_cast %9 : i32 to index
    %c0 = arith.constant 0 : index
    %c0_14 = arith.constant 0 : index
    %c0_15 = arith.constant 0 : index
    %24 = vector.load %arg8[%23, %c0, %c0_14, %c0_15] : memref<2x20x32x128xbf16, #tpu.memory_space<vmem>>, vector<1x20x32x128xbf16>
    %25 = vector.shape_cast %24 : vector<1x20x32x128xbf16> to vector<20x32x128xbf16>
    %26 = vector.extract_strided_slice %25 {offsets = [0, 0, 0], sizes = [20, 16, 128], strides = [1, 1, 1]} : vector<20x32x128xbf16> to vector<20x16x128xbf16>
    %27 = vector.extract_strided_slice %25 {offsets = [0, 1, 0], sizes = [20, 16, 128], strides = [1, 1, 1]} : vector<20x32x128xbf16> to vector<20x16x128xbf16>
    %28 = vector.extract_strided_slice %25 {offsets = [0, 2, 0], sizes = [20, 16, 128], strides = [1, 1, 1]} : vector<20x32x128xbf16> to vector<20x16x128xbf16>
    %29 = tpu.concatenate %26, %27, %28 in 2 : vector<20x16x128xbf16>, vector<20x16x128xbf16>, vector<20x16x128xbf16> -> vector<20x16x384xbf16>
    %c0_16 = arith.constant 0 : index
    %c0_17 = arith.constant 0 : index
    %30 = vector.load %arg4[%c0_16, %c0_17] : memref<1x128xf32, #tpu.memory_space<vmem>>, vector<1x128xf32>
    %31 = vector.shape_cast %30 : vector<1x128xf32> to vector<1x128xf32>
    %32 = vector.broadcast %31 : vector<1x128xf32> to vector<288x128xf32>
    %33 = vector.extract_strided_slice %29 {offsets = [0, 0, 0], sizes = [18, 16, 384], strides = [1, 1, 1]} : vector<20x16x384xbf16> to vector<18x16x384xbf16>
    %34 = vector.shape_cast %33 : vector<18x16x384xbf16> to vector<288x384xbf16>
    %c0_18 = arith.constant 0 : index
    %c0_19 = arith.constant 0 : index
    %c0_20 = arith.constant 0 : index
    %35 = vector.load %arg3[%c0_18, %c0_19, %c0_20] : memref<3x384x128xbf16, #tpu.memory_space<vmem>>, vector<1x384x128xbf16>
    %36 = vector.shape_cast %35 : vector<1x384x128xbf16> to vector<384x128xbf16>
    %cst = arith.constant dense<0.000000e+00> : vector<288x128xf32>
    %37 = tpu.matmul %34, %36, %cst {dimension_numbers = #tpu.dot_dimension_numbers<[1], [0], [0], [1], [0, 0, 1, 1], [], []>} : vector<288x384xbf16>, vector<384x128xbf16>, vector<288x128xf32> -> vector<288x128xf32>
    %38 = arith.addf %32, %37 : vector<288x128xf32>
    %39 = vector.extract_strided_slice %29 {offsets = [1, 0, 0], sizes = [18, 16, 384], strides = [1, 1, 1]} : vector<20x16x384xbf16> to vector<18x16x384xbf16>
    %40 = vector.shape_cast %39 : vector<18x16x384xbf16> to vector<288x384xbf16>
    %c1 = arith.constant 1 : index
    %c0_21 = arith.constant 0 : index
    %c0_22 = arith.constant 0 : index
    %41 = vector.load %arg3[%c1, %c0_21, %c0_22] : memref<3x384x128xbf16, #tpu.memory_space<vmem>>, vector<1x384x128xbf16>
    %42 = vector.shape_cast %41 : vector<1x384x128xbf16> to vector<384x128xbf16>
    %cst_23 = arith.constant dense<0.000000e+00> : vector<288x128xf32>
    %43 = tpu.matmul %40, %42, %cst_23 {dimension_numbers = #tpu.dot_dimension_numbers<[1], [0], [0], [1], [0, 0, 1, 1], [], []>} : vector<288x384xbf16>, vector<384x128xbf16>, vector<288x128xf32> -> vector<288x128xf32>
    %44 = arith.addf %38, %43 : vector<288x128xf32>
    %45 = vector.extract_strided_slice %29 {offsets = [2, 0, 0], sizes = [18, 16, 384], strides = [1, 1, 1]} : vector<20x16x384xbf16> to vector<18x16x384xbf16>
    %46 = vector.shape_cast %45 : vector<18x16x384xbf16> to vector<288x384xbf16>
    %c2 = arith.constant 2 : index
    %c0_24 = arith.constant 0 : index
    %c0_25 = arith.constant 0 : index
    %47 = vector.load %arg3[%c2, %c0_24, %c0_25] : memref<3x384x128xbf16, #tpu.memory_space<vmem>>, vector<1x384x128xbf16>
    %48 = vector.shape_cast %47 : vector<1x384x128xbf16> to vector<384x128xbf16>
    %cst_26 = arith.constant dense<0.000000e+00> : vector<288x128xf32>
    %49 = tpu.matmul %46, %48, %cst_26 {dimension_numbers = #tpu.dot_dimension_numbers<[1], [0], [0], [1], [0, 0, 1, 1], [], []>} : vector<288x384xbf16>, vector<384x128xbf16>, vector<288x128xf32> -> vector<288x128xf32>
    %50 = arith.addf %44, %49 : vector<288x128xf32>
    %cst_27 = arith.constant 0.000000e+00 : f32
    %51 = vector.broadcast %cst_27 : f32 to vector<288x128xf32>
    %52 = arith.maximumf %50, %51 : vector<288x128xf32>
    %53 = vector.shape_cast %52 : vector<288x128xf32> to vector<18x16x128xf32>
    %54 = arith.truncf %53 : vector<18x16x128xf32> to vector<18x16x128xbf16>
    %c0_28 = arith.constant 0 : index
    %c16 = arith.constant 16 : index
    %c0_29 = arith.constant 0 : index
    %55 = vector.load %arg9[%c0_28, %c16, %c0_29] : memref<18x48x128xbf16, #tpu.memory_space<vmem>>, vector<18x16x128xbf16>
    tpu.vector_store %arg9[%c0_28, %c16, %c0_29], %54 {strides = array<i32>} : memref<18x48x128xbf16, #tpu.memory_space<vmem>>, vector<18x16x128xbf16>,
    %cst_30 = arith.constant 0.000000e+00 : bf16
    %56 = vector.broadcast %cst_30 : bf16 to vector<18x16x128xbf16>
    %c0_31 = arith.constant 0 : index
    %c0_32 = arith.constant 0 : index
    %c0_33 = arith.constant 0 : index
    %57 = vector.load %arg9[%c0_31, %c0_32, %c0_33] : memref<18x48x128xbf16, #tpu.memory_space<vmem>>, vector<18x16x128xbf16>
    tpu.vector_store %arg9[%c0_31, %c0_32, %c0_33], %56 {strides = array<i32>} : memref<18x48x128xbf16, #tpu.memory_space<vmem>>, vector<18x16x128xbf16>,
    %cst_34 = arith.constant 0.000000e+00 : bf16
    %58 = vector.broadcast %cst_34 : bf16 to vector<18x16x128xbf16>
    %c0_35 = arith.constant 0 : index
    %c32 = arith.constant 32 : index
    %c0_36 = arith.constant 0 : index
    %59 = vector.load %arg9[%c0_35, %c32, %c0_36] : memref<18x48x128xbf16, #tpu.memory_space<vmem>>, vector<18x16x128xbf16>
    tpu.vector_store %arg9[%c0_35, %c32, %c0_36], %58 {strides = array<i32>} : memref<18x48x128xbf16, #tpu.memory_space<vmem>>, vector<18x16x128xbf16>,
    %c0_i32_37 = arith.constant 0 : i32
    %60 = arith.cmpi eq, %arg1, %c0_i32_37 : i32
    %61 = arith.extui %60 : i1 to i32
    %c0_i32_38 = arith.constant 0 : i32
    %62 = arith.cmpi ne, %61, %c0_i32_38 : i32
    scf.if %62 {
      %cst_63 = arith.constant 0.000000e+00 : bf16
      %99 = vector.broadcast %cst_63 : bf16 to vector<1x48x128xbf16>
      %c0_64 = arith.constant 0 : index
      %c0_65 = arith.constant 0 : index
      %c0_66 = arith.constant 0 : index
      %100 = vector.load %arg9[%c0_64, %c0_65, %c0_66] : memref<18x48x128xbf16, #tpu.memory_space<vmem>>, vector<1x48x128xbf16>
      tpu.vector_store %arg9[%c0_64, %c0_65, %c0_66], %99 {strides = array<i32>} : memref<18x48x128xbf16, #tpu.memory_space<vmem>>, vector<1x48x128xbf16>,
    } else {
    }
    %c0_i32_39 = arith.constant 0 : i32
    %63 = arith.cmpi eq, %arg1, %c0_i32_39 : i32
    %64 = arith.extui %63 : i1 to i32
    %c0_i32_40 = arith.constant 0 : i32
    %65 = arith.cmpi ne, %64, %c0_i32_40 : i32
    scf.if %65 {
      %cst_63 = arith.constant 0.000000e+00 : bf16
      %99 = vector.broadcast %cst_63 : bf16 to vector<1x48x128xbf16>
      %c17 = arith.constant 17 : index
      %c0_64 = arith.constant 0 : index
      %c0_65 = arith.constant 0 : index
      %100 = vector.load %arg9[%c17, %c0_64, %c0_65] : memref<18x48x128xbf16, #tpu.memory_space<vmem>>, vector<1x48x128xbf16>
      tpu.vector_store %arg9[%c17, %c0_64, %c0_65], %99 {strides = array<i32>} : memref<18x48x128xbf16, #tpu.memory_space<vmem>>, vector<1x48x128xbf16>,
    } else {
    }
    %c0_41 = arith.constant 0 : index
    %c0_42 = arith.constant 0 : index
    %c0_43 = arith.constant 0 : index
    %66 = vector.load %arg9[%c0_41, %c0_42, %c0_43] : memref<18x48x128xbf16, #tpu.memory_space<vmem>>, vector<18x48x128xbf16>
    %67 = vector.extract_strided_slice %66 {offsets = [0, 15, 0], sizes = [18, 16, 128], strides = [1, 1, 1]} : vector<18x48x128xbf16> to vector<18x16x128xbf16>
    %68 = vector.extract_strided_slice %66 {offsets = [0, 16, 0], sizes = [18, 16, 128], strides = [1, 1, 1]} : vector<18x48x128xbf16> to vector<18x16x128xbf16>
    %69 = vector.extract_strided_slice %66 {offsets = [0, 17, 0], sizes = [18, 16, 128], strides = [1, 1, 1]} : vector<18x48x128xbf16> to vector<18x16x128xbf16>
    %70 = tpu.concatenate %67, %68, %69 in 2 : vector<18x16x128xbf16>, vector<18x16x128xbf16>, vector<18x16x128xbf16> -> vector<18x16x384xbf16>
    %c0_44 = arith.constant 0 : index
    %c0_45 = arith.constant 0 : index
    %71 = vector.load %arg6[%c0_44, %c0_45] : memref<1x128xf32, #tpu.memory_space<vmem>>, vector<1x128xf32>
    %72 = vector.shape_cast %71 : vector<1x128xf32> to vector<1x128xf32>
    %73 = vector.broadcast %72 : vector<1x128xf32> to vector<256x128xf32>
    %74 = vector.extract_strided_slice %70 {offsets = [0, 0, 0], sizes = [16, 16, 384], strides = [1, 1, 1]} : vector<18x16x384xbf16> to vector<16x16x384xbf16>
    %75 = vector.shape_cast %74 : vector<16x16x384xbf16> to vector<256x384xbf16>
    %c0_46 = arith.constant 0 : index
    %c0_47 = arith.constant 0 : index
    %c0_48 = arith.constant 0 : index
    %76 = vector.load %arg5[%c0_46, %c0_47, %c0_48] : memref<3x384x128xbf16, #tpu.memory_space<vmem>>, vector<1x384x128xbf16>
    %77 = vector.shape_cast %76 : vector<1x384x128xbf16> to vector<384x128xbf16>
    %cst_49 = arith.constant dense<0.000000e+00> : vector<256x128xf32>
    %78 = tpu.matmul %75, %77, %cst_49 {dimension_numbers = #tpu.dot_dimension_numbers<[1], [0], [0], [1], [0, 0, 1, 1], [], []>} : vector<256x384xbf16>, vector<384x128xbf16>, vector<256x128xf32> -> vector<256x128xf32>
    %79 = arith.addf %73, %78 : vector<256x128xf32>
    %80 = vector.extract_strided_slice %70 {offsets = [1, 0, 0], sizes = [16, 16, 384], strides = [1, 1, 1]} : vector<18x16x384xbf16> to vector<16x16x384xbf16>
    %81 = vector.shape_cast %80 : vector<16x16x384xbf16> to vector<256x384xbf16>
    %c1_50 = arith.constant 1 : index
    %c0_51 = arith.constant 0 : index
    %c0_52 = arith.constant 0 : index
    %82 = vector.load %arg5[%c1_50, %c0_51, %c0_52] : memref<3x384x128xbf16, #tpu.memory_space<vmem>>, vector<1x384x128xbf16>
    %83 = vector.shape_cast %82 : vector<1x384x128xbf16> to vector<384x128xbf16>
    %cst_53 = arith.constant dense<0.000000e+00> : vector<256x128xf32>
    %84 = tpu.matmul %81, %83, %cst_53 {dimension_numbers = #tpu.dot_dimension_numbers<[1], [0], [0], [1], [0, 0, 1, 1], [], []>} : vector<256x384xbf16>, vector<384x128xbf16>, vector<256x128xf32> -> vector<256x128xf32>
    %85 = arith.addf %79, %84 : vector<256x128xf32>
    %86 = vector.extract_strided_slice %70 {offsets = [2, 0, 0], sizes = [16, 16, 384], strides = [1, 1, 1]} : vector<18x16x384xbf16> to vector<16x16x384xbf16>
    %87 = vector.shape_cast %86 : vector<16x16x384xbf16> to vector<256x384xbf16>
    %c2_54 = arith.constant 2 : index
    %c0_55 = arith.constant 0 : index
    %c0_56 = arith.constant 0 : index
    %88 = vector.load %arg5[%c2_54, %c0_55, %c0_56] : memref<3x384x128xbf16, #tpu.memory_space<vmem>>, vector<1x384x128xbf16>
    %89 = vector.shape_cast %88 : vector<1x384x128xbf16> to vector<384x128xbf16>
    %cst_57 = arith.constant dense<0.000000e+00> : vector<256x128xf32>
    %90 = tpu.matmul %87, %89, %cst_57 {dimension_numbers = #tpu.dot_dimension_numbers<[1], [0], [0], [1], [0, 0, 1, 1], [], []>} : vector<256x384xbf16>, vector<384x128xbf16>, vector<256x128xf32> -> vector<256x128xf32>
    %91 = arith.addf %85, %90 : vector<256x128xf32>
    %cst_58 = arith.constant 0.000000e+00 : f32
    %92 = vector.broadcast %cst_58 : f32 to vector<256x128xf32>
    %93 = arith.maximumf %91, %92 : vector<256x128xf32>
    %94 = vector.shape_cast %93 : vector<256x128xf32> to vector<16x16x128xf32>
    %95 = arith.truncf %94 : vector<16x16x128xf32> to vector<16x16x128xbf16>
    %c0_59 = arith.constant 0 : index
    %c0_60 = arith.constant 0 : index
    %c0_61 = arith.constant 0 : index
    %c0_62 = arith.constant 0 : index
    %96 = vector.load %arg7[%c0_59, %c0_60, %c0_61, %c0_62] : memref<1x16x16x128xbf16, #tpu.memory_space<vmem>>, vector<1x16x16x128xbf16>
    %97 = vector.shape_cast %96 : vector<1x16x16x128xbf16> to vector<16x16x128xbf16>
    %98 = vector.shape_cast %95 : vector<16x16x128xbf16> to vector<1x16x16x128xbf16>
    tpu.vector_store %arg7[%c0_59, %c0_60, %c0_61, %c0_62], %98 {strides = array<i32>} : memref<1x16x16x128xbf16, #tpu.memory_space<vmem>>, vector<1x16x16x128xbf16>,
    return
  }
  func.func @transform_1(%arg0: i32, %arg1: i32) -> (i32, i32, i32) {
    %c0_i32 = arith.constant 0 : i32
    %c0_i32_0 = arith.constant 0 : i32
    %c0_i32_1 = arith.constant 0 : i32
    %c0_i32_2 = arith.constant 0 : i32
    return %c0_i32, %c0_i32_0, %c0_i32_1 : i32, i32, i32
  }
  func.func @transform_2(%arg0: i32, %arg1: i32) -> (i32, i32) {
    %c0_i32 = arith.constant 0 : i32
    %c0_i32_0 = arith.constant 0 : i32
    %c0_i32_1 = arith.constant 0 : i32
    return %c0_i32, %c0_i32_0 : i32, i32
  }
  func.func @transform_3(%arg0: i32, %arg1: i32) -> (i32, i32, i32) {
    %c0_i32 = arith.constant 0 : i32
    %c0_i32_0 = arith.constant 0 : i32
    %c0_i32_1 = arith.constant 0 : i32
    %c0_i32_2 = arith.constant 0 : i32
    return %c0_i32, %c0_i32_0, %c0_i32_1 : i32, i32, i32
  }
  func.func @transform_4(%arg0: i32, %arg1: i32) -> (i32, i32) {
    %c0_i32 = arith.constant 0 : i32
    %c0_i32_0 = arith.constant 0 : i32
    %c0_i32_1 = arith.constant 0 : i32
    return %c0_i32, %c0_i32_0 : i32, i32
  }
  func.func @transform_5(%arg0: i32, %arg1: i32) -> (i32, i32, i32, i32) {
    %c0_i32 = arith.constant 0 : i32
    %c0_i32_0 = arith.constant 0 : i32
    %c0_i32_1 = arith.constant 0 : i32
    return %arg0, %arg1, %c0_i32, %c0_i32_0 : i32, i32, i32, i32
  }
}

</mosaic_0001>

<llo_original>
// kernel: double_conv.1
$region0: #{double_conv.1}
  #allocation0 [shape = 'u32[]', space=smem, size = 0x4, offset = 0x4, fixed_abs, tag = 'smem constant byte address 0x4 - core index']
  #allocation1 [shape = 'u32[144,128]{1,0:T(1,128)}', space=vmem, size = 0x12000, scoped, tag = 'internal scratch']
  #allocation2 [shape = 'bf16[2,20,32,128]{3,2,1,0:T(16,128)(2,1)}', space=vmem, size = 0x50000, scoped, tag = 'scratch operand']
  #allocation3 [shape = 'bf16[18,48,128]{2,1,0:T(16,128)(2,1)}', space=vmem, size = 0x36000, scoped, tag = 'scratch operand']
  #allocation4 [shape = 's32[2]{0}', space=sflag, size = 0x8, scoped, tag = 'scratch operand']
  #allocation5 [shape = 's32[]', space=sflag, size = 0x4, offset = 0, fixed_abs, tag = 'sflag constant byte address 0x0 - dummy sync flag']
  #allocation6 [shape = 's32[]', space=sflag, size = 0x4, offset = 0, fixed_abs, tag = 'sflag constant byte address 0x0 - dummy sync flag']
  %s0 = inlined_call_operand.vmem [shape: bf16[2,20,32,128], index: 0, kind: input, shape index: {}]
  %s1 = inlined_call_operand.vmem [shape: bf16[3,384,128], index: 1, kind: input, shape index: {}]
  %s2 = inlined_call_operand.vmem [shape: f32[1,128], index: 2, kind: input, shape index: {}]
  %s3 = inlined_call_operand.vmem [shape: bf16[3,384,128], index: 3, kind: input, shape index: {}]
  %s4 = inlined_call_operand.vmem [shape: f32[1,128], index: 4, kind: input, shape index: {}]
  %s5 = inlined_call_operand.vmem [shape: bf16[2,16,16,128], index: 5, kind: output, shape index: {}]
  %s6 = sld [smem:[#allocation0]]
  $region129: #{double_conv.1} parent=0
    _
  %s8 = ssub.s32 1, %s6
  %s9 = scalar_select 0, %s8, %s6
  loop: start=0, step=1, limit=4
  $region2: #{double_conv.1} parent=0 // loop_pre_header
    _
  $region3: #{double_conv.1} parent=0 // loop_header
    %s11 = sphi 0, %s15
    %p12 = scmp.ge.s32.totalorder %s11, 4
    %s18 = sphi 0, %s30
    %s19 = sphi 0, %s26
    %s20 = sphi 0, %s18
    %s21 = sphi 0, %s19
    %s22 = sphi 0, %s20
    %s23 = sphi 0, %s21
    %s31 = sphi 0, %s31
    %s33 = sphi 0, %s31
    %s34 = sphi 0, %s33
    %s48 = sphi 0, %s34
    %s52 = sphi 0, %s52
    %s54 = sphi 0, %s52
    %s55 = sphi 0, %s54
    %s69 = sphi 0, %s55
    %s73 = sphi 0, %s73
    %s75 = sphi 0, %s73
    %s76 = sphi 0, %s75
    %s90 = sphi 0, %s76
    %s94 = sphi 0, %s94
    %s96 = sphi 0, %s94
    %s97 = sphi 0, %s96
    %s111 = sphi 0, %s97
    %s119 = sphi 0, %s121
    %s122 = sphi 0, %s119
    %s123 = sphi 0, %s122
    %s139 = sphi 0, %s123
  $region4: #{double_conv.1} parent=0 // loop_header_branch
    %14 = sbr.rel (%p12) target = $region8
  $region5: #{double_conv.1} parent=0 // loop_body
    %s16 = ssub.s32 %s11, 1
    %s17 = ssub.s32 %s11, 2
    %s24 = sadd.s32 1, %s19
    %p25 = scmp.ge.s32.totalorder %s24, 1
    %s26 = scalar_select %p25, 0, %s24
    %s27 = sadd.s32 1, %s18
    %s28 = scalar_select %p25, %s27, %s18
    %p29 = scmp.ge.s32.totalorder %s28, 2
    %s30 = scalar_select %p29, 0, %s28
    %s32 = sadd.s32 %s31, 1
    %p35 = scmp.eq.s32.totalorder %s11, 1
    %p36 = scmp.ne.s32.totalorder %s31, %s33
    %p37 = scmp.eq.s32.totalorder %s11, 0
    %p38 = por %p36, %p37
    %p39 = scmp.ne.s32.totalorder %s31, %s33
    %p40 = scmp.eq.s32.totalorder %s16, 1
    %p41 = por %p39, %p40
    %p42 = scmp.ne.s32.totalorder %s33, %s34
    %p43 = scmp.eq.s32.totalorder %s16, 0
    %p44 = por %p42, %p43
    %p45 = scmp.ne.s32.totalorder %s33, %s34
    %p46 = scmp.eq.s32.totalorder %s17, 1
    %p47 = por %p45, %p46
    %p49 = scmp.ne.s32.totalorder %s34, %s48
    %p50 = scmp.eq.s32.totalorder %s17, 0
    %p51 = por %p49, %p50
    %s53 = sadd.s32 %s52, 1
    %p56 = scmp.eq.s32.totalorder %s11, 1
    %p57 = scmp.ne.s32.totalorder %s52, %s54
    %p58 = scmp.eq.s32.totalorder %s11, 0
    %p59 = por %p57, %p58
    %p60 = scmp.ne.s32.totalorder %s52, %s54
    %p61 = scmp.eq.s32.totalorder %s16, 1
    %p62 = por %p60, %p61
    %p63 = scmp.ne.s32.totalorder %s54, %s55
    %p64 = scmp.eq.s32.totalorder %s16, 0
    %p65 = por %p63, %p64
    %p66 = scmp.ne.s32.totalorder %s54, %s55
    %p67 = scmp.eq.s32.totalorder %s17, 1
    %p68 = por %p66, %p67
    %p70 = scmp.ne.s32.totalorder %s55, %s69
    %p71 = scmp.eq.s32.totalorder %s17, 0
    %p72 = por %p70, %p71
    %s74 = sadd.s32 %s73, 1
    %p77 = scmp.eq.s32.totalorder %s11, 1
    %p78 = scmp.ne.s32.totalorder %s73, %s75
    %p79 = scmp.eq.s32.totalorder %s11, 0
    %p80 = por %p78, %p79
    %p81 = scmp.ne.s32.totalorder %s73, %s75
    %p82 = scmp.eq.s32.totalorder %s16, 1
    %p83 = por %p81, %p82
    %p84 = scmp.ne.s32.totalorder %s75, %s76
    %p85 = scmp.eq.s32.totalorder %s16, 0
    %p86 = por %p84, %p85
    %p87 = scmp.ne.s32.totalorder %s75, %s76
    %p88 = scmp.eq.s32.totalorder %s17, 1
    %p89 = por %p87, %p88
    %p91 = scmp.ne.s32.totalorder %s76, %s90
    %p92 = scmp.eq.s32.totalorder %s17, 0
    %p93 = por %p91, %p92
    %s95 = sadd.s32 %s94, 1
    %p98 = scmp.eq.s32.totalorder %s11, 1
    %p99 = scmp.ne.s32.totalorder %s94, %s96
    %p100 = scmp.eq.s32.totalorder %s11, 0
    %p101 = por %p99, %p100
    %p102 = scmp.ne.s32.totalorder %s94, %s96
    %p103 = scmp.eq.s32.totalorder %s16, 1
    %p104 = por %p102, %p103
    %p105 = scmp.ne.s32.totalorder %s96, %s97
    %p106 = scmp.eq.s32.totalorder %s16, 0
    %p107 = por %p105, %p106
    %p108 = scmp.ne.s32.totalorder %s96, %s97
    %p109 = scmp.eq.s32.totalorder %s17, 1
    %p110 = por %p108, %p109
    %p112 = scmp.ne.s32.totalorder %s97, %s111
    %p113 = scmp.eq.s32.totalorder %s17, 0
    %p114 = por %p112, %p113
    %s115 = ssub.s32 %s18, %s30
    %s116 = ssub.s32 %s19, %s26
    %s117 = sor.u32 %s115, %s116
    %p118 = scmp.eq.s32.totalorder %s117, 0
    %s120 = sadd.s32 %s119, 1
    %s121 = scalar_select %p118, %s119, %s120
    %p124 = pneg %p118
    %p125 = scmp.eq.s32.totalorder %s11, 1
    %p126 = por %p124, %p125
    %p127 = scmp.ne.s32.totalorder %s119, %s122
    %p128 = scmp.eq.s32.totalorder %s11, 0
    %p129 = por %p127, %p128
    %p130 = scmp.ne.s32.totalorder %s119, %s122
    %p131 = scmp.eq.s32.totalorder %s16, 1
    %p132 = por %p130, %p131
    %p133 = scmp.ne.s32.totalorder %s122, %s123
    %p134 = scmp.eq.s32.totalorder %s16, 0
    %p135 = por %p133, %p134
    %p136 = scmp.ne.s32.totalorder %s122, %s123
    %p137 = scmp.eq.s32.totalorder %s17, 1
    %p138 = por %p136, %p137
    %p140 = scmp.ne.s32.totalorder %s123, %s139
    %p141 = scmp.eq.s32.totalorder %s17, 0
    %p142 = por %p140, %p141
    %p143 = scmp.le.s32.totalorder 1, %s11
    %p144 = scmp.lt.s32.totalorder %s11, 3
    %p145 = pnand %p143, %p144
    %p146 = pneg %p145
    // Predicated region
    $region9: #{double_conv.1} parent=5 // pred_check
      _
    $region10: #{double_conv.1} parent=5 // pred_check_branch
      %148 = sbr.rel (%p145) target = $region12
    $region11: #{double_conv.1} parent=5 // pred_region
      %s149 = ssub.s32 %s11, 1
      // Predicated region
      $region13: #{double_conv.1} parent=11 // pred_check
        %p150 = pneg %p44
      $region14: #{double_conv.1} parent=11 // pred_check_branch
        %152 = sbr.rel (%p150) target = $region16
      $region15: #{double_conv.1} parent=11 // pred_region
        _
      $region16: #{double_conv.1} parent=11 // pred_fallthru
        _
      // Predicated region
      $region17: #{double_conv.1} parent=11 // pred_check
        %p153 = pneg %p65
      $region18: #{double_conv.1} parent=11 // pred_check_branch
        %155 = sbr.rel (%p153) target = $region20
      $region19: #{double_conv.1} parent=11 // pred_region
        _
      $region20: #{double_conv.1} parent=11 // pred_fallthru
        _
      // Predicated region
      $region21: #{double_conv.1} parent=11 // pred_check
        %p156 = pneg %p86
      $region22: #{double_conv.1} parent=11 // pred_check_branch
        %158 = sbr.rel (%p156) target = $region24
      $region23: #{double_conv.1} parent=11 // pred_region
        _
      $region24: #{double_conv.1} parent=11 // pred_fallthru
        _
      // Predicated region
      $region25: #{double_conv.1} parent=11 // pred_check
        %p159 = pneg %p107
      $region26: #{double_conv.1} parent=11 // pred_check_branch
        %161 = sbr.rel (%p159) target = $region28
      $region27: #{double_conv.1} parent=11 // pred_region
        _
      $region28: #{double_conv.1} parent=11 // pred_fallthru
        _
    $region12: #{double_conv.1} parent=5 // pred_fallthru
      _
    %p162 = scmp.lt.s32.totalorder %s11, 2
    // Predicated region
    $region29: #{double_conv.1} parent=5 // pred_check
      %p163 = pneg %p162
    $region30: #{double_conv.1} parent=5 // pred_check_branch
      %165 = sbr.rel (%p163) target = $region32
    $region31: #{double_conv.1} parent=5 // pred_region
      _
    $region32: #{double_conv.1} parent=5 // pred_fallthru
      _
    %p166 = scmp.le.s32.totalorder 1, %s11
    %p167 = scmp.lt.s32.totalorder %s11, 3
    %p168 = pnand %p166, %p167
    %p169 = pneg %p168
    // Predicated region
    $region33: #{double_conv.1} parent=5 // pred_check
      _
    $region34: #{double_conv.1} parent=5 // pred_check_branch
      %171 = sbr.rel (%p168) target = $region36
    $region35: #{double_conv.1} parent=5 // pred_region
      %s172 = ssub.s32 %s11, 1
      %p173 = pneg %p44
      %p174 = pneg %p41
      %p175 = pneg %p65
      %p176 = pneg %p62
      %p177 = pneg %p86
      %p178 = pneg %p83
      %p179 = pneg %p107
      %p180 = pneg %p104
      %p181 = pneg %p135
      %p182 = pneg %p132
      %s183 = smul.u32 16, %s21
      %p184 = scmp.lt.s32.totalorder %s20, 1
      %s185 = scalar_select %p184, %s20, 1
      %p186 = scmp.lt.s32.totalorder %s183, 15
      %s187 = scalar_select %p186, %s183, 15
      %s188 = smul.addr %s187, 2
      %s189 = smul.addr %s185, 32
      %s190 = sadd.s32 %s188, %s189
      %s191 = smul.addr %s190, 4
      %s192 = scalar_lea.vmem %s5, %s191
      %s193 = smul.u32 16, %s21
      %p194 = scmp.lt.s32.totalorder %s20, 1
      %s195 = scalar_select %p194, %s20, 1
      %p196 = scmp.lt.s32.totalorder %s193, 15
      %s197 = scalar_select %p196, %s193, 15
      %s198 = smul.addr %s197, 2
      %s199 = smul.addr %s195, 32
      %s200 = sadd.s32 %s198, %s199
      %s201 = smul.addr %s200, 4
      %s202 = scalar_lea.vmem %s5, %s201
      %s203 = smul.u32 16, %s21
      %p205 = scmp.lt.s32.totalorder %s21, 0
      %s206 = ssub.s32 0, %s21
      %s207 = scalar_select %p205, %s206, %s21
      %s208 = sand.u32 %s207, 1
      %s209 = ssub.s32 0, %s208
      %s210 = scalar_select %p205, %s209, %s208
      %p211 = scmp.ne.s32.totalorder %s210, 0
      %p212 = scmp.lt.s32.totalorder %s210, 0
      %p213 = pnand %p212, %p211
      %p214 = pneg %p213
      %s215 = sadd.s32 %s210, 2
      %s216 = scalar_select %p214, %s215, %s210
      %p217 = scmp.eq.s32.totalorder %s21, 0
      // Predicated region
      $region37: #{double_conv.1} parent=35 // pred_check
        %p218 = pneg %p217
      $region38: #{double_conv.1} parent=35 // pred_check_branch
        %220 = sbr.rel (%p218) target = $region40
      $region39: #{double_conv.1} parent=35 // pred_region
        %s221 = smul.u32 %s21, 16
        %s222 = smul.u32 %s221, 4
        %s223 = smul.u32 %s20, 80
        %s224 = sadd.s32 %s222, %s223
        %s225 = smul.addr %s224, 4
        %s226 = scalar_lea.vmem %s0, %s225
        %s227 = smul.u32 %s216, 40
        %s228 = smul.addr %s227, 8
        %s229 = scalar_lea.vmem [#allocation2], %s228
        %s230 = scalar_lea.sflag [#allocation4], %s216
        %p232 = scmp.lt.u32.totalorder 320, 8
        %p233 = pneg %p232
        // Predicated region
        $region41: #{double_conv.1} parent=39 // pred_check
          _
        $region42: #{double_conv.1} parent=39 // pred_check_branch
          %235 = sbr.rel (%p232) target = $region44
        $region43: #{double_conv.1} parent=39 // pred_region
          %s250 = sand.u32 320, 7
          %p251 = scmp.eq.s32.totalorder %s250, 0
          // Predicated region
          $region56: #{double_conv.1} parent=43 // pred_check
            %p252 = pneg %p251
          $region57: #{double_conv.1} parent=43 // pred_check_branch
            %254 = sbr.rel (%p252) target = $region59
          $region58: #{double_conv.1} parent=43 // pred_region
            loop: start=0, step=1, limit=1
            $region60: #{double_conv.1} parent=58 // loop_pre_header
              _
            $region61: #{double_conv.1} parent=58 // loop_header
              %s256 = sphi 0, %s260
              %p257 = scmp.ge.s32.totalorder %s256, 1
              %s261 = sphi %s226, %s226
              %s262 = sphi %s229, %s229
            $region62: #{double_conv.1} parent=58 // loop_header_branch
              %259 = sbr.rel (%p257) target = $region66
            $region63: #{double_conv.1} parent=58 // loop_body
              %v263 = vld [vmem:[%s261] sm:$0xff]
              %264 = vst [vmem:[%s262] sm:$0xff] %v263
              %v265 = vld [vmem:[%s261 + $0x8] sm:$0xff]
              %266 = vst [vmem:[%s262 + $0x8] sm:$0xff] %v265
              %v267 = vld [vmem:[%s261 + $0x10] sm:$0xff]
              %268 = vst [vmem:[%s262 + $0x10] sm:$0xff] %v267
              %v269 = vld [vmem:[%s261 + $0x18] sm:$0xff]
              %270 = vst [vmem:[%s262 + $0x18] sm:$0xff] %v269
              %v271 = vld [vmem:[%s261 + $0x20] sm:$0xff]
              %272 = vst [vmem:[%s262 + $0x20] sm:$0xff] %v271
              %v273 = vld [vmem:[%s261 + $0x28] sm:$0xff]
              %274 = vst [vmem:[%s262 + $0x28] sm:$0xff] %v273
              %v275 = vld [vmem:[%s261 + $0x30] sm:$0xff]
              %276 = vst [vmem:[%s262 + $0x30] sm:$0xff] %v275
              %v277 = vld [vmem:[%s261 + $0x38] sm:$0xff]
              %278 = vst [vmem:[%s262 + $0x38] sm:$0xff] %v277
              %v279 = vld [vmem:[%s261 + $0x40] sm:$0xff]
              %280 = vst [vmem:[%s262 + $0x40] sm:$0xff] %v279
              %v281 = vld [vmem:[%s261 + $0x48] sm:$0xff]
              %282 = vst [vmem:[%s262 + $0x48] sm:$0xff] %v281
              %v283 = vld [vmem:[%s261 + $0x50] sm:$0xff]
              %284 = vst [vmem:[%s262 + $0x50] sm:$0xff] %v283
              %v285 = vld [vmem:[%s261 + $0x58] sm:$0xff]
              %286 = vst [vmem:[%s262 + $0x58] sm:$0xff] %v285
              %v287 = vld [vmem:[%s261 + $0x60] sm:$0xff]
              %288 = vst [vmem:[%s262 + $0x60] sm:$0xff] %v287
              %v289 = vld [vmem:[%s261 + $0x68] sm:$0xff]
              %290 = vst [vmem:[%s262 + $0x68] sm:$0xff] %v289
              %v291 = vld [vmem:[%s261 + $0x70] sm:$0xff]
              %292 = vst [vmem:[%s262 + $0x70] sm:$0xff] %v291
              %v293 = vld [vmem:[%s261 + $0x78] sm:$0xff]
              %294 = vst [vmem:[%s262 + $0x78] sm:$0xff] %v293
              %v295 = vld [vmem:[%s261 + $0x80] sm:$0xff]
              %296 = vst [vmem:[%s262 + $0x80] sm:$0xff] %v295
              %v297 = vld [vmem:[%s261 + $0x88] sm:$0xff]
              %298 = vst [vmem:[%s262 + $0x88] sm:$0xff] %v297
              %v299 = vld [vmem:[%s261 + $0x90] sm:$0xff]
              %300 = vst [vmem:[%s262 + $0x90] sm:$0xff] %v299
              %v301 = vld [vmem:[%s261 + $0x98] sm:$0xff]
              %302 = vst [vmem:[%s262 + $0x98] sm:$0xff] %v301
              %v303 = vld [vmem:[%s261 + $0xa0] sm:$0xff]
              %304 = vst [vmem:[%s262 + $0xa0] sm:$0xff] %v303
              %v305 = vld [vmem:[%s261 + $0xa8] sm:$0xff]
              %306 = vst [vmem:[%s262 + $0xa8] sm:$0xff] %v305
              %v307 = vld [vmem:[%s261 + $0xb0] sm:$0xff]
              %308 = vst [vmem:[%s262 + $0xb0] sm:$0xff] %v307
              %v309 = vld [vmem:[%s261 + $0xb8] sm:$0xff]
              %310 = vst [vmem:[%s262 + $0xb8] sm:$0xff] %v309
              %v311 = vld [vmem:[%s261 + $0xc0] sm:$0xff]
              %312 = vst [vmem:[%s262 + $0xc0] sm:$0xff] %v311
              %v313 = vld [vmem:[%s261 + $0xc8] sm:$0xff]
              %314 = vst [vmem:[%s262 + $0xc8] sm:$0xff] %v313
              %v315 = vld [vmem:[%s261 + $0xd0] sm:$0xff]
              %316 = vst [vmem:[%s262 + $0xd0] sm:$0xff] %v315
              %v317 = vld [vmem:[%s261 + $0xd8] sm:$0xff]
              %318 = vst [vmem:[%s262 + $0xd8] sm:$0xff] %v317
              %v319 = vld [vmem:[%s261 + $0xe0] sm:$0xff]
              %320 = vst [vmem:[%s262 + $0xe0] sm:$0xff] %v319
              %v321 = vld [vmem:[%s261 + $0xe8] sm:$0xff]
              %322 = vst [vmem:[%s262 + $0xe8] sm:$0xff] %v321
              %v323 = vld [vmem:[%s261 + $0xf0] sm:$0xff]
              %324 = vst [vmem:[%s262 + $0xf0] sm:$0xff] %v323
              %v325 = vld [vmem:[%s261 + $0xf8] sm:$0xff]
              %326 = vst [vmem:[%s262 + $0xf8] sm:$0xff] %v325
              %v327 = vld [vmem:[%s261 + $0x100] sm:$0xff]
              %328 = vst [vmem:[%s262 + $0x100] sm:$0xff] %v327
              %v329 = vld [vmem:[%s261 + $0x108] sm:$0xff]
              %330 = vst [vmem:[%s262 + $0x108] sm:$0xff] %v329
              %v331 = vld [vmem:[%s261 + $0x110] sm:$0xff]
              %332 = vst [vmem:[%s262 + $0x110] sm:$0xff] %v331
              %v333 = vld [vmem:[%s261 + $0x118] sm:$0xff]
              %334 = vst [vmem:[%s262 + $0x118] sm:$0xff] %v333
              %v335 = vld [vmem:[%s261 + $0x120] sm:$0xff]
              %336 = vst [vmem:[%s262 + $0x120] sm:$0xff] %v335
              %v337 = vld [vmem:[%s261 + $0x128] sm:$0xff]
              %338 = vst [vmem:[%s262 + $0x128] sm:$0xff] %v337
              %v339 = vld [vmem:[%s261 + $0x130] sm:$0xff]
              %340 = vst [vmem:[%s262 + $0x130] sm:$0xff] %v339
              %v341 = vld [vmem:[%s261 + $0x138] sm:$0xff]
              %342 = vst [vmem:[%s262 + $0x138] sm:$0xff] %v341
            $region64: #{double_conv.1} parent=58 // loop_footer
              %s260 = sadd.s32 1, %s256
            $region65: #{double_conv.1} parent=58 // loop_footer_branch
              %255 = sbr.rel target = $region61
            $region66: #{double_conv.1} parent=58 // loop_exit
              _
          $region59: #{double_conv.1} parent=43 // pred_fallthru
            _
          %p343 = pneg %p251
          // Predicated region
          $region67: #{double_conv.1} parent=43 // pred_check
            _
          $region68: #{double_conv.1} parent=43 // pred_check_branch
            %345 = sbr.rel (%p251) target = $region70
          $region69: #{double_conv.1} parent=43 // pred_region
            %s346 = sand.u32 320, 7
          $region70: #{double_conv.1} parent=43 // pred_fallthru
            _
        $region44: #{double_conv.1} parent=39 // pred_fallthru
          _
        // Predicated region
        $region45: #{double_conv.1} parent=39 // pred_check
          %p236 = pneg %p232
        $region46: #{double_conv.1} parent=39 // pred_check_branch
          %238 = sbr.rel (%p236) target = $region48
        $region47: #{double_conv.1} parent=39 // pred_region
          %s239 = sshllo.u32 0, 320
          loop: start=0, step=1, limit=1
          $region49: #{double_conv.1} parent=47 // loop_pre_header
            _
          $region50: #{double_conv.1} parent=47 // loop_header
            %s241 = sphi 0, %s245
            %p242 = scmp.ge.s32.totalorder %s241, 1
            %s246 = sphi %s226, %s226
            %s247 = sphi %s229, %s229
          $region51: #{double_conv.1} parent=47 // loop_header_branch
            %244 = sbr.rel (%p242) target = $region55
          $region52: #{double_conv.1} parent=47 // loop_body
            %v248 = vld [vmem:[%s246] sm:%s239]
            %249 = vst [vmem:[%s247] sm:%s239] %v248
          $region53: #{double_conv.1} parent=47 // loop_footer
            %s245 = sadd.s32 1, %s241
          $region54: #{double_conv.1} parent=47 // loop_footer_branch
            %240 = sbr.rel target = $region50
          $region55: #{double_conv.1} parent=47 // loop_exit
            _
        $region48: #{double_conv.1} parent=39 // pred_fallthru
          _
        // Predicated region
        $region71: #{double_conv.1} parent=39 // pred_check
          _
        $region72: #{double_conv.1} parent=39 // pred_check_branch
          %349 = sbr.rel (0) target = $region74
        $region73: #{double_conv.1} parent=39 // pred_region
          %350 = vsyncadd %s230, 5120
        $region74: #{double_conv.1} parent=39 // pred_fallthru
          _
      $region40: #{double_conv.1} parent=35 // pred_fallthru
        _
      %s351 = sadd.s32 %s21, 1
      %p352 = scmp.lt.s32.totalorder %s351, 1
      // Predicated region
      $region75: #{double_conv.1} parent=35 // pred_check
        %p353 = pneg %p352
      $region76: #{double_conv.1} parent=35 // pred_check_branch
        %355 = sbr.rel (%p353) target = $region78
      $region77: #{double_conv.1} parent=35 // pred_region
        %s356 = ssub.s32 1, %s216
        %s357 = smul.u32 %s351, 16
        %s358 = smul.u32 %s357, 4
        %s359 = smul.u32 %s20, 80
        %s360 = sadd.s32 %s358, %s359
        %s361 = smul.addr %s360, 4
        %s362 = scalar_lea.vmem %s0, %s361
        %s363 = smul.u32 %s356, 40
        %s364 = smul.addr %s363, 8
        %s365 = scalar_lea.vmem [#allocation2], %s364
        %s366 = scalar_lea.sflag [#allocation4], %s356
        %p368 = scmp.lt.u32.totalorder 320, 8
        %p369 = pneg %p368
        // Predicated region
        $region79: #{double_conv.1} parent=77 // pred_check
          _
        $region80: #{double_conv.1} parent=77 // pred_check_branch
          %371 = sbr.rel (%p368) target = $region82
        $region81: #{double_conv.1} parent=77 // pred_region
          %s386 = sand.u32 320, 7
          %p387 = scmp.eq.s32.totalorder %s386, 0
          // Predicated region
          $region94: #{double_conv.1} parent=81 // pred_check
            %p388 = pneg %p387
          $region95: #{double_conv.1} parent=81 // pred_check_branch
            %390 = sbr.rel (%p388) target = $region97
          $region96: #{double_conv.1} parent=81 // pred_region
            loop: start=0, step=1, limit=1
            $region98: #{double_conv.1} parent=96 // loop_pre_header
              _
            $region99: #{double_conv.1} parent=96 // loop_header
              %s392 = sphi 0, %s396
              %p393 = scmp.ge.s32.totalorder %s392, 1
              %s397 = sphi %s362, %s362
              %s398 = sphi %s365, %s365
            $region100: #{double_conv.1} parent=96 // loop_header_branch
              %395 = sbr.rel (%p393) target = $region104
            $region101: #{double_conv.1} parent=96 // loop_body
              %v399 = vld [vmem:[%s397] sm:$0xff]
              %400 = vst [vmem:[%s398] sm:$0xff] %v399
              %v401 = vld [vmem:[%s397 + $0x8] sm:$0xff]
              %402 = vst [vmem:[%s398 + $0x8] sm:$0xff] %v401
              %v403 = vld [vmem:[%s397 + $0x10] sm:$0xff]
              %404 = vst [vmem:[%s398 + $0x10] sm:$0xff] %v403
              %v405 = vld [vmem:[%s397 + $0x18] sm:$0xff]
              %406 = vst [vmem:[%s398 + $0x18] sm:$0xff] %v405
              %v407 = vld [vmem:[%s397 + $0x20] sm:$0xff]
              %408 = vst [vmem:[%s398 + $0x20] sm:$0xff] %v407
              %v409 = vld [vmem:[%s397 + $0x28] sm:$0xff]
              %410 = vst [vmem:[%s398 + $0x28] sm:$0xff] %v409
              %v411 = vld [vmem:[%s397 + $0x30] sm:$0xff]
              %412 = vst [vmem:[%s398 + $0x30] sm:$0xff] %v411
              %v413 = vld [vmem:[%s397 + $0x38] sm:$0xff]
              %414 = vst [vmem:[%s398 + $0x38] sm:$0xff] %v413
              %v415 = vld [vmem:[%s397 + $0x40] sm:$0xff]
              %416 = vst [vmem:[%s398 + $0x40] sm:$0xff] %v415
              %v417 = vld [vmem:[%s397 + $0x48] sm:$0xff]
              %418 = vst [vmem:[%s398 + $0x48] sm:$0xff] %v417
              %v419 = vld [vmem:[%s397 + $0x50] sm:$0xff]
              %420 = vst [vmem:[%s398 + $0x50] sm:$0xff] %v419
              %v421 = vld [vmem:[%s397 + $0x58] sm:$0xff]
              %422 = vst [vmem:[%s398 + $0x58] sm:$0xff] %v421
              %v423 = vld [vmem:[%s397 + $0x60] sm:$0xff]
              %424 = vst [vmem:[%s398 + $0x60] sm:$0xff] %v423
              %v425 = vld [vmem:[%s397 + $0x68] sm:$0xff]
              %426 = vst [vmem:[%s398 + $0x68] sm:$0xff] %v425
              %v427 = vld [vmem:[%s397 + $0x70] sm:$0xff]
              %428 = vst [vmem:[%s398 + $0x70] sm:$0xff] %v427
              %v429 = vld [vmem:[%s397 + $0x78] sm:$0xff]
              %430 = vst [vmem:[%s398 + $0x78] sm:$0xff] %v429
              %v431 = vld [vmem:[%s397 + $0x80] sm:$0xff]
              %432 = vst [vmem:[%s398 + $0x80] sm:$0xff] %v431
              %v433 = vld [vmem:[%s397 + $0x88] sm:$0xff]
              %434 = vst [vmem:[%s398 + $0x88] sm:$0xff] %v433
              %v435 = vld [vmem:[%s397 + $0x90] sm:$0xff]
              %436 = vst [vmem:[%s398 + $0x90] sm:$0xff] %v435
              %v437 = vld [vmem:[%s397 + $0x98] sm:$0xff]
              %438 = vst [vmem:[%s398 + $0x98] sm:$0xff] %v437
              %v439 = vld [vmem:[%s397 + $0xa0] sm:$0xff]
              %440 = vst [vmem:[%s398 + $0xa0] sm:$0xff] %v439
              %v441 = vld [vmem:[%s397 + $0xa8] sm:$0xff]
              %442 = vst [vmem:[%s398 + $0xa8] sm:$0xff] %v441
              %v443 = vld [vmem:[%s397 + $0xb0] sm:$0xff]
              %444 = vst [vmem:[%s398 + $0xb0] sm:$0xff] %v443
              %v445 = vld [vmem:[%s397 + $0xb8] sm:$0xff]
              %446 = vst [vmem:[%s398 + $0xb8] sm:$0xff] %v445
              %v447 = vld [vmem:[%s397 + $0xc0] sm:$0xff]
              %448 = vst [vmem:[%s398 + $0xc0] sm:$0xff] %v447
              %v449 = vld [vmem:[%s397 + $0xc8] sm:$0xff]
              %450 = vst [vmem:[%s398 + $0xc8] sm:$0xff] %v449
              %v451 = vld [vmem:[%s397 + $0xd0] sm:$0xff]
              %452 = vst [vmem:[%s398 + $0xd0] sm:$0xff] %v451
              %v453 = vld [vmem:[%s397 + $0xd8] sm:$0xff]
              %454 = vst [vmem:[%s398 + $0xd8] sm:$0xff] %v453
              %v455 = vld [vmem:[%s397 + $0xe0] sm:$0xff]
              %456 = vst [vmem:[%s398 + $0xe0] sm:$0xff] %v455
              %v457 = vld [vmem:[%s397 + $0xe8] sm:$0xff]
              %458 = vst [vmem:[%s398 + $0xe8] sm:$0xff] %v457
              %v459 = vld [vmem:[%s397 + $0xf0] sm:$0xff]
              %460 = vst [vmem:[%s398 + $0xf0] sm:$0xff] %v459
              %v461 = vld [vmem:[%s397 + $0xf8] sm:$0xff]
              %462 = vst [vmem:[%s398 + $0xf8] sm:$0xff] %v461
              %v463 = vld [vmem:[%s397 + $0x100] sm:$0xff]
              %464 = vst [vmem:[%s398 + $0x100] sm:$0xff] %v463
              %v465 = vld [vmem:[%s397 + $0x108] sm:$0xff]
              %466 = vst [vmem:[%s398 + $0x108] sm:$0xff] %v465
              %v467 = vld [vmem:[%s397 + $0x110] sm:$0xff]
              %468 = vst [vmem:[%s398 + $0x110] sm:$0xff] %v467
              %v469 = vld [vmem:[%s397 + $0x118] sm:$0xff]
              %470 = vst [vmem:[%s398 + $0x118] sm:$0xff] %v469
              %v471 = vld [vmem:[%s397 + $0x120] sm:$0xff]
              %472 = vst [vmem:[%s398 + $0x120] sm:$0xff] %v471
              %v473 = vld [vmem:[%s397 + $0x128] sm:$0xff]
              %474 = vst [vmem:[%s398 + $0x128] sm:$0xff] %v473
              %v475 = vld [vmem:[%s397 + $0x130] sm:$0xff]
              %476 = vst [vmem:[%s398 + $0x130] sm:$0xff] %v475
              %v477 = vld [vmem:[%s397 + $0x138] sm:$0xff]
              %478 = vst [vmem:[%s398 + $0x138] sm:$0xff] %v477
            $region102: #{double_conv.1} parent=96 // loop_footer
              %s396 = sadd.s32 1, %s392
            $region103: #{double_conv.1} parent=96 // loop_footer_branch
              %391 = sbr.rel target = $region99
            $region104: #{double_conv.1} parent=96 // loop_exit
              _
          $region97: #{double_conv.1} parent=81 // pred_fallthru
            _
          %p479 = pneg %p387
          // Predicated region
          $region105: #{double_conv.1} parent=81 // pred_check
            _
          $region106: #{double_conv.1} parent=81 // pred_check_branch
            %481 = sbr.rel (%p387) target = $region108
          $region107: #{double_conv.1} parent=81 // pred_region
            %s482 = sand.u32 320, 7
          $region108: #{double_conv.1} parent=81 // pred_fallthru
            _
        $region82: #{double_conv.1} parent=77 // pred_fallthru
          _
        // Predicated region
        $region83: #{double_conv.1} parent=77 // pred_check
          %p372 = pneg %p368
        $region84: #{double_conv.1} parent=77 // pred_check_branch
          %374 = sbr.rel (%p372) target = $region86
        $region85: #{double_conv.1} parent=77 // pred_region
          %s375 = sshllo.u32 0, 320
          loop: start=0, step=1, limit=1
          $region87: #{double_conv.1} parent=85 // loop_pre_header
            _
          $region88: #{double_conv.1} parent=85 // loop_header
            %s377 = sphi 0, %s381
            %p378 = scmp.ge.s32.totalorder %s377, 1
            %s382 = sphi %s362, %s362
            %s383 = sphi %s365, %s365
          $region89: #{double_conv.1} parent=85 // loop_header_branch
            %380 = sbr.rel (%p378) target = $region93
          $region90: #{double_conv.1} parent=85 // loop_body
            %v384 = vld [vmem:[%s382] sm:%s375]
            %385 = vst [vmem:[%s383] sm:%s375] %v384
          $region91: #{double_conv.1} parent=85 // loop_footer
            %s381 = sadd.s32 1, %s377
          $region92: #{double_conv.1} parent=85 // loop_footer_branch
            %376 = sbr.rel target = $region88
          $region93: #{double_conv.1} parent=85 // loop_exit
            _
        $region86: #{double_conv.1} parent=77 // pred_fallthru
          _
        // Predicated region
        $region109: #{double_conv.1} parent=77 // pred_check
          _
        $region110: #{double_conv.1} parent=77 // pred_check_branch
          %485 = sbr.rel (0) target = $region112
        $region111: #{double_conv.1} parent=77 // pred_region
          %486 = vsyncadd %s366, 5120
        $region112: #{double_conv.1} parent=77 // pred_fallthru
          _
      $region78: #{double_conv.1} parent=35 // pred_fallthru
        _
      %s487 = smul.u32 %s216, 40
      %s488 = smul.addr %s487, 8
      %s489 = scalar_lea.vmem [#allocation2], %s488
      %s490 = scalar_lea.sflag [#allocation4], %s216
      %s491 = smul.u32 4, 20
      %s492 = smul.u32 %s491, 4
      %s493 = smul.u32 %s492, 1
      %s494 = sshll.u32 %s493, 4
      %495 = dma.done %s490, %s494
      %v496 = vld [vmem:[%s489] sm:$0xff]
      %v497 = vld [vmem:[%s489 + $0x8] sm:$0xff]
      %v498 = vld [vmem:[%s489 + $0x10] sm:$0xff]
      %v499 = vld [vmem:[%s489 + $0x18] sm:$0xff]
      %v500 = vld [vmem:[%s489 + $0x20] sm:$0xff]
      %v501 = vld [vmem:[%s489 + $0x28] sm:$0xff]
      %v502 = vld [vmem:[%s489 + $0x30] sm:$0xff]
      %v503 = vld [vmem:[%s489 + $0x38] sm:$0xff]
      %v504 = vld [vmem:[%s489 + $0x40] sm:$0xff]
      %v505 = vld [vmem:[%s489 + $0x48] sm:$0xff]
      %v506 = vld [vmem:[%s489 + $0x50] sm:$0xff]
      %v507 = vld [vmem:[%s489 + $0x58] sm:$0xff]
      %v508 = vld [vmem:[%s489 + $0x60] sm:$0xff]
      %v509 = vld [vmem:[%s489 + $0x68] sm:$0xff]
      %v510 = vld [vmem:[%s489 + $0x70] sm:$0xff]
      %v511 = vld [vmem:[%s489 + $0x78] sm:$0xff]
      %v512 = vld [vmem:[%s489 + $0x80] sm:$0xff]
      %v513 = vld [vmem:[%s489 + $0x88] sm:$0xff]
      %v514 = vld [vmem:[%s489 + $0x90] sm:$0xff]
      %v515 = vld [vmem:[%s489 + $0x98] sm:$0xff]
      %v516 = vld [vmem:[%s489 + $0xa0] sm:$0xff]
      %v517 = vld [vmem:[%s489 + $0xa8] sm:$0xff]
      %v518 = vld [vmem:[%s489 + $0xb0] sm:$0xff]
      %v519 = vld [vmem:[%s489 + $0xb8] sm:$0xff]
      %v520 = vld [vmem:[%s489 + $0xc0] sm:$0xff]
      %v521 = vld [vmem:[%s489 + $0xc8] sm:$0xff]
      %v522 = vld [vmem:[%s489 + $0xd0] sm:$0xff]
      %v523 = vld [vmem:[%s489 + $0xd8] sm:$0xff]
      %v524 = vld [vmem:[%s489 + $0xe0] sm:$0xff]
      %v525 = vld [vmem:[%s489 + $0xe8] sm:$0xff]
      %v526 = vld [vmem:[%s489 + $0xf0] sm:$0xff]
      %v527 = vld [vmem:[%s489 + $0xf8] sm:$0xff]
      %v528 = vld [vmem:[%s489 + $0x100] sm:$0xff]
      %v529 = vld [vmem:[%s489 + $0x108] sm:$0xff]
      %v530 = vld [vmem:[%s489 + $0x110] sm:$0xff]
      %v531 = vld [vmem:[%s489 + $0x118] sm:$0xff]
      %v532 = vld [vmem:[%s489 + $0x120] sm:$0xff]
      %v533 = vld [vmem:[%s489 + $0x128] sm:$0xff]
      %v534 = vld [vmem:[%s489 + $0x130] sm:$0xff]
      %v535 = vld [vmem:[%s489 + $0x138] sm:$0xff]
      %vm536 = vsmask.f32 7424
      %v538 = vshrl.u32 %v496, 16
      %v540 = vshll.u32 %v496, 16
      %v542 = vrot.slane %v540, 1
      %v543 = vor.u32 %v538, %v542
      %v545 = vshll.u32 %v497, 16
      %v547 = vrot.slane %v545, 1
      %v548 = vsel %vm536, %v543, %v547
      %v550 = vshrl.u32 %v498, 16
      %v552 = vshll.u32 %v498, 16
      %v554 = vrot.slane %v552, 1
      %v555 = vor.u32 %v550, %v554
      %v557 = vshll.u32 %v499, 16
      %v559 = vrot.slane %v557, 1
      %v560 = vsel %vm536, %v555, %v559
      %v562 = vshrl.u32 %v500, 16
      %v564 = vshll.u32 %v500, 16
      %v566 = vrot.slane %v564, 1
      %v567 = vor.u32 %v562, %v566
      %v569 = vshll.u32 %v501, 16
      %v571 = vrot.slane %v569, 1
      %v572 = vsel %vm536, %v567, %v571
      %v574 = vshrl.u32 %v502, 16
      %v576 = vshll.u32 %v502, 16
      %v578 = vrot.slane %v576, 1
      %v579 = vor.u32 %v574, %v578
      %v581 = vshll.u32 %v503, 16
      %v583 = vrot.slane %v581, 1
      %v584 = vsel %vm536, %v579, %v583
      %v586 = vshrl.u32 %v504, 16
      %v588 = vshll.u32 %v504, 16
      %v590 = vrot.slane %v588, 1
      %v591 = vor.u32 %v586, %v590
      %v593 = vshll.u32 %v505, 16
      %v595 = vrot.slane %v593, 1
      %v596 = vsel %vm536, %v591, %v595
      %v598 = vshrl.u32 %v506, 16
      %v600 = vshll.u32 %v506, 16
      %v602 = vrot.slane %v600, 1
      %v603 = vor.u32 %v598, %v602
      %v605 = vshll.u32 %v507, 16
      %v607 = vrot.slane %v605, 1
      %v608 = vsel %vm536, %v603, %v607
      %v610 = vshrl.u32 %v508, 16
      %v612 = vshll.u32 %v508, 16
      %v614 = vrot.slane %v612, 1
      %v615 = vor.u32 %v610, %v614
      %v617 = vshll.u32 %v509, 16
      %v619 = vrot.slane %v617, 1
      %v620 = vsel %vm536, %v615, %v619
      %v622 = vshrl.u32 %v510, 16
      %v624 = vshll.u32 %v510, 16
      %v626 = vrot.slane %v624, 1
      %v627 = vor.u32 %v622, %v626
      %v629 = vshll.u32 %v511, 16
      %v631 = vrot.slane %v629, 1
      %v632 = vsel %vm536, %v627, %v631
      %v634 = vshrl.u32 %v512, 16
      %v636 = vshll.u32 %v512, 16
      %v638 = vrot.slane %v636, 1
      %v639 = vor.u32 %v634, %v638
      %v641 = vshll.u32 %v513, 16
      %v643 = vrot.slane %v641, 1
      %v644 = vsel %vm536, %v639, %v643
      %v646 = vshrl.u32 %v514, 16
      %v648 = vshll.u32 %v514, 16
      %v650 = vrot.slane %v648, 1
      %v651 = vor.u32 %v646, %v650
      %v653 = vshll.u32 %v515, 16
      %v655 = vrot.slane %v653, 1
      %v656 = vsel %vm536, %v651, %v655
      %v658 = vshrl.u32 %v516, 16
      %v660 = vshll.u32 %v516, 16
      %v662 = vrot.slane %v660, 1
      %v663 = vor.u32 %v658, %v662
      %v665 = vshll.u32 %v517, 16
      %v667 = vrot.slane %v665, 1
      %v668 = vsel %vm536, %v663, %v667
      %v670 = vshrl.u32 %v518, 16
      %v672 = vshll.u32 %v518, 16
      %v674 = vrot.slane %v672, 1
      %v675 = vor.u32 %v670, %v674
      %v677 = vshll.u32 %v519, 16
      %v679 = vrot.slane %v677, 1
      %v680 = vsel %vm536, %v675, %v679
      %v682 = vshrl.u32 %v520, 16
      %v684 = vshll.u32 %v520, 16
      %v686 = vrot.slane %v684, 1
      %v687 = vor.u32 %v682, %v686
      %v689 = vshll.u32 %v521, 16
      %v691 = vrot.slane %v689, 1
      %v692 = vsel %vm536, %v687, %v691
      %v694 = vshrl.u32 %v522, 16
      %v696 = vshll.u32 %v522, 16
      %v698 = vrot.slane %v696, 1
      %v699 = vor.u32 %v694, %v698
      %v701 = vshll.u32 %v523, 16
      %v703 = vrot.slane %v701, 1
      %v704 = vsel %vm536, %v699, %v703
      %v706 = vshrl.u32 %v524, 16
      %v708 = vshll.u32 %v524, 16
      %v710 = vrot.slane %v708, 1
      %v711 = vor.u32 %v706, %v710
      %v713 = vshll.u32 %v525, 16
      %v715 = vrot.slane %v713, 1
      %v716 = vsel %vm536, %v711, %v715
      %v718 = vshrl.u32 %v526, 16
      %v720 = vshll.u32 %v526, 16
      %v722 = vrot.slane %v720, 1
      %v723 = vor.u32 %v718, %v722
      %v725 = vshll.u32 %v527, 16
      %v727 = vrot.slane %v725, 1
      %v728 = vsel %vm536, %v723, %v727
      %v730 = vshrl.u32 %v528, 16
      %v732 = vshll.u32 %v528, 16
      %v734 = vrot.slane %v732, 1
      %v735 = vor.u32 %v730, %v734
      %v737 = vshll.u32 %v529, 16
      %v739 = vrot.slane %v737, 1
      %v740 = vsel %vm536, %v735, %v739
      %v742 = vshrl.u32 %v530, 16
      %v744 = vshll.u32 %v530, 16
      %v746 = vrot.slane %v744, 1
      %v747 = vor.u32 %v742, %v746
      %v749 = vshll.u32 %v531, 16
      %v751 = vrot.slane %v749, 1
      %v752 = vsel %vm536, %v747, %v751
      %v754 = vshrl.u32 %v532, 16
      %v756 = vshll.u32 %v532, 16
      %v758 = vrot.slane %v756, 1
      %v759 = vor.u32 %v754, %v758
      %v761 = vshll.u32 %v533, 16
      %v763 = vrot.slane %v761, 1
      %v764 = vsel %vm536, %v759, %v763
      %v766 = vshrl.u32 %v534, 16
      %v768 = vshll.u32 %v534, 16
      %v770 = vrot.slane %v768, 1
      %v771 = vor.u32 %v766, %v770
      %v773 = vshll.u32 %v535, 16
      %v775 = vrot.slane %v773, 1
      %v776 = vsel %vm536, %v771, %v775
      %vm837 = vcmask 1046528
      %v838 = vrot.slane %v496, 1
      %v839 = vrot.slane %v497, 1
      %v840 = vsel %vm837, %v838, %v839
      %v841 = vrot.slane %v498, 1
      %v842 = vrot.slane %v499, 1
      %v843 = vsel %vm837, %v841, %v842
      %v844 = vrot.slane %v500, 1
      %v845 = vrot.slane %v501, 1
      %v846 = vsel %vm837, %v844, %v845
      %v847 = vrot.slane %v502, 1
      %v848 = vrot.slane %v503, 1
      %v849 = vsel %vm837, %v847, %v848
      %v850 = vrot.slane %v504, 1
      %v851 = vrot.slane %v505, 1
      %v852 = vsel %vm837, %v850, %v851
      %v853 = vrot.slane %v506, 1
      %v854 = vrot.slane %v507, 1
      %v855 = vsel %vm837, %v853, %v854
      %v856 = vrot.slane %v508, 1
      %v857 = vrot.slane %v509, 1
      %v858 = vsel %vm837, %v856, %v857
      %v859 = vrot.slane %v510, 1
      %v860 = vrot.slane %v511, 1
      %v861 = vsel %vm837, %v859, %v860
      %v862 = vrot.slane %v512, 1
      %v863 = vrot.slane %v513, 1
      %v864 = vsel %vm837, %v862, %v863
      %v865 = vrot.slane %v514, 1
      %v866 = vrot.slane %v515, 1
      %v867 = vsel %vm837, %v865, %v866
      %v868 = vrot.slane %v516, 1
      %v869 = vrot.slane %v517, 1
      %v870 = vsel %vm837, %v868, %v869
      %v871 = vrot.slane %v518, 1
      %v872 = vrot.slane %v519, 1
      %v873 = vsel %vm837, %v871, %v872
      %v874 = vrot.slane %v520, 1
      %v875 = vrot.slane %v521, 1
      %v876 = vsel %vm837, %v874, %v875
      %v877 = vrot.slane %v522, 1
      %v878 = vrot.slane %v523, 1
      %v879 = vsel %vm837, %v877, %v878
      %v880 = vrot.slane %v524, 1
      %v881 = vrot.slane %v525, 1
      %v882 = vsel %vm837, %v880, %v881
      %v883 = vrot.slane %v526, 1
      %v884 = vrot.slane %v527, 1
      %v885 = vsel %vm837, %v883, %v884
      %v886 = vrot.slane %v528, 1
      %v887 = vrot.slane %v529, 1
      %v888 = vsel %vm837, %v886, %v887
      %v889 = vrot.slane %v530, 1
      %v890 = vrot.slane %v531, 1
      %v891 = vsel %vm837, %v889, %v890
      %v892 = vrot.slane %v532, 1
      %v893 = vrot.slane %v533, 1
      %v894 = vsel %vm837, %v892, %v893
      %v895 = vrot.slane %v534, 1
      %v896 = vrot.slane %v535, 1
      %v897 = vsel %vm837, %v895, %v896
      %v918 = vld [vmem:[%s2] sm:$0x1]
      %v920 = vlaneseq
      %v921 = vshrl.u32 %v920, 7
      %v922 = vsub.s32 0, %v921
      %v923 = vrot.slane %v918, %v922
      %v925 = vld [vmem:[%s1] sm:$0xf]
      %v926 = vld [vmem:[%s1 + $0x4] sm:$0xf]
      %v927 = vld [vmem:[%s1 + $0x8] sm:$0xf]
      %v928 = vld [vmem:[%s1 + $0xc] sm:$0xf]
      %v929 = vld [vmem:[%s1 + $0x10] sm:$0xf]
      %v930 = vld [vmem:[%s1 + $0x14] sm:$0xf]
      %v931 = vld [vmem:[%s1 + $0x18] sm:$0xf]
      %v932 = vld [vmem:[%s1 + $0x1c] sm:$0xf]
      %v933 = vld [vmem:[%s1 + $0x20] sm:$0xf]
      %v934 = vld [vmem:[%s1 + $0x24] sm:$0xf]
      %v935 = vld [vmem:[%s1 + $0x28] sm:$0xf]
      %v936 = vld [vmem:[%s1 + $0x2c] sm:$0xf]
      %v937 = vld [vmem:[%s1 + $0x30] sm:$0xf]
      %v938 = vld [vmem:[%s1 + $0x34] sm:$0xf]
      %v939 = vld [vmem:[%s1 + $0x38] sm:$0xf]
      %v940 = vld [vmem:[%s1 + $0x3c] sm:$0xf]
      %v941 = vld [vmem:[%s1 + $0x40] sm:$0xf]
      %v942 = vld [vmem:[%s1 + $0x44] sm:$0xf]
      %v943 = vld [vmem:[%s1 + $0x48] sm:$0xf]
      %v944 = vld [vmem:[%s1 + $0x4c] sm:$0xf]
      %v945 = vld [vmem:[%s1 + $0x50] sm:$0xf]
      %v946 = vld [vmem:[%s1 + $0x54] sm:$0xf]
      %v947 = vld [vmem:[%s1 + $0x58] sm:$0xf]
      %v948 = vld [vmem:[%s1 + $0x5c] sm:$0xf]
      %v949 = vld [vmem:[%s1 + $0x60] sm:$0xf]
      %v950 = vld [vmem:[%s1 + $0x64] sm:$0xf]
      %v951 = vld [vmem:[%s1 + $0x68] sm:$0xf]
      %v952 = vld [vmem:[%s1 + $0x6c] sm:$0xf]
      %v953 = vld [vmem:[%s1 + $0x70] sm:$0xf]
      %v954 = vld [vmem:[%s1 + $0x74] sm:$0xf]
      %v955 = vld [vmem:[%s1 + $0x78] sm:$0xf]
      %v956 = vld [vmem:[%s1 + $0x7c] sm:$0xf]
      %v957 = vld [vmem:[%s1 + $0x80] sm:$0xf]
      %v958 = vld [vmem:[%s1 + $0x84] sm:$0xf]
      %v959 = vld [vmem:[%s1 + $0x88] sm:$0xf]
      %v960 = vld [vmem:[%s1 + $0x8c] sm:$0xf]
      %v961 = vld [vmem:[%s1 + $0x90] sm:$0xf]
      %v962 = vld [vmem:[%s1 + $0x94] sm:$0xf]
      %v963 = vld [vmem:[%s1 + $0x98] sm:$0xf]
      %v964 = vld [vmem:[%s1 + $0x9c] sm:$0xf]
      %v965 = vld [vmem:[%s1 + $0xa0] sm:$0xf]
      %v966 = vld [vmem:[%s1 + $0xa4] sm:$0xf]
      %v967 = vld [vmem:[%s1 + $0xa8] sm:$0xf]
      %v968 = vld [vmem:[%s1 + $0xac] sm:$0xf]
      %v969 = vld [vmem:[%s1 + $0xb0] sm:$0xf]
      %v970 = vld [vmem:[%s1 + $0xb4] sm:$0xf]
      %v971 = vld [vmem:[%s1 + $0xb8] sm:$0xf]
      %v972 = vld [vmem:[%s1 + $0xbc] sm:$0xf]
      %v1021 = vunpack.c.l.b16 %v925
      %v1022 = vunpack.c.l.b16 %v926
      %v1023 = vunpack.c.l.b16 %v927
      %v1024 = vunpack.c.l.b16 %v928
      %v1025 = vunpack.c.l.b16 %v929
      %v1026 = vunpack.c.l.b16 %v930
      %v1027 = vunpack.c.l.b16 %v931
      %v1028 = vunpack.c.l.b16 %v932
      %v1029 = vunpack.c.l.b16 %v933
      %v1030 = vunpack.c.l.b16 %v934
      %v1031 = vunpack.c.l.b16 %v935
      %v1032 = vunpack.c.l.b16 %v936
      %v1033 = vunpack.c.l.b16 %v937
      %v1034 = vunpack.c.l.b16 %v938
      %v1035 = vunpack.c.l.b16 %v939
      %v1036 = vunpack.c.l.b16 %v940
      %v1037 = vunpack.c.l.b16 %v941
      %v1038 = vunpack.c.l.b16 %v942
      %v1039 = vunpack.c.l.b16 %v943
      %v1040 = vunpack.c.l.b16 %v944
      %v1041 = vunpack.c.l.b16 %v945
      %v1042 = vunpack.c.l.b16 %v946
      %v1043 = vunpack.c.l.b16 %v947
      %v1044 = vunpack.c.l.b16 %v948
      %v1045 = vunpack.c.l.b16 %v949
      %v1046 = vunpack.c.l.b16 %v950
      %v1047 = vunpack.c.l.b16 %v951
      %v1048 = vunpack.c.l.b16 %v952
      %v1049 = vunpack.c.l.b16 %v953
      %v1050 = vunpack.c.l.b16 %v954
      %v1051 = vunpack.c.l.b16 %v955
      %v1052 = vunpack.c.l.b16 %v956
      %v1053 = vunpack.c.l.b16 %v957
      %v1054 = vunpack.c.l.b16 %v958
      %v1055 = vunpack.c.l.b16 %v959
      %v1056 = vunpack.c.l.b16 %v960
      %v1057 = vunpack.c.l.b16 %v961
      %v1058 = vunpack.c.l.b16 %v962
      %v1059 = vunpack.c.l.b16 %v963
      %v1060 = vunpack.c.l.b16 %v964
      %v1061 = vunpack.c.l.b16 %v965
      %v1062 = vunpack.c.l.b16 %v966
      %v1063 = vunpack.c.l.b16 %v967
      %v1064 = vunpack.c.l.b16 %v968
      %v1065 = vunpack.c.l.b16 %v969
      %v1066 = vunpack.c.l.b16 %v970
      %v1067 = vunpack.c.l.b16 %v971
      %v1068 = vunpack.c.l.b16 %v972
      %v1069 = vpack.c.b16 %v1022, %v1021
      %v1070 = vpack.c.b16 %v1024, %v1023
      %v1071 = vpack.c.b16 %v1026, %v1025
      %v1072 = vpack.c.b16 %v1028, %v1027
      %v1073 = vpack.c.b16 %v1030, %v1029
      %v1074 = vpack.c.b16 %v1032, %v1031
      %v1075 = vpack.c.b16 %v1034, %v1033
      %v1076 = vpack.c.b16 %v1036, %v1035
      %v1077 = vpack.c.b16 %v1038, %v1037
      %v1078 = vpack.c.b16 %v1040, %v1039
      %v1079 = vpack.c.b16 %v1042, %v1041
      %v1080 = vpack.c.b16 %v1044, %v1043
      %v1081 = vpack.c.b16 %v1046, %v1045
      %v1082 = vpack.c.b16 %v1048, %v1047
      %v1083 = vpack.c.b16 %v1050, %v1049
      %v1084 = vpack.c.b16 %v1052, %v1051
      %v1085 = vpack.c.b16 %v1054, %v1053
      %v1086 = vpack.c.b16 %v1056, %v1055
      %v1087 = vpack.c.b16 %v1058, %v1057
      %v1088 = vpack.c.b16 %v1060, %v1059
      %v1089 = vpack.c.b16 %v1062, %v1061
      %v1090 = vpack.c.b16 %v1064, %v1063
      %v1091 = vpack.c.b16 %v1066, %v1065
      %v1092 = vpack.c.b16 %v1068, %v1067
      %1117 = vmatprep.subr.bf16.mxu0 0
      %1118 = vmatpush1.bf16.msra.mxu0 %v1069
      %1119 = vmatprep.subr.bf16.mxu0 0
      %1120 = vmatpush1.bf16.msra.mxu0 %v1070
      %1121 = vmatprep.subr.bf16.mxu0 0
      %1122 = vmatpush1.bf16.msra.mxu0 %v1071
      %1123 = vmatprep.subr.bf16.mxu0 0
      %1124 = vmatpush1.bf16.msra.mxu0 %v1072
      %1125 = vmatprep.subr.bf16.mxu0 0
      %1126 = vmatpush1.bf16.msra.mxu0 %v1073
      %1127 = vmatprep.subr.bf16.mxu0 0
      %1128 = vmatpush1.bf16.msra.mxu0 %v1074
      %1129 = vmatprep.subr.bf16.mxu0 0
      %1130 = vmatpush1.bf16.msra.mxu0 %v1075
      %1131 = vmatprep.subr.bf16.mxu0 0
      %1132 = vmatpush1.bf16.msra.mxu0 %v1076
      %1133 = vmatprep.subr.bf16.mxu0 0
      %1134 = vmatpush1.bf16.msra.mxu0 %v1077
      %1135 = vmatprep.subr.bf16.mxu0 0
      %1136 = vmatpush1.bf16.msra.mxu0 %v1078
      %1137 = vmatprep.subr.bf16.mxu0 0
      %1138 = vmatpush1.bf16.msra.mxu0 %v1079
      %1139 = vmatprep.subr.bf16.mxu0 0
      %1140 = vmatpush1.bf16.msra.mxu0 %v1080
      %1141 = vmatprep.subr.bf16.mxu0 0
      %1142 = vmatpush1.bf16.msra.mxu0 %v1081
      %1143 = vmatprep.subr.bf16.mxu0 0
      %1144 = vmatpush1.bf16.msra.mxu0 %v1082
      %1145 = vmatprep.subr.bf16.mxu0 0
      %1146 = vmatpush1.bf16.msra.mxu0 %v1083
      %1147 = vmatprep.subr.bf16.mxu0 0
      %1148 = vmatpush1.bf16.msra.mxu0 %v1084
      %1149 = vmatprep.mubr.bf16.mxu0 %v548
      %1150 = vmatmul.mubr.bf16.gmra.mrb[0].mxu0 %v496
      %v1151 = vpop.f32.mrb[0].mxu0
      %v1152 = vadd.f32 0.0, %v1151
      %v1153 = vpop.f32.mrb[0].mxu0
      %v1154 = vpop.f32.mrb[0].mxu0
      %v1155 = vadd.f32 0.0, %v1154
      %v1156 = vpop.f32.mrb[0].mxu0
      %1157 = vmatprep.mubr.bf16.mxu0 %v560
      %1158 = vmatmul.mubr.bf16.gmra.mrb[0].mxu0 %v498
      %v1159 = vpop.f32.mrb[0].mxu0
      %v1160 = vadd.f32 0.0, %v1159
      %v1161 = vpop.f32.mrb[0].mxu0
      %v1162 = vpop.f32.mrb[0].mxu0
      %v1163 = vadd.f32 0.0, %v1162
      %v1164 = vpop.f32.mrb[0].mxu0
      %1165 = vmatprep.mubr.bf16.mxu0 %v572
      %1166 = vmatmul.mubr.bf16.gmra.mrb[0].mxu0 %v500
      %v1167 = vpop.f32.mrb[0].mxu0
      %v1168 = vadd.f32 0.0, %v1167
      %v1169 = vpop.f32.mrb[0].mxu0
      %v1170 = vpop.f32.mrb[0].mxu0
      %v1171 = vadd.f32 0.0, %v1170
      %v1172 = vpop.f32.mrb[0].mxu0
      %1173 = vmatprep.mubr.bf16.mxu0 %v584
      %1174 = vmatmul.mubr.bf16.gmra.mrb[0].mxu0 %v502
      %v1175 = vpop.f32.mrb[0].mxu0
      %v1176 = vadd.f32 0.0, %v1175
      %v1177 = vpop.f32.mrb[0].mxu0
      %v1178 = vpop.f32.mrb[0].mxu0
      %v1179 = vadd.f32 0.0, %v1178
      %v1180 = vpop.f32.mrb[0].mxu0
      %1181 = vmatprep.mubr.bf16.mxu0 %v596
      %1182 = vmatmul.mubr.bf16.gmra.mrb[0].mxu0 %v504
      %v1183 = vpop.f32.mrb[0].mxu0
      %v1184 = vadd.f32 0.0, %v1183
      %v1185 = vpop.f32.mrb[0].mxu0
      %v1186 = vpop.f32.mrb[0].mxu0
      %v1187 = vadd.f32 0.0, %v1186
      %v1188 = vpop.f32.mrb[0].mxu0
      %1189 = vmatprep.mubr.bf16.mxu0 %v608
      %1190 = vmatmul.mubr.bf16.gmra.mrb[0].mxu0 %v506
      %v1191 = vpop.f32.mrb[0].mxu0
      %v1192 = vadd.f32 0.0, %v1191
      %v1193 = vpop.f32.mrb[0].mxu0
      %v1194 = vpop.f32.mrb[0].mxu0
      %v1195 = vadd.f32 0.0, %v1194
      %v1196 = vpop.f32.mrb[0].mxu0
      %1197 = vmatprep.mubr.bf16.mxu0 %v620
      %1198 = vmatmul.mubr.bf16.gmra.mrb[0].mxu0 %v508
      %v1199 = vpop.f32.mrb[0].mxu0
      %v1200 = vadd.f32 0.0, %v1199
      %v1201 = vpop.f32.mrb[0].mxu0
      %v1202 = vpop.f32.mrb[0].mxu0
      %v1203 = vadd.f32 0.0, %v1202
      %v1204 = vpop.f32.mrb[0].mxu0
      %1205 = vmatprep.mubr.bf16.mxu0 %v632
      %1206 = vmatmul.mubr.bf16.gmra.mrb[0].mxu0 %v510
      %v1207 = vpop.f32.mrb[0].mxu0
      %v1208 = vadd.f32 0.0, %v1207
      %v1209 = vpop.f32.mrb[0].mxu0
      %v1210 = vpop.f32.mrb[0].mxu0
      %v1211 = vadd.f32 0.0, %v1210
      %v1212 = vpop.f32.mrb[0].mxu0
      %1213 = vmatprep.mubr.bf16.mxu0 %v644
      %1214 = vmatmul.mubr.bf16.gmra.mrb[0].mxu0 %v512
      %v1215 = vpop.f32.mrb[0].mxu0
      %v1216 = vadd.f32 0.0, %v1215
      %v1217 = vpop.f32.mrb[0].mxu0
      %v1218 = vpop.f32.mrb[0].mxu0
      %v1219 = vadd.f32 0.0, %v1218
      %v1220 = vpop.f32.mrb[0].mxu0
      %1221 = vmatprep.mubr.bf16.mxu0 %v656
      %1222 = vmatmul.mubr.bf16.gmra.mrb[0].mxu0 %v514
      %v1223 = vpop.f32.mrb[0].mxu0
      %v1224 = vadd.f32 0.0, %v1223
      %v1225 = vpop.f32.mrb[0].mxu0
      %v1226 = vpop.f32.mrb[0].mxu0
      %v1227 = vadd.f32 0.0, %v1226
      %v1228 = vpop.f32.mrb[0].mxu0
      %1229 = vmatprep.mubr.bf16.mxu0 %v668
      %1230 = vmatmul.mubr.bf16.gmra.mrb[0].mxu0 %v516
      %v1231 = vpop.f32.mrb[0].mxu0
      %v1232 = vadd.f32 0.0, %v1231
      %v1233 = vpop.f32.mrb[0].mxu0
      %v1234 = vpop.f32.mrb[0].mxu0
      %v1235 = vadd.f32 0.0, %v1234
      %v1236 = vpop.f32.mrb[0].mxu0
      %1237 = vmatprep.mubr.bf16.mxu0 %v680
      %1238 = vmatmul.mubr.bf16.gmra.mrb[0].mxu0 %v518
      %v1239 = vpop.f32.mrb[0].mxu0
      %v1240 = vadd.f32 0.0, %v1239
      %v1241 = vpop.f32.mrb[0].mxu0
      %v1242 = vpop.f32.mrb[0].mxu0
      %v1243 = vadd.f32 0.0, %v1242
      %v1244 = vpop.f32.mrb[0].mxu0
      %1245 = vmatprep.mubr.bf16.mxu0 %v692
      %1246 = vmatmul.mubr.bf16.gmra.mrb[0].mxu0 %v520
      %v1247 = vpop.f32.mrb[0].mxu0
      %v1248 = vadd.f32 0.0, %v1247
      %v1249 = vpop.f32.mrb[0].mxu0
      %v1250 = vpop.f32.mrb[0].mxu0
      %v1251 = vadd.f32 0.0, %v1250
      %v1252 = vpop.f32.mrb[0].mxu0
      %1253 = vmatprep.mubr.bf16.mxu0 %v704
      %1254 = vmatmul.mubr.bf16.gmra.mrb[0].mxu0 %v522
      %v1255 = vpop.f32.mrb[0].mxu0
      %v1256 = vadd.f32 0.0, %v1255
      %v1257 = vpop.f32.mrb[0].mxu0
      %v1258 = vpop.f32.mrb[0].mxu0
      %v1259 = vadd.f32 0.0, %v1258
      %v1260 = vpop.f32.mrb[0].mxu0
      %1261 = vmatprep.mubr.bf16.mxu0 %v716
      %1262 = vmatmul.mubr.bf16.gmra.mrb[0].mxu0 %v524
      %v1263 = vpop.f32.mrb[0].mxu0
      %v1264 = vadd.f32 0.0, %v1263
      %v1265 = vpop.f32.mrb[0].mxu0
      %v1266 = vpop.f32.mrb[0].mxu0
      %v1267 = vadd.f32 0.0, %v1266
      %v1268 = vpop.f32.mrb[0].mxu0
      %1269 = vmatprep.mubr.bf16.mxu0 %v728
      %1270 = vmatmul.mubr.bf16.gmra.mrb[0].mxu0 %v526
      %v1271 = vpop.f32.mrb[0].mxu0
      %v1272 = vadd.f32 0.0, %v1271
      %v1273 = vpop.f32.mrb[0].mxu0
      %v1274 = vpop.f32.mrb[0].mxu0
      %v1275 = vadd.f32 0.0, %v1274
      %v1276 = vpop.f32.mrb[0].mxu0
      %1277 = vmatprep.mubr.bf16.mxu0 %v740
      %1278 = vmatmul.mubr.bf16.gmra.mrb[0].mxu0 %v528
      %v1279 = vpop.f32.mrb[0].mxu0
      %v1280 = vadd.f32 0.0, %v1279
      %v1281 = vpop.f32.mrb[0].mxu0
      %v1282 = vpop.f32.mrb[0].mxu0
      %v1283 = vadd.f32 0.0, %v1282
      %v1284 = vpop.f32.mrb[0].mxu0
      %1285 = vmatprep.mubr.bf16.mxu0 %v752
      %1286 = vmatmul.mubr.bf16.gmra.mrb[0].mxu0 %v530
      %v1287 = vpop.f32.mrb[0].mxu0
      %v1288 = vadd.f32 0.0, %v1287
      %v1289 = vpop.f32.mrb[0].mxu0
      %v1290 = vpop.f32.mrb[0].mxu0
      %v1291 = vadd.f32 0.0, %v1290
      %v1292 = vpop.f32.mrb[0].mxu0
      %1293 = vdwg.mxu0
      %1294 = vmatprep.subr.bf16.mxu0 0
      %1295 = vmatpush1.bf16.msra.mxu0 %v1085
      %1296 = vmatprep.subr.bf16.mxu0 0
      %1297 = vmatpush1.bf16.msra.mxu0 %v1086
      %1298 = vmatprep.subr.bf16.mxu0 0
      %1299 = vmatpush1.bf16.msra.mxu0 %v1087
      %1300 = vmatprep.subr.bf16.mxu0 0
      %1301 = vmatpush1.bf16.msra.mxu0 %v1088
      %1302 = vmatprep.subr.bf16.mxu0 0
      %1303 = vmatpush1.bf16.msra.mxu0 %v1089
      %1304 = vmatprep.subr.bf16.mxu0 0
      %1305 = vmatpush1.bf16.msra.mxu0 %v1090
      %1306 = vmatprep.subr.bf16.mxu0 0
      %1307 = vmatpush1.bf16.msra.mxu0 %v1091
      %1308 = vmatprep.subr.bf16.mxu0 0
      %1309 = vmatpush1.bf16.msra.mxu0 %v1092
      %1310 = vmatprep.subr.bf16.mxu0 0
      %1311 = vmatpush1.bf16.msra.mxu0 0
      %1312 = vmatprep.subr.bf16.mxu0 0
      %1313 = vmatpush1.bf16.msra.mxu0 0
      %1314 = vmatprep.subr.bf16.mxu0 0
      %1315 = vmatpush1.bf16.msra.mxu0 0
      %1316 = vmatprep.subr.bf16.mxu0 0
      %1317 = vmatpush1.bf16.msra.mxu0 0
      %1318 = vmatprep.subr.bf16.mxu0 0
      %1319 = vmatpush1.bf16.msra.mxu0 0
      %1320 = vmatprep.subr.bf16.mxu0 0
      %1321 = vmatpush1.bf16.msra.mxu0 0
      %1322 = vmatprep.subr.bf16.mxu0 0
      %1323 = vmatpush1.bf16.msra.mxu0 0
      %1324 = vmatprep.subr.bf16.mxu0 0
      %1325 = vmatpush1.bf16.msra.mxu0 0
      %1326 = vmatprep.mubr.bf16.mxu0 0
      %1327 = vmatmul.mubr.bf16.gmra.mrb[0].mxu0 %v840
      %v1328 = vpop.f32.mrb[0].mxu0
      %v1329 = vadd.f32 %v1152, %v1328
      %v1330 = vpop.f32.mrb[0].mxu0
      %v1331 = vpop.f32.mrb[0].mxu0
      %v1332 = vadd.f32 %v1155, %v1331
      %v1333 = vpop.f32.mrb[0].mxu0
      %1334 = vmatprep.mubr.bf16.mxu0 0
      %1335 = vmatmul.mubr.bf16.gmra.mrb[0].mxu0 %v843
      %v1336 = vpop.f32.mrb[0].mxu0
      %v1337 = vadd.f32 %v1160, %v1336
      %v1338 = vpop.f32.mrb[0].mxu0
      %v1339 = vpop.f32.mrb[0].mxu0
      %v1340 = vadd.f32 %v1163, %v1339
      %v1341 = vpop.f32.mrb[0].mxu0
      %1342 = vmatprep.mubr.bf16.mxu0 0
      %1343 = vmatmul.mubr.bf16.gmra.mrb[0].mxu0 %v846
      %v1344 = vpop.f32.mrb[0].mxu0
      %v1345 = vadd.f32 %v1168, %v1344
      %v1346 = vpop.f32.mrb[0].mxu0
      %v1347 = vpop.f32.mrb[0].mxu0
      %v1348 = vadd.f32 %v1171, %v1347
      %v1349 = vpop.f32.mrb[0].mxu0
      %1350 = vmatprep.mubr.bf16.mxu0 0
      %1351 = vmatmul.mubr.bf16.gmra.mrb[0].mxu0 %v849
      %v1352 = vpop.f32.mrb[0].mxu0
      %v1353 = vadd.f32 %v1176, %v1352
      %v1354 = vpop.f32.mrb[0].mxu0
      %v1355 = vpop.f32.mrb[0].mxu0
      %v1356 = vadd.f32 %v1179, %v1355
      %v1357 = vpop.f32.mrb[0].mxu0
      %1358 = vmatprep.mubr.bf16.mxu0 0
      %1359 = vmatmul.mubr.bf16.gmra.mrb[0].mxu0 %v852
      %v1360 = vpop.f32.mrb[0].mxu0
      %v1361 = vadd.f32 %v1184, %v1360
      %v1362 = vpop.f32.mrb[0].mxu0
      %v1363 = vpop.f32.mrb[0].mxu0
      %v1364 = vadd.f32 %v1187, %v1363
      %v1365 = vpop.f32.mrb[0].mxu0
      %1366 = vmatprep.mubr.bf16.mxu0 0
      %1367 = vmatmul.mubr.bf16.gmra.mrb[0].mxu0 %v855
      %v1368 = vpop.f32.mrb[0].mxu0
      %v1369 = vadd.f32 %v1192, %v1368
      %v1370 = vpop.f32.mrb[0].mxu0
      %v1371 = vpop.f32.mrb[0].mxu0
      %v1372 = vadd.f32 %v1195, %v1371
      %v1373 = vpop.f32.mrb[0].mxu0
      %1374 = vmatprep.mubr.bf16.mxu0 0
      %1375 = vmatmul.mubr.bf16.gmra.mrb[0].mxu0 %v858
      %v1376 = vpop.f32.mrb[0].mxu0
      %v1377 = vadd.f32 %v1200, %v1376
      %v1378 = vpop.f32.mrb[0].mxu0
      %v1379 = vpop.f32.mrb[0].mxu0
      %v1380 = vadd.f32 %v1203, %v1379
      %v1381 = vpop.f32.mrb[0].mxu0
      %1382 = vmatprep.mubr.bf16.mxu0 0
      %1383 = vmatmul.mubr.bf16.gmra.mrb[0].mxu0 %v861
      %v1384 = vpop.f32.mrb[0].mxu0
      %v1385 = vadd.f32 %v1208, %v1384
      %v1386 = vpop.f32.mrb[0].mxu0
      %v1387 = vpop.f32.mrb[0].mxu0
      %v1388 = vadd.f32 %v1211, %v1387
      %v1389 = vpop.f32.mrb[0].mxu0
      %1390 = vmatprep.mubr.bf16.mxu0 0
      %1391 = vmatmul.mubr.bf16.gmra.mrb[0].mxu0 %v864
      %v1392 = vpop.f32.mrb[0].mxu0
      %v1393 = vadd.f32 %v1216, %v1392
      %v1394 = vpop.f32.mrb[0].mxu0
      %v1395 = vpop.f32.mrb[0].mxu0
      %v1396 = vadd.f32 %v1219, %v1395
      %v1397 = vpop.f32.mrb[0].mxu0
      %1398 = vmatprep.mubr.bf16.mxu0 0
      %1399 = vmatmul.mubr.bf16.gmra.mrb[0].mxu0 %v867
      %v1400 = vpop.f32.mrb[0].mxu0
      %v1401 = vadd.f32 %v1224, %v1400
      %v1402 = vpop.f32.mrb[0].mxu0
      %v1403 = vpop.f32.mrb[0].mxu0
      %v1404 = vadd.f32 %v1227, %v1403
      %v1405 = vpop.f32.mrb[0].mxu0
      %1406 = vmatprep.mubr.bf16.mxu0 0
      %1407 = vmatmul.mubr.bf16.gmra.mrb[0].mxu0 %v870
      %v1408 = vpop.f32.mrb[0].mxu0
      %v1409 = vadd.f32 %v1232, %v1408
      %v1410 = vpop.f32.mrb[0].mxu0
      %v1411 = vpop.f32.mrb[0].mxu0
      %v1412 = vadd.f32 %v1235, %v1411
      %v1413 = vpop.f32.mrb[0].mxu0
      %1414 = vmatprep.mubr.bf16.mxu0 0
      %1415 = vmatmul.mubr.bf16.gmra.mrb[0].mxu0 %v873
      %v1416 = vpop.f32.mrb[0].mxu0
      %v1417 = vadd.f32 %v1240, %v1416
      %v1418 = vpop.f32.mrb[0].mxu0
      %v1419 = vpop.f32.mrb[0].mxu0
      %v1420 = vadd.f32 %v1243, %v1419
      %v1421 = vpop.f32.mrb[0].mxu0
      %1422 = vmatprep.mubr.bf16.mxu0 0
      %1423 = vmatmul.mubr.bf16.gmra.mrb[0].mxu0 %v876
      %v1424 = vpop.f32.mrb[0].mxu0
      %v1425 = vadd.f32 %v1248, %v1424
      %v1426 = vpop.f32.mrb[0].mxu0
      %v1427 = vpop.f32.mrb[0].mxu0
      %v1428 = vadd.f32 %v1251, %v1427
      %v1429 = vpop.f32.mrb[0].mxu0
      %1430 = vmatprep.mubr.bf16.mxu0 0
      %1431 = vmatmul.mubr.bf16.gmra.mrb[0].mxu0 %v879
      %v1432 = vpop.f32.mrb[0].mxu0
      %v1433 = vadd.f32 %v1256, %v1432
      %v1434 = vpop.f32.mrb[0].mxu0
      %v1435 = vpop.f32.mrb[0].mxu0
      %v1436 = vadd.f32 %v1259, %v1435
      %v1437 = vpop.f32.mrb[0].mxu0
      %1438 = vmatprep.mubr.bf16.mxu0 0
      %1439 = vmatmul.mubr.bf16.gmra.mrb[0].mxu0 %v882
      %v1440 = vpop.f32.mrb[0].mxu0
      %v1441 = vadd.f32 %v1264, %v1440
      %v1442 = vpop.f32.mrb[0].mxu0
      %v1443 = vpop.f32.mrb[0].mxu0
      %v1444 = vadd.f32 %v1267, %v1443
      %v1445 = vpop.f32.mrb[0].mxu0
      %1446 = vmatprep.mubr.bf16.mxu0 0
      %1447 = vmatmul.mubr.bf16.gmra.mrb[0].mxu0 %v885
      %v1448 = vpop.f32.mrb[0].mxu0
      %v1449 = vadd.f32 %v1272, %v1448
      %v1450 = vpop.f32.mrb[0].mxu0
      %v1451 = vpop.f32.mrb[0].mxu0
      %v1452 = vadd.f32 %v1275, %v1451
      %v1453 = vpop.f32.mrb[0].mxu0
      %1454 = vmatprep.mubr.bf16.mxu0 0
      %1455 = vmatmul.mubr.bf16.gmra.mrb[0].mxu0 %v888
      %v1456 = vpop.f32.mrb[0].mxu0
      %v1457 = vadd.f32 %v1280, %v1456
      %v1458 = vpop.f32.mrb[0].mxu0
      %v1459 = vpop.f32.mrb[0].mxu0
      %v1460 = vadd.f32 %v1283, %v1459
      %v1461 = vpop.f32.mrb[0].mxu0
      %1462 = vmatprep.mubr.bf16.mxu0 0
      %1463 = vmatmul.mubr.bf16.gmra.mrb[0].mxu0 %v891
      %v1464 = vpop.f32.mrb[0].mxu0
      %v1465 = vadd.f32 %v1288, %v1464
      %v1466 = vpop.f32.mrb[0].mxu0
      %v1467 = vpop.f32.mrb[0].mxu0
      %v1468 = vadd.f32 %v1291, %v1467
      %v1469 = vpop.f32.mrb[0].mxu0
      %1470 = vdwg.mxu0
      %v1471 = vadd.f32 %v923, %v1329
      %v1472 = vadd.f32 %v923, %v1332
      %v1473 = vadd.f32 %v923, %v1337
      %v1474 = vadd.f32 %v923, %v1340
      %v1475 = vadd.f32 %v923, %v1345
      %v1476 = vadd.f32 %v923, %v1348
      %v1477 = vadd.f32 %v923, %v1353
      %v1478 = vadd.f32 %v923, %v1356
      %v1479 = vadd.f32 %v923, %v1361
      %v1480 = vadd.f32 %v923, %v1364
      %v1481 = vadd.f32 %v923, %v1369
      %v1482 = vadd.f32 %v923, %v1372
      %v1483 = vadd.f32 %v923, %v1377
      %v1484 = vadd.f32 %v923, %v1380
      %v1485 = vadd.f32 %v923, %v1385
      %v1486 = vadd.f32 %v923, %v1388
      %v1487 = vadd.f32 %v923, %v1393
      %v1488 = vadd.f32 %v923, %v1396
      %v1489 = vadd.f32 %v923, %v1401
      %v1490 = vadd.f32 %v923, %v1404
      %v1491 = vadd.f32 %v923, %v1409
      %v1492 = vadd.f32 %v923, %v1412
      %v1493 = vadd.f32 %v923, %v1417
      %v1494 = vadd.f32 %v923, %v1420
      %v1495 = vadd.f32 %v923, %v1425
      %v1496 = vadd.f32 %v923, %v1428
      %v1497 = vadd.f32 %v923, %v1433
      %v1498 = vadd.f32 %v923, %v1436
      %v1499 = vadd.f32 %v923, %v1441
      %v1500 = vadd.f32 %v923, %v1444
      %v1501 = vadd.f32 %v923, %v1449
      %v1502 = vadd.f32 %v923, %v1452
      %v1503 = vadd.f32 %v923, %v1457
      %v1504 = vadd.f32 %v923, %v1460
      %v1505 = vadd.f32 %v923, %v1465
      %v1506 = vadd.f32 %v923, %v1468
      %s1507 = scalar_lea.vmem %s1, 192
      %v1508 = vld [vmem:[%s1507] sm:$0xf]
      %v1509 = vld [vmem:[%s1507 + $0x4] sm:$0xf]
      %v1510 = vld [vmem:[%s1507 + $0x8] sm:$0xf]
      %v1511 = vld [vmem:[%s1507 + $0xc] sm:$0xf]
      %v1512 = vld [vmem:[%s1507 + $0x10] sm:$0xf]
      %v1513 = vld [vmem:[%s1507 + $0x14] sm:$0xf]
      %v1514 = vld [vmem:[%s1507 + $0x18] sm:$0xf]
      %v1515 = vld [vmem:[%s1507 + $0x1c] sm:$0xf]
      %v1516 = vld [vmem:[%s1507 + $0x20] sm:$0xf]
      %v1517 = vld [vmem:[%s1507 + $0x24] sm:$0xf]
      %v1518 = vld [vmem:[%s1507 + $0x28] sm:$0xf]
      %v1519 = vld [vmem:[%s1507 + $0x2c] sm:$0xf]
      %v1520 = vld [vmem:[%s1507 + $0x30] sm:$0xf]
      %v1521 = vld [vmem:[%s1507 + $0x34] sm:$0xf]
      %v1522 = vld [vmem:[%s1507 + $0x38] sm:$0xf]
      %v1523 = vld [vmem:[%s1507 + $0x3c] sm:$0xf]
      %v1524 = vld [vmem:[%s1507 + $0x40] sm:$0xf]
      %v1525 = vld [vmem:[%s1507 + $0x44] sm:$0xf]
      %v1526 = vld [vmem:[%s1507 + $0x48] sm:$0xf]
      %v1527 = vld [vmem:[%s1507 + $0x4c] sm:$0xf]
      %v1528 = vld [vmem:[%s1507 + $0x50] sm:$0xf]
      %v1529 = vld [vmem:[%s1507 + $0x54] sm:$0xf]
      %v1530 = vld [vmem:[%s1507 + $0x58] sm:$0xf]
      %v1531 = vld [vmem:[%s1507 + $0x5c] sm:$0xf]
      %v1532 = vld [vmem:[%s1507 + $0x60] sm:$0xf]
      %v1533 = vld [vmem:[%s1507 + $0x64] sm:$0xf]
      %v1534 = vld [vmem:[%s1507 + $0x68] sm:$0xf]
      %v1535 = vld [vmem:[%s1507 + $0x6c] sm:$0xf]
      %v1536 = vld [vmem:[%s1507 + $0x70] sm:$0xf]
      %v1537 = vld [vmem:[%s1507 + $0x74] sm:$0xf]
      %v1538 = vld [vmem:[%s1507 + $0x78] sm:$0xf]
      %v1539 = vld [vmem:[%s1507 + $0x7c] sm:$0xf]
      %v1540 = vld [vmem:[%s1507 + $0x80] sm:$0xf]
      %v1541 = vld [vmem:[%s1507 + $0x84] sm:$0xf]
      %v1542 = vld [vmem:[%s1507 + $0x88] sm:$0xf]
      %v1543 = vld [vmem:[%s1507 + $0x8c] sm:$0xf]
      %v1544 = vld [vmem:[%s1507 + $0x90] sm:$0xf]
      %v1545 = vld [vmem:[%s1507 + $0x94] sm:$0xf]
      %v1546 = vld [vmem:[%s1507 + $0x98] sm:$0xf]
      %v1547 = vld [vmem:[%s1507 + $0x9c] sm:$0xf]
      %v1548 = vld [vmem:[%s1507 + $0xa0] sm:$0xf]
      %v1549 = vld [vmem:[%s1507 + $0xa4] sm:$0xf]
      %v1550 = vld [vmem:[%s1507 + $0xa8] sm:$0xf]
      %v1551 = vld [vmem:[%s1507 + $0xac] sm:$0xf]
      %v1552 = vld [vmem:[%s1507 + $0xb0] sm:$0xf]
      %v1553 = vld [vmem:[%s1507 + $0xb4] sm:$0xf]
      %v1554 = vld [vmem:[%s1507 + $0xb8] sm:$0xf]
      %v1555 = vld [vmem:[%s1507 + $0xbc] sm:$0xf]
      %v1604 = vunpack.c.l.b16 %v1508
      %v1605 = vunpack.c.l.b16 %v1509
      %v1606 = vunpack.c.l.b16 %v1510
      %v1607 = vunpack.c.l.b16 %v1511
      %v1608 = vunpack.c.l.b16 %v1512
      %v1609 = vunpack.c.l.b16 %v1513
      %v1610 = vunpack.c.l.b16 %v1514
      %v1611 = vunpack.c.l.b16 %v1515
      %v1612 = vunpack.c.l.b16 %v1516
      %v1613 = vunpack.c.l.b16 %v1517
      %v1614 = vunpack.c.l.b16 %v1518
      %v1615 = vunpack.c.l.b16 %v1519
      %v1616 = vunpack.c.l.b16 %v1520
      %v1617 = vunpack.c.l.b16 %v1521
      %v1618 = vunpack.c.l.b16 %v1522
      %v1619 = vunpack.c.l.b16 %v1523
      %v1620 = vunpack.c.l.b16 %v1524
      %v1621 = vunpack.c.l.b16 %v1525
      %v1622 = vunpack.c.l.b16 %v1526
      %v1623 = vunpack.c.l.b16 %v1527
      %v1624 = vunpack.c.l.b16 %v1528
      %v1625 = vunpack.c.l.b16 %v1529
      %v1626 = vunpack.c.l.b16 %v1530
      %v1627 = vunpack.c.l.b16 %v1531
      %v1628 = vunpack.c.l.b16 %v1532
      %v1629 = vunpack.c.l.b16 %v1533
      %v1630 = vunpack.c.l.b16 %v1534
      %v1631 = vunpack.c.l.b16 %v1535
      %v1632 = vunpack.c.l.b16 %v1536
      %v1633 = vunpack.c.l.b16 %v1537
      %v1634 = vunpack.c.l.b16 %v1538
      %v1635 = vunpack.c.l.b16 %v1539
      %v1636 = vunpack.c.l.b16 %v1540
      %v1637 = vunpack.c.l.b16 %v1541
      %v1638 = vunpack.c.l.b16 %v1542
      %v1639 = vunpack.c.l.b16 %v1543
      %v1640 = vunpack.c.l.b16 %v1544
      %v1641 = vunpack.c.l.b16 %v1545
      %v1642 = vunpack.c.l.b16 %v1546
      %v1643 = vunpack.c.l.b16 %v1547
      %v1644 = vunpack.c.l.b16 %v1548
      %v1645 = vunpack.c.l.b16 %v1549
      %v1646 = vunpack.c.l.b16 %v1550
      %v1647 = vunpack.c.l.b16 %v1551
      %v1648 = vunpack.c.l.b16 %v1552
      %v1649 = vunpack.c.l.b16 %v1553
      %v1650 = vunpack.c.l.b16 %v1554
      %v1651 = vunpack.c.l.b16 %v1555
      %v1652 = vpack.c.b16 %v1605, %v1604
      %v1653 = vpack.c.b16 %v1607, %v1606
      %v1654 = vpack.c.b16 %v1609, %v1608
      %v1655 = vpack.c.b16 %v1611, %v1610
      %v1656 = vpack.c.b16 %v1613, %v1612
      %v1657 = vpack.c.b16 %v1615, %v1614
      %v1658 = vpack.c.b16 %v1617, %v1616
      %v1659 = vpack.c.b16 %v1619, %v1618
      %v1660 = vpack.c.b16 %v1621, %v1620
      %v1661 = vpack.c.b16 %v1623, %v1622
      %v1662 = vpack.c.b16 %v1625, %v1624
      %v1663 = vpack.c.b16 %v1627, %v1626
      %v1664 = vpack.c.b16 %v1629, %v1628
      %v1665 = vpack.c.b16 %v1631, %v1630
      %v1666 = vpack.c.b16 %v1633, %v1632
      %v1667 = vpack.c.b16 %v1635, %v1634
      %v1668 = vpack.c.b16 %v1637, %v1636
      %v1669 = vpack.c.b16 %v1639, %v1638
      %v1670 = vpack.c.b16 %v1641, %v1640
      %v1671 = vpack.c.b16 %v1643, %v1642
      %v1672 = vpack.c.b16 %v1645, %v1644
      %v1673 = vpack.c.b16 %v1647, %v1646
      %v1674 = vpack.c.b16 %v1649, %v1648
      %v1675 = vpack.c.b16 %v1651, %v1650
      %1700 = vmatprep.subr.bf16.mxu0 0
      %1701 = vmatpush1.bf16.msra.mxu0 %v1652
      %1702 = vmatprep.subr.bf16.mxu0 0
      %1703 = vmatpush1.bf16.msra.mxu0 %v1653
      %1704 = vmatprep.subr.bf16.mxu0 0
      %1705 = vmatpush1.bf16.msra.mxu0 %v1654
      %1706 = vmatprep.subr.bf16.mxu0 0
      %1707 = vmatpush1.bf16.msra.mxu0 %v1655
      %1708 = vmatprep.subr.bf16.mxu0 0
      %1709 = vmatpush1.bf16.msra.mxu0 %v1656
      %1710 = vmatprep.subr.bf16.mxu0 0
      %1711 = vmatpush1.bf16.msra.mxu0 %v1657
      %1712 = vmatprep.subr.bf16.mxu0 0
      %1713 = vmatpush1.bf16.msra.mxu0 %v1658
      %1714 = vmatprep.subr.bf16.mxu0 0
      %1715 = vmatpush1.bf16.msra.mxu0 %v1659
      %1716 = vmatprep.subr.bf16.mxu0 0
      %1717 = vmatpush1.bf16.msra.mxu0 %v1660
      %1718 = vmatprep.subr.bf16.mxu0 0
      %1719 = vmatpush1.bf16.msra.mxu0 %v1661
      %1720 = vmatprep.subr.bf16.mxu0 0
      %1721 = vmatpush1.bf16.msra.mxu0 %v1662
      %1722 = vmatprep.subr.bf16.mxu0 0
      %1723 = vmatpush1.bf16.msra.mxu0 %v1663
      %1724 = vmatprep.subr.bf16.mxu0 0
      %1725 = vmatpush1.bf16.msra.mxu0 %v1664
      %1726 = vmatprep.subr.bf16.mxu0 0
      %1727 = vmatpush1.bf16.msra.mxu0 %v1665
      %1728 = vmatprep.subr.bf16.mxu0 0
      %1729 = vmatpush1.bf16.msra.mxu0 %v1666
      %1730 = vmatprep.subr.bf16.mxu0 0
      %1731 = vmatpush1.bf16.msra.mxu0 %v1667
      %1732 = vmatprep.mubr.bf16.mxu0 %v560
      %1733 = vmatmul.mubr.bf16.gmra.mrb[0].mxu0 %v498
      %v1734 = vpop.f32.mrb[0].mxu0
      %v1735 = vadd.f32 0.0, %v1734
      %v1736 = vpop.f32.mrb[0].mxu0
      %v1737 = vpop.f32.mrb[0].mxu0
      %v1738 = vadd.f32 0.0, %v1737
      %v1739 = vpop.f32.mrb[0].mxu0
      %1740 = vmatprep.mubr.bf16.mxu0 %v572
      %1741 = vmatmul.mubr.bf16.gmra.mrb[0].mxu0 %v500
      %v1742 = vpop.f32.mrb[0].mxu0
      %v1743 = vadd.f32 0.0, %v1742
      %v1744 = vpop.f32.mrb[0].mxu0
      %v1745 = vpop.f32.mrb[0].mxu0
      %v1746 = vadd.f32 0.0, %v1745
      %v1747 = vpop.f32.mrb[0].mxu0
      %1748 = vmatprep.mubr.bf16.mxu0 %v584
      %1749 = vmatmul.mubr.bf16.gmra.mrb[0].mxu0 %v502
      %v1750 = vpop.f32.mrb[0].mxu0
      %v1751 = vadd.f32 0.0, %v1750
      %v1752 = vpop.f32.mrb[0].mxu0
      %v1753 = vpop.f32.mrb[0].mxu0
      %v1754 = vadd.f32 0.0, %v1753
      %v1755 = vpop.f32.mrb[0].mxu0
      %1756 = vmatprep.mubr.bf16.mxu0 %v596
      %1757 = vmatmul.mubr.bf16.gmra.mrb[0].mxu0 %v504
      %v1758 = vpop.f32.mrb[0].mxu0
      %v1759 = vadd.f32 0.0, %v1758
      %v1760 = vpop.f32.mrb[0].mxu0
      %v1761 = vpop.f32.mrb[0].mxu0
      %v1762 = vadd.f32 0.0, %v1761
      %v1763 = vpop.f32.mrb[0].mxu0
      %1764 = vmatprep.mubr.bf16.mxu0 %v608
      %1765 = vmatmul.mubr.bf16.gmra.mrb[0].mxu0 %v506
      %v1766 = vpop.f32.mrb[0].mxu0
      %v1767 = vadd.f32 0.0, %v1766
      %v1768 = vpop.f32.mrb[0].mxu0
      %v1769 = vpop.f32.mrb[0].mxu0
      %v1770 = vadd.f32 0.0, %v1769
      %v1771 = vpop.f32.mrb[0].mxu0
      %1772 = vmatprep.mubr.bf16.mxu0 %v620
      %1773 = vmatmul.mubr.bf16.gmra.mrb[0].mxu0 %v508
      %v1774 = vpop.f32.mrb[0].mxu0
      %v1775 = vadd.f32 0.0, %v1774
      %v1776 = vpop.f32.mrb[0].mxu0
      %v1777 = vpop.f32.mrb[0].mxu0
      %v1778 = vadd.f32 0.0, %v1777
      %v1779 = vpop.f32.mrb[0].mxu0
      %1780 = vmatprep.mubr.bf16.mxu0 %v632
      %1781 = vmatmul.mubr.bf16.gmra.mrb[0].mxu0 %v510
      %v1782 = vpop.f32.mrb[0].mxu0
      %v1783 = vadd.f32 0.0, %v1782
      %v1784 = vpop.f32.mrb[0].mxu0
      %v1785 = vpop.f32.mrb[0].mxu0
      %v1786 = vadd.f32 0.0, %v1785
      %v1787 = vpop.f32.mrb[0].mxu0
      %1788 = vmatprep.mubr.bf16.mxu0 %v644
      %1789 = vmatmul.mubr.bf16.gmra.mrb[0].mxu0 %v512
      %v1790 = vpop.f32.mrb[0].mxu0
      %v1791 = vadd.f32 0.0, %v1790
      %v1792 = vpop.f32.mrb[0].mxu0
      %v1793 = vpop.f32.mrb[0].mxu0
      %v1794 = vadd.f32 0.0, %v1793
      %v1795 = vpop.f32.mrb[0].mxu0
      %1796 = vmatprep.mubr.bf16.mxu0 %v656
      %1797 = vmatmul.mubr.bf16.gmra.mrb[0].mxu0 %v514
      %v1798 = vpop.f32.mrb[0].mxu0
      %v1799 = vadd.f32 0.0, %v1798
      %v1800 = vpop.f32.mrb[0].mxu0
      %v1801 = vpop.f32.mrb[0].mxu0
      %v1802 = vadd.f32 0.0, %v1801
      %v1803 = vpop.f32.mrb[0].mxu0
      %1804 = vmatprep.mubr.bf16.mxu0 %v668
      %1805 = vmatmul.mubr.bf16.gmra.mrb[0].mxu0 %v516
      %v1806 = vpop.f32.mrb[0].mxu0
      %v1807 = vadd.f32 0.0, %v1806
      %v1808 = vpop.f32.mrb[0].mxu0
      %v1809 = vpop.f32.mrb[0].mxu0
      %v1810 = vadd.f32 0.0, %v1809
      %v1811 = vpop.f32.mrb[0].mxu0
      %1812 = vmatprep.mubr.bf16.mxu0 %v680
      %1813 = vmatmul.mubr.bf16.gmra.mrb[0].mxu0 %v518
      %v1814 = vpop.f32.mrb[0].mxu0
      %v1815 = vadd.f32 0.0, %v1814
      %v1816 = vpop.f32.mrb[0].mxu0
      %v1817 = vpop.f32.mrb[0].mxu0
      %v1818 = vadd.f32 0.0, %v1817
      %v1819 = vpop.f32.mrb[0].mxu0
      %1820 = vmatprep.mubr.bf16.mxu0 %v692
      %1821 = vmatmul.mubr.bf16.gmra.mrb[0].mxu0 %v520
      %v1822 = vpop.f32.mrb[0].mxu0
      %v1823 = vadd.f32 0.0, %v1822
      %v1824 = vpop.f32.mrb[0].mxu0
      %v1825 = vpop.f32.mrb[0].mxu0
      %v1826 = vadd.f32 0.0, %v1825
      %v1827 = vpop.f32.mrb[0].mxu0
      %1828 = vmatprep.mubr.bf16.mxu0 %v704
      %1829 = vmatmul.mubr.bf16.gmra.mrb[0].mxu0 %v522
      %v1830 = vpop.f32.mrb[0].mxu0
      %v1831 = vadd.f32 0.0, %v1830
      %v1832 = vpop.f32.mrb[0].mxu0
      %v1833 = vpop.f32.mrb[0].mxu0
      %v1834 = vadd.f32 0.0, %v1833
      %v1835 = vpop.f32.mrb[0].mxu0
      %1836 = vmatprep.mubr.bf16.mxu0 %v716
      %1837 = vmatmul.mubr.bf16.gmra.mrb[0].mxu0 %v524
      %v1838 = vpop.f32.mrb[0].mxu0
      %v1839 = vadd.f32 0.0, %v1838
      %v1840 = vpop.f32.mrb[0].mxu0
      %v1841 = vpop.f32.mrb[0].mxu0
      %v1842 = vadd.f32 0.0, %v1841
      %v1843 = vpop.f32.mrb[0].mxu0
      %1844 = vmatprep.mubr.bf16.mxu0 %v728
      %1845 = vmatmul.mubr.bf16.gmra.mrb[0].mxu0 %v526
      %v1846 = vpop.f32.mrb[0].mxu0
      %v1847 = vadd.f32 0.0, %v1846
      %v1848 = vpop.f32.mrb[0].mxu0
      %v1849 = vpop.f32.mrb[0].mxu0
      %v1850 = vadd.f32 0.0, %v1849
      %v1851 = vpop.f32.mrb[0].mxu0
      %1852 = vmatprep.mubr.bf16.mxu0 %v740
      %1853 = vmatmul.mubr.bf16.gmra.mrb[0].mxu0 %v528
      %v1854 = vpop.f32.mrb[0].mxu0
      %v1855 = vadd.f32 0.0, %v1854
      %v1856 = vpop.f32.mrb[0].mxu0
      %v1857 = vpop.f32.mrb[0].mxu0
      %v1858 = vadd.f32 0.0, %v1857
      %v1859 = vpop.f32.mrb[0].mxu0
      %1860 = vmatprep.mubr.bf16.mxu0 %v752
      %1861 = vmatmul.mubr.bf16.gmra.mrb[0].mxu0 %v530
      %v1862 = vpop.f32.mrb[0].mxu0
      %v1863 = vadd.f32 0.0, %v1862
      %v1864 = vpop.f32.mrb[0].mxu0
      %v1865 = vpop.f32.mrb[0].mxu0
      %v1866 = vadd.f32 0.0, %v1865
      %v1867 = vpop.f32.mrb[0].mxu0
      %1868 = vmatprep.mubr.bf16.mxu0 %v764
      %1869 = vmatmul.mubr.bf16.gmra.mrb[0].mxu0 %v532
      %v1870 = vpop.f32.mrb[0].mxu0
      %v1871 = vadd.f32 0.0, %v1870
      %v1872 = vpop.f32.mrb[0].mxu0
      %v1873 = vpop.f32.mrb[0].mxu0
      %v1874 = vadd.f32 0.0, %v1873
      %v1875 = vpop.f32.mrb[0].mxu0
      %1876 = vdwg.mxu0
      %1877 = vmatprep.subr.bf16.mxu0 0
      %1878 = vmatpush1.bf16.msra.mxu0 %v1668
      %1879 = vmatprep.subr.bf16.mxu0 0
      %1880 = vmatpush1.bf16.msra.mxu0 %v1669
      %1881 = vmatprep.subr.bf16.mxu0 0
      %1882 = vmatpush1.bf16.msra.mxu0 %v1670
      %1883 = vmatprep.subr.bf16.mxu0 0
      %1884 = vmatpush1.bf16.msra.mxu0 %v1671
      %1885 = vmatprep.subr.bf16.mxu0 0
      %1886 = vmatpush1.bf16.msra.mxu0 %v1672
      %1887 = vmatprep.subr.bf16.mxu0 0
      %1888 = vmatpush1.bf16.msra.mxu0 %v1673
      %1889 = vmatprep.subr.bf16.mxu0 0
      %1890 = vmatpush1.bf16.msra.mxu0 %v1674
      %1891 = vmatprep.subr.bf16.mxu0 0
      %1892 = vmatpush1.bf16.msra.mxu0 %v1675
      %1893 = vmatprep.subr.bf16.mxu0 0
      %1894 = vmatpush1.bf16.msra.mxu0 0
      %1895 = vmatprep.subr.bf16.mxu0 0
      %1896 = vmatpush1.bf16.msra.mxu0 0
      %1897 = vmatprep.subr.bf16.mxu0 0
      %1898 = vmatpush1.bf16.msra.mxu0 0
      %1899 = vmatprep.subr.bf16.mxu0 0
      %1900 = vmatpush1.bf16.msra.mxu0 0
      %1901 = vmatprep.subr.bf16.mxu0 0
      %1902 = vmatpush1.bf16.msra.mxu0 0
      %1903 = vmatprep.subr.bf16.mxu0 0
      %1904 = vmatpush1.bf16.msra.mxu0 0
      %1905 = vmatprep.subr.bf16.mxu0 0
      %1906 = vmatpush1.bf16.msra.mxu0 0
      %1907 = vmatprep.subr.bf16.mxu0 0
      %1908 = vmatpush1.bf16.msra.mxu0 0
      %1909 = vmatprep.mubr.bf16.mxu0 0
      %1910 = vmatmul.mubr.bf16.gmra.mrb[0].mxu0 %v843
      %v1911 = vpop.f32.mrb[0].mxu0
      %v1912 = vadd.f32 %v1735, %v1911
      %v1913 = vpop.f32.mrb[0].mxu0
      %v1914 = vpop.f32.mrb[0].mxu0
      %v1915 = vadd.f32 %v1738, %v1914
      %v1916 = vpop.f32.mrb[0].mxu0
      %1917 = vmatprep.mubr.bf16.mxu0 0
      %1918 = vmatmul.mubr.bf16.gmra.mrb[0].mxu0 %v846
      %v1919 = vpop.f32.mrb[0].mxu0
      %v1920 = vadd.f32 %v1743, %v1919
      %v1921 = vpop.f32.mrb[0].mxu0
      %v1922 = vpop.f32.mrb[0].mxu0
      %v1923 = vadd.f32 %v1746, %v1922
      %v1924 = vpop.f32.mrb[0].mxu0
      %1925 = vmatprep.mubr.bf16.mxu0 0
      %1926 = vmatmul.mubr.bf16.gmra.mrb[0].mxu0 %v849
      %v1927 = vpop.f32.mrb[0].mxu0
      %v1928 = vadd.f32 %v1751, %v1927
      %v1929 = vpop.f32.mrb[0].mxu0
      %v1930 = vpop.f32.mrb[0].mxu0
      %v1931 = vadd.f32 %v1754, %v1930
      %v1932 = vpop.f32.mrb[0].mxu0
      %1933 = vmatprep.mubr.bf16.mxu0 0
      %1934 = vmatmul.mubr.bf16.gmra.mrb[0].mxu0 %v852
      %v1935 = vpop.f32.mrb[0].mxu0
      %v1936 = vadd.f32 %v1759, %v1935
      %v1937 = vpop.f32.mrb[0].mxu0
      %v1938 = vpop.f32.mrb[0].mxu0
      %v1939 = vadd.f32 %v1762, %v1938
      %v1940 = vpop.f32.mrb[0].mxu0
      %1941 = vmatprep.mubr.bf16.mxu0 0
      %1942 = vmatmul.mubr.bf16.gmra.mrb[0].mxu0 %v855
      %v1943 = vpop.f32.mrb[0].mxu0
      %v1944 = vadd.f32 %v1767, %v1943
      %v1945 = vpop.f32.mrb[0].mxu0
      %v1946 = vpop.f32.mrb[0].mxu0
      %v1947 = vadd.f32 %v1770, %v1946
      %v1948 = vpop.f32.mrb[0].mxu0
      %1949 = vmatprep.mubr.bf16.mxu0 0
      %1950 = vmatmul.mubr.bf16.gmra.mrb[0].mxu0 %v858
      %v1951 = vpop.f32.mrb[0].mxu0
      %v1952 = vadd.f32 %v1775, %v1951
      %v1953 = vpop.f32.mrb[0].mxu0
      %v1954 = vpop.f32.mrb[0].mxu0
      %v1955 = vadd.f32 %v1778, %v1954
      %v1956 = vpop.f32.mrb[0].mxu0
      %1957 = vmatprep.mubr.bf16.mxu0 0
      %1958 = vmatmul.mubr.bf16.gmra.mrb[0].mxu0 %v861
      %v1959 = vpop.f32.mrb[0].mxu0
      %v1960 = vadd.f32 %v1783, %v1959
      %v1961 = vpop.f32.mrb[0].mxu0
      %v1962 = vpop.f32.mrb[0].mxu0
      %v1963 = vadd.f32 %v1786, %v1962
      %v1964 = vpop.f32.mrb[0].mxu0
      %1965 = vmatprep.mubr.bf16.mxu0 0
      %1966 = vmatmul.mubr.bf16.gmra.mrb[0].mxu0 %v864
      %v1967 = vpop.f32.mrb[0].mxu0
      %v1968 = vadd.f32 %v1791, %v1967
      %v1969 = vpop.f32.mrb[0].mxu0
      %v1970 = vpop.f32.mrb[0].mxu0
      %v1971 = vadd.f32 %v1794, %v1970
      %v1972 = vpop.f32.mrb[0].mxu0
      %1973 = vmatprep.mubr.bf16.mxu0 0
      %1974 = vmatmul.mubr.bf16.gmra.mrb[0].mxu0 %v867
      %v1975 = vpop.f32.mrb[0].mxu0
      %v1976 = vadd.f32 %v1799, %v1975
      %v1977 = vpop.f32.mrb[0].mxu0
      %v1978 = vpop.f32.mrb[0].mxu0
      %v1979 = vadd.f32 %v1802, %v1978
      %v1980 = vpop.f32.mrb[0].mxu0
      %1981 = vmatprep.mubr.bf16.mxu0 0
      %1982 = vmatmul.mubr.bf16.gmra.mrb[0].mxu0 %v870
      %v1983 = vpop.f32.mrb[0].mxu0
      %v1984 = vadd.f32 %v1807, %v1983
      %v1985 = vpop.f32.mrb[0].mxu0
      %v1986 = vpop.f32.mrb[0].mxu0
      %v1987 = vadd.f32 %v1810, %v1986
      %v1988 = vpop.f32.mrb[0].mxu0
      %1989 = vmatprep.mubr.bf16.mxu0 0
      %1990 = vmatmul.mubr.bf16.gmra.mrb[0].mxu0 %v873
      %v1991 = vpop.f32.mrb[0].mxu0
      %v1992 = vadd.f32 %v1815, %v1991
      %v1993 = vpop.f32.mrb[0].mxu0
      %v1994 = vpop.f32.mrb[0].mxu0
      %v1995 = vadd.f32 %v1818, %v1994
      %v1996 = vpop.f32.mrb[0].mxu0
      %1997 = vmatprep.mubr.bf16.mxu0 0
      %1998 = vmatmul.mubr.bf16.gmra.mrb[0].mxu0 %v876
      %v1999 = vpop.f32.mrb[0].mxu0
      %v2000 = vadd.f32 %v1823, %v1999
      %v2001 = vpop.f32.mrb[0].mxu0
      %v2002 = vpop.f32.mrb[0].mxu0
      %v2003 = vadd.f32 %v1826, %v2002
      %v2004 = vpop.f32.mrb[0].mxu0
      %2005 = vmatprep.mubr.bf16.mxu0 0
      %2006 = vmatmul.mubr.bf16.gmra.mrb[0].mxu0 %v879
      %v2007 = vpop.f32.mrb[0].mxu0
      %v2008 = vadd.f32 %v1831, %v2007
      %v2009 = vpop.f32.mrb[0].mxu0
      %v2010 = vpop.f32.mrb[0].mxu0
      %v2011 = vadd.f32 %v1834, %v2010
      %v2012 = vpop.f32.mrb[0].mxu0
      %2013 = vmatprep.mubr.bf16.mxu0 0
      %2014 = vmatmul.mubr.bf16.gmra.mrb[0].mxu0 %v882
      %v2015 = vpop.f32.mrb[0].mxu0
      %v2016 = vadd.f32 %v1839, %v2015
      %v2017 = vpop.f32.mrb[0].mxu0
      %v2018 = vpop.f32.mrb[0].mxu0
      %v2019 = vadd.f32 %v1842, %v2018
      %v2020 = vpop.f32.mrb[0].mxu0
      %2021 = vmatprep.mubr.bf16.mxu0 0
      %2022 = vmatmul.mubr.bf16.gmra.mrb[0].mxu0 %v885
      %v2023 = vpop.f32.mrb[0].mxu0
      %v2024 = vadd.f32 %v1847, %v2023
      %v2025 = vpop.f32.mrb[0].mxu0
      %v2026 = vpop.f32.mrb[0].mxu0
      %v2027 = vadd.f32 %v1850, %v2026
      %v2028 = vpop.f32.mrb[0].mxu0
      %2029 = vmatprep.mubr.bf16.mxu0 0
      %2030 = vmatmul.mubr.bf16.gmra.mrb[0].mxu0 %v888
      %v2031 = vpop.f32.mrb[0].mxu0
      %v2032 = vadd.f32 %v1855, %v2031
      %v2033 = vpop.f32.mrb[0].mxu0
      %v2034 = vpop.f32.mrb[0].mxu0
      %v2035 = vadd.f32 %v1858, %v2034
      %v2036 = vpop.f32.mrb[0].mxu0
      %2037 = vmatprep.mubr.bf16.mxu0 0
      %2038 = vmatmul.mubr.bf16.gmra.mrb[0].mxu0 %v891
      %v2039 = vpop.f32.mrb[0].mxu0
      %v2040 = vadd.f32 %v1863, %v2039
      %v2041 = vpop.f32.mrb[0].mxu0
      %v2042 = vpop.f32.mrb[0].mxu0
      %v2043 = vadd.f32 %v1866, %v2042
      %v2044 = vpop.f32.mrb[0].mxu0
      %2045 = vmatprep.mubr.bf16.mxu0 0
      %2046 = vmatmul.mubr.bf16.gmra.mrb[0].mxu0 %v894
      %v2047 = vpop.f32.mrb[0].mxu0
      %v2048 = vadd.f32 %v1871, %v2047
      %v2049 = vpop.f32.mrb[0].mxu0
      %v2050 = vpop.f32.mrb[0].mxu0
      %v2051 = vadd.f32 %v1874, %v2050
      %v2052 = vpop.f32.mrb[0].mxu0
      %2053 = vdwg.mxu0
      %v2054 = vadd.f32 %v1471, %v1912
      %v2055 = vadd.f32 %v1472, %v1915
      %v2056 = vadd.f32 %v1473, %v1920
      %v2057 = vadd.f32 %v1474, %v1923
      %v2058 = vadd.f32 %v1475, %v1928
      %v2059 = vadd.f32 %v1476, %v1931
      %v2060 = vadd.f32 %v1477, %v1936
      %v2061 = vadd.f32 %v1478, %v1939
      %v2062 = vadd.f32 %v1479, %v1944
      %v2063 = vadd.f32 %v1480, %v1947
      %v2064 = vadd.f32 %v1481, %v1952
      %v2065 = vadd.f32 %v1482, %v1955
      %v2066 = vadd.f32 %v1483, %v1960
      %v2067 = vadd.f32 %v1484, %v1963
      %v2068 = vadd.f32 %v1485, %v1968
      %v2069 = vadd.f32 %v1486, %v1971
      %v2070 = vadd.f32 %v1487, %v1976
      %v2071 = vadd.f32 %v1488, %v1979
      %v2072 = vadd.f32 %v1489, %v1984
      %v2073 = vadd.f32 %v1490, %v1987
      %v2074 = vadd.f32 %v1491, %v1992
      %v2075 = vadd.f32 %v1492, %v1995
      %v2076 = vadd.f32 %v1493, %v2000
      %v2077 = vadd.f32 %v1494, %v2003
      %v2078 = vadd.f32 %v1495, %v2008
      %v2079 = vadd.f32 %v1496, %v2011
      %v2080 = vadd.f32 %v1497, %v2016
      %v2081 = vadd.f32 %v1498, %v2019
      %v2082 = vadd.f32 %v1499, %v2024
      %v2083 = vadd.f32 %v1500, %v2027
      %v2084 = vadd.f32 %v1501, %v2032
      %v2085 = vadd.f32 %v1502, %v2035
      %v2086 = vadd.f32 %v1503, %v2040
      %v2087 = vadd.f32 %v1504, %v2043
      %v2088 = vadd.f32 %v1505, %v2048
      %v2089 = vadd.f32 %v1506, %v2051
      %s2090 = scalar_lea.vmem %s1, 384
      %v2091 = vld [vmem:[%s2090] sm:$0xf]
      %v2092 = vld [vmem:[%s2090 + $0x4] sm:$0xf]
      %v2093 = vld [vmem:[%s2090 + $0x8] sm:$0xf]
      %v2094 = vld [vmem:[%s2090 + $0xc] sm:$0xf]
      %v2095 = vld [vmem:[%s2090 + $0x10] sm:$0xf]
      %v2096 = vld [vmem:[%s2090 + $0x14] sm:$0xf]
      %v2097 = vld [vmem:[%s2090 + $0x18] sm:$0xf]
      %v2098 = vld [vmem:[%s2090 + $0x1c] sm:$0xf]
      %v2099 = vld [vmem:[%s2090 + $0x20] sm:$0xf]
      %v2100 = vld [vmem:[%s2090 + $0x24] sm:$0xf]
      %v2101 = vld [vmem:[%s2090 + $0x28] sm:$0xf]
      %v2102 = vld [vmem:[%s2090 + $0x2c] sm:$0xf]
      %v2103 = vld [vmem:[%s2090 + $0x30] sm:$0xf]
      %v2104 = vld [vmem:[%s2090 + $0x34] sm:$0xf]
      %v2105 = vld [vmem:[%s2090 + $0x38] sm:$0xf]
      %v2106 = vld [vmem:[%s2090 + $0x3c] sm:$0xf]
      %v2107 = vld [vmem:[%s2090 + $0x40] sm:$0xf]
      %v2108 = vld [vmem:[%s2090 + $0x44] sm:$0xf]
      %v2109 = vld [vmem:[%s2090 + $0x48] sm:$0xf]
      %v2110 = vld [vmem:[%s2090 + $0x4c] sm:$0xf]
      %v2111 = vld [vmem:[%s2090 + $0x50] sm:$0xf]
      %v2112 = vld [vmem:[%s2090 + $0x54] sm:$0xf]
      %v2113 = vld [vmem:[%s2090 + $0x58] sm:$0xf]
      %v2114 = vld [vmem:[%s2090 + $0x5c] sm:$0xf]
      %v2115 = vld [vmem:[%s2090 + $0x60] sm:$0xf]
      %v2116 = vld [vmem:[%s2090 + $0x64] sm:$0xf]
      %v2117 = vld [vmem:[%s2090 + $0x68] sm:$0xf]
      %v2118 = vld [vmem:[%s2090 + $0x6c] sm:$0xf]
      %v2119 = vld [vmem:[%s2090 + $0x70] sm:$0xf]
      %v2120 = vld [vmem:[%s2090 + $0x74] sm:$0xf]
      %v2121 = vld [vmem:[%s2090 + $0x78] sm:$0xf]
      %v2122 = vld [vmem:[%s2090 + $0x7c] sm:$0xf]
      %v2123 = vld [vmem:[%s2090 + $0x80] sm:$0xf]
      %v2124 = vld [vmem:[%s2090 + $0x84] sm:$0xf]
      %v2125 = vld [vmem:[%s2090 + $0x88] sm:$0xf]
      %v2126 = vld [vmem:[%s2090 + $0x8c] sm:$0xf]
      %v2127 = vld [vmem:[%s2090 + $0x90] sm:$0xf]
      %v2128 = vld [vmem:[%s2090 + $0x94] sm:$0xf]
      %v2129 = vld [vmem:[%s2090 + $0x98] sm:$0xf]
      %v2130 = vld [vmem:[%s2090 + $0x9c] sm:$0xf]
      %v2131 = vld [vmem:[%s2090 + $0xa0] sm:$0xf]
      %v2132 = vld [vmem:[%s2090 + $0xa4] sm:$0xf]
      %v2133 = vld [vmem:[%s2090 + $0xa8] sm:$0xf]
      %v2134 = vld [vmem:[%s2090 + $0xac] sm:$0xf]
      %v2135 = vld [vmem:[%s2090 + $0xb0] sm:$0xf]
      %v2136 = vld [vmem:[%s2090 + $0xb4] sm:$0xf]
      %v2137 = vld [vmem:[%s2090 + $0xb8] sm:$0xf]
      %v2138 = vld [vmem:[%s2090 + $0xbc] sm:$0xf]
      %v2187 = vunpack.c.l.b16 %v2091
      %v2188 = vunpack.c.l.b16 %v2092
      %v2189 = vunpack.c.l.b16 %v2093
      %v2190 = vunpack.c.l.b16 %v2094
      %v2191 = vunpack.c.l.b16 %v2095
      %v2192 = vunpack.c.l.b16 %v2096
      %v2193 = vunpack.c.l.b16 %v2097
      %v2194 = vunpack.c.l.b16 %v2098
      %v2195 = vunpack.c.l.b16 %v2099
      %v2196 = vunpack.c.l.b16 %v2100
      %v2197 = vunpack.c.l.b16 %v2101
      %v2198 = vunpack.c.l.b16 %v2102
      %v2199 = vunpack.c.l.b16 %v2103
      %v2200 = vunpack.c.l.b16 %v2104
      %v2201 = vunpack.c.l.b16 %v2105
      %v2202 = vunpack.c.l.b16 %v2106
      %v2203 = vunpack.c.l.b16 %v2107
      %v2204 = vunpack.c.l.b16 %v2108
      %v2205 = vunpack.c.l.b16 %v2109
      %v2206 = vunpack.c.l.b16 %v2110
      %v2207 = vunpack.c.l.b16 %v2111
      %v2208 = vunpack.c.l.b16 %v2112
      %v2209 = vunpack.c.l.b16 %v2113
      %v2210 = vunpack.c.l.b16 %v2114
      %v2211 = vunpack.c.l.b16 %v2115
      %v2212 = vunpack.c.l.b16 %v2116
      %v2213 = vunpack.c.l.b16 %v2117
      %v2214 = vunpack.c.l.b16 %v2118
      %v2215 = vunpack.c.l.b16 %v2119
      %v2216 = vunpack.c.l.b16 %v2120
      %v2217 = vunpack.c.l.b16 %v2121
      %v2218 = vunpack.c.l.b16 %v2122
      %v2219 = vunpack.c.l.b16 %v2123
      %v2220 = vunpack.c.l.b16 %v2124
      %v2221 = vunpack.c.l.b16 %v2125
      %v2222 = vunpack.c.l.b16 %v2126
      %v2223 = vunpack.c.l.b16 %v2127
      %v2224 = vunpack.c.l.b16 %v2128
      %v2225 = vunpack.c.l.b16 %v2129
      %v2226 = vunpack.c.l.b16 %v2130
      %v2227 = vunpack.c.l.b16 %v2131
      %v2228 = vunpack.c.l.b16 %v2132
      %v2229 = vunpack.c.l.b16 %v2133
      %v2230 = vunpack.c.l.b16 %v2134
      %v2231 = vunpack.c.l.b16 %v2135
      %v2232 = vunpack.c.l.b16 %v2136
      %v2233 = vunpack.c.l.b16 %v2137
      %v2234 = vunpack.c.l.b16 %v2138
      %v2235 = vpack.c.b16 %v2188, %v2187
      %v2236 = vpack.c.b16 %v2190, %v2189
      %v2237 = vpack.c.b16 %v2192, %v2191
      %v2238 = vpack.c.b16 %v2194, %v2193
      %v2239 = vpack.c.b16 %v2196, %v2195
      %v2240 = vpack.c.b16 %v2198, %v2197
      %v2241 = vpack.c.b16 %v2200, %v2199
      %v2242 = vpack.c.b16 %v2202, %v2201
      %v2243 = vpack.c.b16 %v2204, %v2203
      %v2244 = vpack.c.b16 %v2206, %v2205
      %v2245 = vpack.c.b16 %v2208, %v2207
      %v2246 = vpack.c.b16 %v2210, %v2209
      %v2247 = vpack.c.b16 %v2212, %v2211
      %v2248 = vpack.c.b16 %v2214, %v2213
      %v2249 = vpack.c.b16 %v2216, %v2215
      %v2250 = vpack.c.b16 %v2218, %v2217
      %v2251 = vpack.c.b16 %v2220, %v2219
      %v2252 = vpack.c.b16 %v2222, %v2221
      %v2253 = vpack.c.b16 %v2224, %v2223
      %v2254 = vpack.c.b16 %v2226, %v2225
      %v2255 = vpack.c.b16 %v2228, %v2227
      %v2256 = vpack.c.b16 %v2230, %v2229
      %v2257 = vpack.c.b16 %v2232, %v2231
      %v2258 = vpack.c.b16 %v2234, %v2233
      %2283 = vmatprep.subr.bf16.mxu0 0
      %2284 = vmatpush1.bf16.msra.mxu0 %v2235
      %2285 = vmatprep.subr.bf16.mxu0 0
      %2286 = vmatpush1.bf16.msra.mxu0 %v2236
      %2287 = vmatprep.subr.bf16.mxu0 0
      %2288 = vmatpush1.bf16.msra.mxu0 %v2237
      %2289 = vmatprep.subr.bf16.mxu0 0
      %2290 = vmatpush1.bf16.msra.mxu0 %v2238
      %2291 = vmatprep.subr.bf16.mxu0 0
      %2292 = vmatpush1.bf16.msra.mxu0 %v2239
      %2293 = vmatprep.subr.bf16.mxu0 0
      %2294 = vmatpush1.bf16.msra.mxu0 %v2240
      %2295 = vmatprep.subr.bf16.mxu0 0
      %2296 = vmatpush1.bf16.msra.mxu0 %v2241
      %2297 = vmatprep.subr.bf16.mxu0 0
      %2298 = vmatpush1.bf16.msra.mxu0 %v2242
      %2299 = vmatprep.subr.bf16.mxu0 0
      %2300 = vmatpush1.bf16.msra.mxu0 %v2243
      %2301 = vmatprep.subr.bf16.mxu0 0
      %2302 = vmatpush1.bf16.msra.mxu0 %v2244
      %2303 = vmatprep.subr.bf16.mxu0 0
      %2304 = vmatpush1.bf16.msra.mxu0 %v2245
      %2305 = vmatprep.subr.bf16.mxu0 0
      %2306 = vmatpush1.bf16.msra.mxu0 %v2246
      %2307 = vmatprep.subr.bf16.mxu0 0
      %2308 = vmatpush1.bf16.msra.mxu0 %v2247
      %2309 = vmatprep.subr.bf16.mxu0 0
      %2310 = vmatpush1.bf16.msra.mxu0 %v2248
      %2311 = vmatprep.subr.bf16.mxu0 0
      %2312 = vmatpush1.bf16.msra.mxu0 %v2249
      %2313 = vmatprep.subr.bf16.mxu0 0
      %2314 = vmatpush1.bf16.msra.mxu0 %v2250
      %2315 = vmatprep.mubr.bf16.mxu0 %v572
      %2316 = vmatmul.mubr.bf16.gmra.mrb[0].mxu0 %v500
      %v2317 = vpop.f32.mrb[0].mxu0
      %v2318 = vadd.f32 0.0, %v2317
      %v2319 = vpop.f32.mrb[0].mxu0
      %v2320 = vpop.f32.mrb[0].mxu0
      %v2321 = vadd.f32 0.0, %v2320
      %v2322 = vpop.f32.mrb[0].mxu0
      %2323 = vmatprep.mubr.bf16.mxu0 %v584
      %2324 = vmatmul.mubr.bf16.gmra.mrb[0].mxu0 %v502
      %v2325 = vpop.f32.mrb[0].mxu0
      %v2326 = vadd.f32 0.0, %v2325
      %v2327 = vpop.f32.mrb[0].mxu0
      %v2328 = vpop.f32.mrb[0].mxu0
      %v2329 = vadd.f32 0.0, %v2328
      %v2330 = vpop.f32.mrb[0].mxu0
      %2331 = vmatprep.mubr.bf16.mxu0 %v596
      %2332 = vmatmul.mubr.bf16.gmra.mrb[0].mxu0 %v504
      %v2333 = vpop.f32.mrb[0].mxu0
      %v2334 = vadd.f32 0.0, %v2333
      %v2335 = vpop.f32.mrb[0].mxu0
      %v2336 = vpop.f32.mrb[0].mxu0
      %v2337 = vadd.f32 0.0, %v2336
      %v2338 = vpop.f32.mrb[0].mxu0
      %2339 = vmatprep.mubr.bf16.mxu0 %v608
      %2340 = vmatmul.mubr.bf16.gmra.mrb[0].mxu0 %v506
      %v2341 = vpop.f32.mrb[0].mxu0
      %v2342 = vadd.f32 0.0, %v2341
      %v2343 = vpop.f32.mrb[0].mxu0
      %v2344 = vpop.f32.mrb[0].mxu0
      %v2345 = vadd.f32 0.0, %v2344
      %v2346 = vpop.f32.mrb[0].mxu0
      %2347 = vmatprep.mubr.bf16.mxu0 %v620
      %2348 = vmatmul.mubr.bf16.gmra.mrb[0].mxu0 %v508
      %v2349 = vpop.f32.mrb[0].mxu0
      %v2350 = vadd.f32 0.0, %v2349
      %v2351 = vpop.f32.mrb[0].mxu0
      %v2352 = vpop.f32.mrb[0].mxu0
      %v2353 = vadd.f32 0.0, %v2352
      %v2354 = vpop.f32.mrb[0].mxu0
      %2355 = vmatprep.mubr.bf16.mxu0 %v632
      %2356 = vmatmul.mubr.bf16.gmra.mrb[0].mxu0 %v510
      %v2357 = vpop.f32.mrb[0].mxu0
      %v2358 = vadd.f32 0.0, %v2357
      %v2359 = vpop.f32.mrb[0].mxu0
      %v2360 = vpop.f32.mrb[0].mxu0
      %v2361 = vadd.f32 0.0, %v2360
      %v2362 = vpop.f32.mrb[0].mxu0
      %2363 = vmatprep.mubr.bf16.mxu0 %v644
      %2364 = vmatmul.mubr.bf16.gmra.mrb[0].mxu0 %v512
      %v2365 = vpop.f32.mrb[0].mxu0
      %v2366 = vadd.f32 0.0, %v2365
      %v2367 = vpop.f32.mrb[0].mxu0
      %v2368 = vpop.f32.mrb[0].mxu0
      %v2369 = vadd.f32 0.0, %v2368
      %v2370 = vpop.f32.mrb[0].mxu0
      %2371 = vmatprep.mubr.bf16.mxu0 %v656
      %2372 = vmatmul.mubr.bf16.gmra.mrb[0].mxu0 %v514
      %v2373 = vpop.f32.mrb[0].mxu0
      %v2374 = vadd.f32 0.0, %v2373
      %v2375 = vpop.f32.mrb[0].mxu0
      %v2376 = vpop.f32.mrb[0].mxu0
      %v2377 = vadd.f32 0.0, %v2376
      %v2378 = vpop.f32.mrb[0].mxu0
      %2379 = vmatprep.mubr.bf16.mxu0 %v668
      %2380 = vmatmul.mubr.bf16.gmra.mrb[0].mxu0 %v516
      %v2381 = vpop.f32.mrb[0].mxu0
      %v2382 = vadd.f32 0.0, %v2381
      %v2383 = vpop.f32.mrb[0].mxu0
      %v2384 = vpop.f32.mrb[0].mxu0
      %v2385 = vadd.f32 0.0, %v2384
      %v2386 = vpop.f32.mrb[0].mxu0
      %2387 = vmatprep.mubr.bf16.mxu0 %v680
      %2388 = vmatmul.mubr.bf16.gmra.mrb[0].mxu0 %v518
      %v2389 = vpop.f32.mrb[0].mxu0
      %v2390 = vadd.f32 0.0, %v2389
      %v2391 = vpop.f32.mrb[0].mxu0
      %v2392 = vpop.f32.mrb[0].mxu0
      %v2393 = vadd.f32 0.0, %v2392
      %v2394 = vpop.f32.mrb[0].mxu0
      %2395 = vmatprep.mubr.bf16.mxu0 %v692
      %2396 = vmatmul.mubr.bf16.gmra.mrb[0].mxu0 %v520
      %v2397 = vpop.f32.mrb[0].mxu0
      %v2398 = vadd.f32 0.0, %v2397
      %v2399 = vpop.f32.mrb[0].mxu0
      %v2400 = vpop.f32.mrb[0].mxu0
      %v2401 = vadd.f32 0.0, %v2400
      %v2402 = vpop.f32.mrb[0].mxu0
      %2403 = vmatprep.mubr.bf16.mxu0 %v704
      %2404 = vmatmul.mubr.bf16.gmra.mrb[0].mxu0 %v522
      %v2405 = vpop.f32.mrb[0].mxu0
      %v2406 = vadd.f32 0.0, %v2405
      %v2407 = vpop.f32.mrb[0].mxu0
      %v2408 = vpop.f32.mrb[0].mxu0
      %v2409 = vadd.f32 0.0, %v2408
      %v2410 = vpop.f32.mrb[0].mxu0
      %2411 = vmatprep.mubr.bf16.mxu0 %v716
      %2412 = vmatmul.mubr.bf16.gmra.mrb[0].mxu0 %v524
      %v2413 = vpop.f32.mrb[0].mxu0
      %v2414 = vadd.f32 0.0, %v2413
      %v2415 = vpop.f32.mrb[0].mxu0
      %v2416 = vpop.f32.mrb[0].mxu0
      %v2417 = vadd.f32 0.0, %v2416
      %v2418 = vpop.f32.mrb[0].mxu0
      %2419 = vmatprep.mubr.bf16.mxu0 %v728
      %2420 = vmatmul.mubr.bf16.gmra.mrb[0].mxu0 %v526
      %v2421 = vpop.f32.mrb[0].mxu0
      %v2422 = vadd.f32 0.0, %v2421
      %v2423 = vpop.f32.mrb[0].mxu0
      %v2424 = vpop.f32.mrb[0].mxu0
      %v2425 = vadd.f32 0.0, %v2424
      %v2426 = vpop.f32.mrb[0].mxu0
      %2427 = vmatprep.mubr.bf16.mxu0 %v740
      %2428 = vmatmul.mubr.bf16.gmra.mrb[0].mxu0 %v528
      %v2429 = vpop.f32.mrb[0].mxu0
      %v2430 = vadd.f32 0.0, %v2429
      %v2431 = vpop.f32.mrb[0].mxu0
      %v2432 = vpop.f32.mrb[0].mxu0
      %v2433 = vadd.f32 0.0, %v2432
      %v2434 = vpop.f32.mrb[0].mxu0
      %2435 = vmatprep.mubr.bf16.mxu0 %v752
      %2436 = vmatmul.mubr.bf16.gmra.mrb[0].mxu0 %v530
      %v2437 = vpop.f32.mrb[0].mxu0
      %v2438 = vadd.f32 0.0, %v2437
      %v2439 = vpop.f32.mrb[0].mxu0
      %v2440 = vpop.f32.mrb[0].mxu0
      %v2441 = vadd.f32 0.0, %v2440
      %v2442 = vpop.f32.mrb[0].mxu0
      %2443 = vmatprep.mubr.bf16.mxu0 %v764
      %2444 = vmatmul.mubr.bf16.gmra.mrb[0].mxu0 %v532
      %v2445 = vpop.f32.mrb[0].mxu0
      %v2446 = vadd.f32 0.0, %v2445
      %v2447 = vpop.f32.mrb[0].mxu0
      %v2448 = vpop.f32.mrb[0].mxu0
      %v2449 = vadd.f32 0.0, %v2448
      %v2450 = vpop.f32.mrb[0].mxu0
      %2451 = vmatprep.mubr.bf16.mxu0 %v776
      %2452 = vmatmul.mubr.bf16.gmra.mrb[0].mxu0 %v534
      %v2453 = vpop.f32.mrb[0].mxu0
      %v2454 = vadd.f32 0.0, %v2453
      %v2455 = vpop.f32.mrb[0].mxu0
      %v2456 = vpop.f32.mrb[0].mxu0
      %v2457 = vadd.f32 0.0, %v2456
      %v2458 = vpop.f32.mrb[0].mxu0
      %2459 = vdwg.mxu0
      %2460 = vmatprep.subr.bf16.mxu0 0
      %2461 = vmatpush1.bf16.msra.mxu0 %v2251
      %2462 = vmatprep.subr.bf16.mxu0 0
      %2463 = vmatpush1.bf16.msra.mxu0 %v2252
      %2464 = vmatprep.subr.bf16.mxu0 0
      %2465 = vmatpush1.bf16.msra.mxu0 %v2253
      %2466 = vmatprep.subr.bf16.mxu0 0
      %2467 = vmatpush1.bf16.msra.mxu0 %v2254
      %2468 = vmatprep.subr.bf16.mxu0 0
      %2469 = vmatpush1.bf16.msra.mxu0 %v2255
      %2470 = vmatprep.subr.bf16.mxu0 0
      %2471 = vmatpush1.bf16.msra.mxu0 %v2256
      %2472 = vmatprep.subr.bf16.mxu0 0
      %2473 = vmatpush1.bf16.msra.mxu0 %v2257
      %2474 = vmatprep.subr.bf16.mxu0 0
      %2475 = vmatpush1.bf16.msra.mxu0 %v2258
      %2476 = vmatprep.subr.bf16.mxu0 0
      %2477 = vmatpush1.bf16.msra.mxu0 0
      %2478 = vmatprep.subr.bf16.mxu0 0
      %2479 = vmatpush1.bf16.msra.mxu0 0
      %2480 = vmatprep.subr.bf16.mxu0 0
      %2481 = vmatpush1.bf16.msra.mxu0 0
      %2482 = vmatprep.subr.bf16.mxu0 0
      %2483 = vmatpush1.bf16.msra.mxu0 0
      %2484 = vmatprep.subr.bf16.mxu0 0
      %2485 = vmatpush1.bf16.msra.mxu0 0
      %2486 = vmatprep.subr.bf16.mxu0 0
      %2487 = vmatpush1.bf16.msra.mxu0 0
      %2488 = vmatprep.subr.bf16.mxu0 0
      %2489 = vmatpush1.bf16.msra.mxu0 0
      %2490 = vmatprep.subr.bf16.mxu0 0
      %2491 = vmatpush1.bf16.msra.mxu0 0
      %2492 = vmatprep.mubr.bf16.mxu0 0
      %2493 = vmatmul.mubr.bf16.gmra.mrb[0].mxu0 %v846
      %v2494 = vpop.f32.mrb[0].mxu0
      %v2495 = vadd.f32 %v2318, %v2494
      %v2496 = vpop.f32.mrb[0].mxu0
      %v2497 = vpop.f32.mrb[0].mxu0
      %v2498 = vadd.f32 %v2321, %v2497
      %v2499 = vpop.f32.mrb[0].mxu0
      %2500 = vmatprep.mubr.bf16.mxu0 0
      %2501 = vmatmul.mubr.bf16.gmra.mrb[0].mxu0 %v849
      %v2502 = vpop.f32.mrb[0].mxu0
      %v2503 = vadd.f32 %v2326, %v2502
      %v2504 = vpop.f32.mrb[0].mxu0
      %v2505 = vpop.f32.mrb[0].mxu0
      %v2506 = vadd.f32 %v2329, %v2505
      %v2507 = vpop.f32.mrb[0].mxu0
      %2508 = vmatprep.mubr.bf16.mxu0 0
      %2509 = vmatmul.mubr.bf16.gmra.mrb[0].mxu0 %v852
      %v2510 = vpop.f32.mrb[0].mxu0
      %v2511 = vadd.f32 %v2334, %v2510
      %v2512 = vpop.f32.mrb[0].mxu0
      %v2513 = vpop.f32.mrb[0].mxu0
      %v2514 = vadd.f32 %v2337, %v2513
      %v2515 = vpop.f32.mrb[0].mxu0
      %2516 = vmatprep.mubr.bf16.mxu0 0
      %2517 = vmatmul.mubr.bf16.gmra.mrb[0].mxu0 %v855
      %v2518 = vpop.f32.mrb[0].mxu0
      %v2519 = vadd.f32 %v2342, %v2518
      %v2520 = vpop.f32.mrb[0].mxu0
      %v2521 = vpop.f32.mrb[0].mxu0
      %v2522 = vadd.f32 %v2345, %v2521
      %v2523 = vpop.f32.mrb[0].mxu0
      %2524 = vmatprep.mubr.bf16.mxu0 0
      %2525 = vmatmul.mubr.bf16.gmra.mrb[0].mxu0 %v858
      %v2526 = vpop.f32.mrb[0].mxu0
      %v2527 = vadd.f32 %v2350, %v2526
      %v2528 = vpop.f32.mrb[0].mxu0
      %v2529 = vpop.f32.mrb[0].mxu0
      %v2530 = vadd.f32 %v2353, %v2529
      %v2531 = vpop.f32.mrb[0].mxu0
      %2532 = vmatprep.mubr.bf16.mxu0 0
      %2533 = vmatmul.mubr.bf16.gmra.mrb[0].mxu0 %v861
      %v2534 = vpop.f32.mrb[0].mxu0
      %v2535 = vadd.f32 %v2358, %v2534
      %v2536 = vpop.f32.mrb[0].mxu0
      %v2537 = vpop.f32.mrb[0].mxu0
      %v2538 = vadd.f32 %v2361, %v2537
      %v2539 = vpop.f32.mrb[0].mxu0
      %2540 = vmatprep.mubr.bf16.mxu0 0
      %2541 = vmatmul.mubr.bf16.gmra.mrb[0].mxu0 %v864
      %v2542 = vpop.f32.mrb[0].mxu0
      %v2543 = vadd.f32 %v2366, %v2542
      %v2544 = vpop.f32.mrb[0].mxu0
      %v2545 = vpop.f32.mrb[0].mxu0
      %v2546 = vadd.f32 %v2369, %v2545
      %v2547 = vpop.f32.mrb[0].mxu0
      %2548 = vmatprep.mubr.bf16.mxu0 0
      %2549 = vmatmul.mubr.bf16.gmra.mrb[0].mxu0 %v867
      %v2550 = vpop.f32.mrb[0].mxu0
      %v2551 = vadd.f32 %v2374, %v2550
      %v2552 = vpop.f32.mrb[0].mxu0
      %v2553 = vpop.f32.mrb[0].mxu0
      %v2554 = vadd.f32 %v2377, %v2553
      %v2555 = vpop.f32.mrb[0].mxu0
      %2556 = vmatprep.mubr.bf16.mxu0 0
      %2557 = vmatmul.mubr.bf16.gmra.mrb[0].mxu0 %v870
      %v2558 = vpop.f32.mrb[0].mxu0
      %v2559 = vadd.f32 %v2382, %v2558
      %v2560 = vpop.f32.mrb[0].mxu0
      %v2561 = vpop.f32.mrb[0].mxu0
      %v2562 = vadd.f32 %v2385, %v2561
      %v2563 = vpop.f32.mrb[0].mxu0
      %2564 = vmatprep.mubr.bf16.mxu0 0
      %2565 = vmatmul.mubr.bf16.gmra.mrb[0].mxu0 %v873
      %v2566 = vpop.f32.mrb[0].mxu0
      %v2567 = vadd.f32 %v2390, %v2566
      %v2568 = vpop.f32.mrb[0].mxu0
      %v2569 = vpop.f32.mrb[0].mxu0
      %v2570 = vadd.f32 %v2393, %v2569
      %v2571 = vpop.f32.mrb[0].mxu0
      %2572 = vmatprep.mubr.bf16.mxu0 0
      %2573 = vmatmul.mubr.bf16.gmra.mrb[0].mxu0 %v876
      %v2574 = vpop.f32.mrb[0].mxu0
      %v2575 = vadd.f32 %v2398, %v2574
      %v2576 = vpop.f32.mrb[0].mxu0
      %v2577 = vpop.f32.mrb[0].mxu0
      %v2578 = vadd.f32 %v2401, %v2577
      %v2579 = vpop.f32.mrb[0].mxu0
      %2580 = vmatprep.mubr.bf16.mxu0 0
      %2581 = vmatmul.mubr.bf16.gmra.mrb[0].mxu0 %v879
      %v2582 = vpop.f32.mrb[0].mxu0
      %v2583 = vadd.f32 %v2406, %v2582
      %v2584 = vpop.f32.mrb[0].mxu0
      %v2585 = vpop.f32.mrb[0].mxu0
      %v2586 = vadd.f32 %v2409, %v2585
      %v2587 = vpop.f32.mrb[0].mxu0
      %2588 = vmatprep.mubr.bf16.mxu0 0
      %2589 = vmatmul.mubr.bf16.gmra.mrb[0].mxu0 %v882
      %v2590 = vpop.f32.mrb[0].mxu0
      %v2591 = vadd.f32 %v2414, %v2590
      %v2592 = vpop.f32.mrb[0].mxu0
      %v2593 = vpop.f32.mrb[0].mxu0
      %v2594 = vadd.f32 %v2417, %v2593
      %v2595 = vpop.f32.mrb[0].mxu0
      %2596 = vmatprep.mubr.bf16.mxu0 0
      %2597 = vmatmul.mubr.bf16.gmra.mrb[0].mxu0 %v885
      %v2598 = vpop.f32.mrb[0].mxu0
      %v2599 = vadd.f32 %v2422, %v2598
      %v2600 = vpop.f32.mrb[0].mxu0
      %v2601 = vpop.f32.mrb[0].mxu0
      %v2602 = vadd.f32 %v2425, %v2601
      %v2603 = vpop.f32.mrb[0].mxu0
      %2604 = vmatprep.mubr.bf16.mxu0 0
      %2605 = vmatmul.mubr.bf16.gmra.mrb[0].mxu0 %v888
      %v2606 = vpop.f32.mrb[0].mxu0
      %v2607 = vadd.f32 %v2430, %v2606
      %v2608 = vpop.f32.mrb[0].mxu0
      %v2609 = vpop.f32.mrb[0].mxu0
      %v2610 = vadd.f32 %v2433, %v2609
      %v2611 = vpop.f32.mrb[0].mxu0
      %2612 = vmatprep.mubr.bf16.mxu0 0
      %2613 = vmatmul.mubr.bf16.gmra.mrb[0].mxu0 %v891
      %v2614 = vpop.f32.mrb[0].mxu0
      %v2615 = vadd.f32 %v2438, %v2614
      %v2616 = vpop.f32.mrb[0].mxu0
      %v2617 = vpop.f32.mrb[0].mxu0
      %v2618 = vadd.f32 %v2441, %v2617
      %v2619 = vpop.f32.mrb[0].mxu0
      %2620 = vmatprep.mubr.bf16.mxu0 0
      %2621 = vmatmul.mubr.bf16.gmra.mrb[0].mxu0 %v894
      %v2622 = vpop.f32.mrb[0].mxu0
      %v2623 = vadd.f32 %v2446, %v2622
      %v2624 = vpop.f32.mrb[0].mxu0
      %v2625 = vpop.f32.mrb[0].mxu0
      %v2626 = vadd.f32 %v2449, %v2625
      %v2627 = vpop.f32.mrb[0].mxu0
      %2628 = vmatprep.mubr.bf16.mxu0 0
      %2629 = vmatmul.mubr.bf16.gmra.mrb[0].mxu0 %v897
      %v2630 = vpop.f32.mrb[0].mxu0
      %v2631 = vadd.f32 %v2454, %v2630
      %v2632 = vpop.f32.mrb[0].mxu0
      %v2633 = vpop.f32.mrb[0].mxu0
      %v2634 = vadd.f32 %v2457, %v2633
      %v2635 = vpop.f32.mrb[0].mxu0
      %2636 = vdwg.mxu0
      %v2637 = vadd.f32 %v2054, %v2495
      %v2638 = vadd.f32 %v2055, %v2498
      %v2639 = vadd.f32 %v2056, %v2503
      %v2640 = vadd.f32 %v2057, %v2506
      %v2641 = vadd.f32 %v2058, %v2511
      %v2642 = vadd.f32 %v2059, %v2514
      %v2643 = vadd.f32 %v2060, %v2519
      %v2644 = vadd.f32 %v2061, %v2522
      %v2645 = vadd.f32 %v2062, %v2527
      %v2646 = vadd.f32 %v2063, %v2530
      %v2647 = vadd.f32 %v2064, %v2535
      %v2648 = vadd.f32 %v2065, %v2538
      %v2649 = vadd.f32 %v2066, %v2543
      %v2650 = vadd.f32 %v2067, %v2546
      %v2651 = vadd.f32 %v2068, %v2551
      %v2652 = vadd.f32 %v2069, %v2554
      %v2653 = vadd.f32 %v2070, %v2559
      %v2654 = vadd.f32 %v2071, %v2562
      %v2655 = vadd.f32 %v2072, %v2567
      %v2656 = vadd.f32 %v2073, %v2570
      %v2657 = vadd.f32 %v2074, %v2575
      %v2658 = vadd.f32 %v2075, %v2578
      %v2659 = vadd.f32 %v2076, %v2583
      %v2660 = vadd.f32 %v2077, %v2586
      %v2661 = vadd.f32 %v2078, %v2591
      %v2662 = vadd.f32 %v2079, %v2594
      %v2663 = vadd.f32 %v2080, %v2599
      %v2664 = vadd.f32 %v2081, %v2602
      %v2665 = vadd.f32 %v2082, %v2607
      %v2666 = vadd.f32 %v2083, %v2610
      %v2667 = vadd.f32 %v2084, %v2615
      %v2668 = vadd.f32 %v2085, %v2618
      %v2669 = vadd.f32 %v2086, %v2623
      %v2670 = vadd.f32 %v2087, %v2626
      %v2671 = vadd.f32 %v2088, %v2631
      %v2672 = vadd.f32 %v2089, %v2634
      %v2673 = vmax.f32 %v2637, 0.0
      %v2674 = vmax.f32 %v2638, 0.0
      %v2675 = vmax.f32 %v2639, 0.0
      %v2676 = vmax.f32 %v2640, 0.0
      %v2677 = vmax.f32 %v2641, 0.0
      %v2678 = vmax.f32 %v2642, 0.0
      %v2679 = vmax.f32 %v2643, 0.0
      %v2680 = vmax.f32 %v2644, 0.0
      %v2681 = vmax.f32 %v2645, 0.0
      %v2682 = vmax.f32 %v2646, 0.0
      %v2683 = vmax.f32 %v2647, 0.0
      %v2684 = vmax.f32 %v2648, 0.0
      %v2685 = vmax.f32 %v2649, 0.0
      %v2686 = vmax.f32 %v2650, 0.0
      %v2687 = vmax.f32 %v2651, 0.0
      %v2688 = vmax.f32 %v2652, 0.0
      %v2689 = vmax.f32 %v2653, 0.0
      %v2690 = vmax.f32 %v2654, 0.0
      %v2691 = vmax.f32 %v2655, 0.0
      %v2692 = vmax.f32 %v2656, 0.0
      %v2693 = vmax.f32 %v2657, 0.0
      %v2694 = vmax.f32 %v2658, 0.0
      %v2695 = vmax.f32 %v2659, 0.0
      %v2696 = vmax.f32 %v2660, 0.0
      %v2697 = vmax.f32 %v2661, 0.0
      %v2698 = vmax.f32 %v2662, 0.0
      %v2699 = vmax.f32 %v2663, 0.0
      %v2700 = vmax.f32 %v2664, 0.0
      %v2701 = vmax.f32 %v2665, 0.0
      %v2702 = vmax.f32 %v2666, 0.0
      %v2703 = vmax.f32 %v2667, 0.0
      %v2704 = vmax.f32 %v2668, 0.0
      %v2705 = vmax.f32 %v2669, 0.0
      %v2706 = vmax.f32 %v2670, 0.0
      %v2707 = vmax.f32 %v2671, 0.0
      %v2708 = vmax.f32 %v2672, 0.0
      %v2709 = vpack.c.bf16 %v2674, %v2673
      %v2710 = vpack.c.bf16 %v2676, %v2675
      %v2711 = vpack.c.bf16 %v2678, %v2677
      %v2712 = vpack.c.bf16 %v2680, %v2679
      %v2713 = vpack.c.bf16 %v2682, %v2681
      %v2714 = vpack.c.bf16 %v2684, %v2683
      %v2715 = vpack.c.bf16 %v2686, %v2685
      %v2716 = vpack.c.bf16 %v2688, %v2687
      %v2717 = vpack.c.bf16 %v2690, %v2689
      %v2718 = vpack.c.bf16 %v2692, %v2691
      %v2719 = vpack.c.bf16 %v2694, %v2693
      %v2720 = vpack.c.bf16 %v2696, %v2695
      %v2721 = vpack.c.bf16 %v2698, %v2697
      %v2722 = vpack.c.bf16 %v2700, %v2699
      %v2723 = vpack.c.bf16 %v2702, %v2701
      %v2724 = vpack.c.bf16 %v2704, %v2703
      %v2725 = vpack.c.bf16 %v2706, %v2705
      %v2726 = vpack.c.bf16 %v2708, %v2707
      %2727 = vst [vmem:[#allocation3 + $0x8] sm:$0xff] %v2709
      %2728 = vst [vmem:[#allocation3 + $0x20] sm:$0xff] %v2710
      %2729 = vst [vmem:[#allocation3 + $0x38] sm:$0xff] %v2711
      %2730 = vst [vmem:[#allocation3 + $0x50] sm:$0xff] %v2712
      %2731 = vst [vmem:[#allocation3 + $0x68] sm:$0xff] %v2713
      %2732 = vst [vmem:[#allocation3 + $0x80] sm:$0xff] %v2714
      %2733 = vst [vmem:[#allocation3 + $0x98] sm:$0xff] %v2715
      %2734 = vst [vmem:[#allocation3 + $0xb0] sm:$0xff] %v2716
      %2735 = vst [vmem:[#allocation3 + $0xc8] sm:$0xff] %v2717
      %2736 = vst [vmem:[#allocation3 + $0xe0] sm:$0xff] %v2718
      %2737 = vst [vmem:[#allocation3 + $0xf8] sm:$0xff] %v2719
      %2738 = vst [vmem:[#allocation3 + $0x110] sm:$0xff] %v2720
      %2739 = vst [vmem:[#allocation3 + $0x128] sm:$0xff] %v2721
      %2740 = vst [vmem:[#allocation3 + $0x140] sm:$0xff] %v2722
      %2741 = vst [vmem:[#allocation3 + $0x158] sm:$0xff] %v2723
      %2742 = vst [vmem:[#allocation3 + $0x170] sm:$0xff] %v2724
      %2743 = vst [vmem:[#allocation3 + $0x188] sm:$0xff] %v2725
      %2744 = vst [vmem:[#allocation3 + $0x1a0] sm:$0xff] %v2726
      %2745 = vst [vmem:[#allocation3] sm:$0xff] 0
      %2746 = vst [vmem:[#allocation3 + $0x18] sm:$0xff] 0
      %2747 = vst [vmem:[#allocation3 + $0x30] sm:$0xff] 0
      %2748 = vst [vmem:[#allocation3 + $0x48] sm:$0xff] 0
      %2749 = vst [vmem:[#allocation3 + $0x60] sm:$0xff] 0
      %2750 = vst [vmem:[#allocation3 + $0x78] sm:$0xff] 0
      %2751 = vst [vmem:[#allocation3 + $0x90] sm:$0xff] 0
      %2752 = vst [vmem:[#allocation3 + $0xa8] sm:$0xff] 0
      %2753 = vst [vmem:[#allocation3 + $0xc0] sm:$0xff] 0
      %2754 = vst [vmem:[#allocation3 + $0xd8] sm:$0xff] 0
      %2755 = vst [vmem:[#allocation3 + $0xf0] sm:$0xff] 0
      %2756 = vst [vmem:[#allocation3 + $0x108] sm:$0xff] 0
      %2757 = vst [vmem:[#allocation3 + $0x120] sm:$0xff] 0
      %2758 = vst [vmem:[#allocation3 + $0x138] sm:$0xff] 0
      %2759 = vst [vmem:[#allocation3 + $0x150] sm:$0xff] 0
      %2760 = vst [vmem:[#allocation3 + $0x168] sm:$0xff] 0
      %2761 = vst [vmem:[#allocation3 + $0x180] sm:$0xff] 0
      %2762 = vst [vmem:[#allocation3 + $0x198] sm:$0xff] 0
      %2763 = vst [vmem:[#allocation3 + $0x10] sm:$0xff] 0
      %2764 = vst [vmem:[#allocation3 + $0x28] sm:$0xff] 0
      %2765 = vst [vmem:[#allocation3 + $0x40] sm:$0xff] 0
      %2766 = vst [vmem:[#allocation3 + $0x58] sm:$0xff] 0
      %2767 = vst [vmem:[#allocation3 + $0x70] sm:$0xff] 0
      %2768 = vst [vmem:[#allocation3 + $0x88] sm:$0xff] 0
      %2769 = vst [vmem:[#allocation3 + $0xa0] sm:$0xff] 0
      %2770 = vst [vmem:[#allocation3 + $0xb8] sm:$0xff] 0
      %2771 = vst [vmem:[#allocation3 + $0xd0] sm:$0xff] 0
      %2772 = vst [vmem:[#allocation3 + $0xe8] sm:$0xff] 0
      %2773 = vst [vmem:[#allocation3 + $0x100] sm:$0xff] 0
      %2774 = vst [vmem:[#allocation3 + $0x118] sm:$0xff] 0
      %2775 = vst [vmem:[#allocation3 + $0x130] sm:$0xff] 0
      %2776 = vst [vmem:[#allocation3 + $0x148] sm:$0xff] 0
      %2777 = vst [vmem:[#allocation3 + $0x160] sm:$0xff] 0
      %2778 = vst [vmem:[#allocation3 + $0x178] sm:$0xff] 0
      %2779 = vst [vmem:[#allocation3 + $0x190] sm:$0xff] 0
      %2780 = vst [vmem:[#allocation3 + $0x1a8] sm:$0xff] 0
      // Predicated region
      $region113: #{double_conv.1} parent=35 // pred_check
        %p2781 = pneg %p217
      $region114: #{double_conv.1} parent=35 // pred_check_branch
        %2783 = sbr.rel (%p2781) target = $region116
      $region115: #{double_conv.1} parent=35 // pred_region
        %2784 = vst [vmem:[#allocation3] sm:$0xff] 0
        %2785 = vst [vmem:[#allocation3 + $0x8] sm:$0xff] 0
        %2786 = vst [vmem:[#allocation3 + $0x10] sm:$0xff] 0
        %s2787 = scalar_lea.vmem [#allocation3], 408
        %2788 = vst [vmem:[%s2787] sm:$0xff] 0
        %2789 = vst [vmem:[%s2787 + $0x8] sm:$0xff] 0
        %2790 = vst [vmem:[%s2787 + $0x10] sm:$0xff] 0
      $region116: #{double_conv.1} parent=35 // pred_fallthru
        _
      %v2791 = vld [vmem:[#allocation3] sm:$0xff]
      %v2792 = vld [vmem:[#allocation3 + $0x8] sm:$0xff]
      %v2793 = vld [vmem:[#allocation3 + $0x10] sm:$0xff]
      %v2794 = vld [vmem:[#allocation3 + $0x18] sm:$0xff]
      %v2795 = vld [vmem:[#allocation3 + $0x20] sm:$0xff]
      %v2796 = vld [vmem:[#allocation3 + $0x28] sm:$0xff]
      %v2797 = vld [vmem:[#allocation3 + $0x30] sm:$0xff]
      %v2798 = vld [vmem:[#allocation3 + $0x38] sm:$0xff]
      %v2799 = vld [vmem:[#allocation3 + $0x40] sm:$0xff]
      %v2800 = vld [vmem:[#allocation3 + $0x48] sm:$0xff]
      %v2801 = vld [vmem:[#allocation3 + $0x50] sm:$0xff]
      %v2802 = vld [vmem:[#allocation3 + $0x58] sm:$0xff]
      %v2803 = vld [vmem:[#allocation3 + $0x60] sm:$0xff]
      %v2804 = vld [vmem:[#allocation3 + $0x68] sm:$0xff]
      %v2805 = vld [vmem:[#allocation3 + $0x70] sm:$0xff]
      %v2806 = vld [vmem:[#allocation3 + $0x78] sm:$0xff]
      %v2807 = vld [vmem:[#allocation3 + $0x80] sm:$0xff]
      %v2808 = vld [vmem:[#allocation3 + $0x88] sm:$0xff]
      %v2809 = vld [vmem:[#allocation3 + $0x90] sm:$0xff]
      %v2810 = vld [vmem:[#allocation3 + $0x98] sm:$0xff]
      %v2811 = vld [vmem:[#allocation3 + $0xa0] sm:$0xff]
      %v2812 = vld [vmem:[#allocation3 + $0xa8] sm:$0xff]
      %v2813 = vld [vmem:[#allocation3 + $0xb0] sm:$0xff]
      %v2814 = vld [vmem:[#allocation3 + $0xb8] sm:$0xff]
      %v2815 = vld [vmem:[#allocation3 + $0xc0] sm:$0xff]
      %v2816 = vld [vmem:[#allocation3 + $0xc8] sm:$0xff]
      %v2817 = vld [vmem:[#allocation3 + $0xd0] sm:$0xff]
      %v2818 = vld [vmem:[#allocation3 + $0xd8] sm:$0xff]
      %v2819 = vld [vmem:[#allocation3 + $0xe0] sm:$0xff]
      %v2820 = vld [vmem:[#allocation3 + $0xe8] sm:$0xff]
      %v2821 = vld [vmem:[#allocation3 + $0xf0] sm:$0xff]
      %v2822 = vld [vmem:[#allocation3 + $0xf8] sm:$0xff]
      %v2823 = vld [vmem:[#allocation3 + $0x100] sm:$0xff]
      %v2824 = vld [vmem:[#allocation3 + $0x108] sm:$0xff]
      %v2825 = vld [vmem:[#allocation3 + $0x110] sm:$0xff]
      %v2826 = vld [vmem:[#allocation3 + $0x118] sm:$0xff]
      %v2827 = vld [vmem:[#allocation3 + $0x120] sm:$0xff]
      %v2828 = vld [vmem:[#allocation3 + $0x128] sm:$0xff]
      %v2829 = vld [vmem:[#allocation3 + $0x130] sm:$0xff]
      %v2830 = vld [vmem:[#allocation3 + $0x138] sm:$0xff]
      %v2831 = vld [vmem:[#allocation3 + $0x140] sm:$0xff]
      %v2832 = vld [vmem:[#allocation3 + $0x148] sm:$0xff]
      %v2833 = vld [vmem:[#allocation3 + $0x150] sm:$0xff]
      %v2834 = vld [vmem:[#allocation3 + $0x158] sm:$0xff]
      %v2835 = vld [vmem:[#allocation3 + $0x160] sm:$0xff]
      %v2836 = vld [vmem:[#allocation3 + $0x168] sm:$0xff]
      %v2837 = vld [vmem:[#allocation3 + $0x170] sm:$0xff]
      %v2838 = vld [vmem:[#allocation3 + $0x178] sm:$0xff]
      %v2839 = vld [vmem:[#allocation3 + $0x180] sm:$0xff]
      %v2840 = vld [vmem:[#allocation3 + $0x188] sm:$0xff]
      %v2841 = vld [vmem:[#allocation3 + $0x190] sm:$0xff]
      %v2842 = vld [vmem:[#allocation3 + $0x198] sm:$0xff]
      %v2843 = vld [vmem:[#allocation3 + $0x1a0] sm:$0xff]
      %v2844 = vld [vmem:[#allocation3 + $0x1a8] sm:$0xff]
      %v2846 = vshll.u32 %v2792, 16
      %v2848 = vrot.slane %v2846, 1
      %v2849 = vshrl.u32 %v2792, 16
      %v2851 = vor.u32 %v2849, %v2848
      %v2853 = vshll.u32 %v2795, 16
      %v2855 = vrot.slane %v2853, 1
      %v2856 = vshrl.u32 %v2795, 16
      %v2858 = vor.u32 %v2856, %v2855
      %v2860 = vshll.u32 %v2798, 16
      %v2862 = vrot.slane %v2860, 1
      %v2863 = vshrl.u32 %v2798, 16
      %v2865 = vor.u32 %v2863, %v2862
      %v2867 = vshll.u32 %v2801, 16
      %v2869 = vrot.slane %v2867, 1
      %v2870 = vshrl.u32 %v2801, 16
      %v2872 = vor.u32 %v2870, %v2869
      %v2874 = vshll.u32 %v2804, 16
      %v2876 = vrot.slane %v2874, 1
      %v2877 = vshrl.u32 %v2804, 16
      %v2879 = vor.u32 %v2877, %v2876
      %v2881 = vshll.u32 %v2807, 16
      %v2883 = vrot.slane %v2881, 1
      %v2884 = vshrl.u32 %v2807, 16
      %v2886 = vor.u32 %v2884, %v2883
      %v2888 = vshll.u32 %v2810, 16
      %v2890 = vrot.slane %v2888, 1
      %v2891 = vshrl.u32 %v2810, 16
      %v2893 = vor.u32 %v2891, %v2890
      %v2895 = vshll.u32 %v2813, 16
      %v2897 = vrot.slane %v2895, 1
      %v2898 = vshrl.u32 %v2813, 16
      %v2900 = vor.u32 %v2898, %v2897
      %v2902 = vshll.u32 %v2816, 16
      %v2904 = vrot.slane %v2902, 1
      %v2905 = vshrl.u32 %v2816, 16
      %v2907 = vor.u32 %v2905, %v2904
      %v2909 = vshll.u32 %v2819, 16
      %v2911 = vrot.slane %v2909, 1
      %v2912 = vshrl.u32 %v2819, 16
      %v2914 = vor.u32 %v2912, %v2911
      %v2916 = vshll.u32 %v2822, 16
      %v2918 = vrot.slane %v2916, 1
      %v2919 = vshrl.u32 %v2822, 16
      %v2921 = vor.u32 %v2919, %v2918
      %v2923 = vshll.u32 %v2825, 16
      %v2925 = vrot.slane %v2923, 1
      %v2926 = vshrl.u32 %v2825, 16
      %v2928 = vor.u32 %v2926, %v2925
      %v2930 = vshll.u32 %v2828, 16
      %v2932 = vrot.slane %v2930, 1
      %v2933 = vshrl.u32 %v2828, 16
      %v2935 = vor.u32 %v2933, %v2932
      %v2937 = vshll.u32 %v2831, 16
      %v2939 = vrot.slane %v2937, 1
      %v2940 = vshrl.u32 %v2831, 16
      %v2942 = vor.u32 %v2940, %v2939
      %v2944 = vshll.u32 %v2834, 16
      %v2946 = vrot.slane %v2944, 1
      %v2947 = vshrl.u32 %v2834, 16
      %v2949 = vor.u32 %v2947, %v2946
      %v2951 = vshll.u32 %v2837, 16
      %v2953 = vrot.slane %v2951, 1
      %v2954 = vshrl.u32 %v2837, 16
      %v2956 = vor.u32 %v2954, %v2953
      %v2958 = vshll.u32 %v2840, 16
      %v2960 = vrot.slane %v2958, 1
      %v2961 = vshrl.u32 %v2840, 16
      %v2963 = vor.u32 %v2961, %v2960
      %v2965 = vshll.u32 %v2843, 16
      %v2967 = vrot.slane %v2965, 1
      %v2968 = vshrl.u32 %v2843, 16
      %v2970 = vor.u32 %v2968, %v2967
      %v3007 = vrot.slane %v2792, 1
      %v3008 = vrot.slane %v2793, 1
      %v3009 = vsel %vm837, %v3007, %v3008
      %v3010 = vrot.slane %v2795, 1
      %v3011 = vrot.slane %v2796, 1
      %v3012 = vsel %vm837, %v3010, %v3011
      %v3013 = vrot.slane %v2798, 1
      %v3014 = vrot.slane %v2799, 1
      %v3015 = vsel %vm837, %v3013, %v3014
      %v3016 = vrot.slane %v2801, 1
      %v3017 = vrot.slane %v2802, 1
      %v3018 = vsel %vm837, %v3016, %v3017
      %v3019 = vrot.slane %v2804, 1
      %v3020 = vrot.slane %v2805, 1
      %v3021 = vsel %vm837, %v3019, %v3020
      %v3022 = vrot.slane %v2807, 1
      %v3023 = vrot.slane %v2808, 1
      %v3024 = vsel %vm837, %v3022, %v3023
      %v3025 = vrot.slane %v2810, 1
      %v3026 = vrot.slane %v2811, 1
      %v3027 = vsel %vm837, %v3025, %v3026
      %v3028 = vrot.slane %v2813, 1
      %v3029 = vrot.slane %v2814, 1
      %v3030 = vsel %vm837, %v3028, %v3029
      %v3031 = vrot.slane %v2816, 1
      %v3032 = vrot.slane %v2817, 1
      %v3033 = vsel %vm837, %v3031, %v3032
      %v3034 = vrot.slane %v2819, 1
      %v3035 = vrot.slane %v2820, 1
      %v3036 = vsel %vm837, %v3034, %v3035
      %v3037 = vrot.slane %v2822, 1
      %v3038 = vrot.slane %v2823, 1
      %v3039 = vsel %vm837, %v3037, %v3038
      %v3040 = vrot.slane %v2825, 1
      %v3041 = vrot.slane %v2826, 1
      %v3042 = vsel %vm837, %v3040, %v3041
      %v3043 = vrot.slane %v2828, 1
      %v3044 = vrot.slane %v2829, 1
      %v3045 = vsel %vm837, %v3043, %v3044
      %v3046 = vrot.slane %v2831, 1
      %v3047 = vrot.slane %v2832, 1
      %v3048 = vsel %vm837, %v3046, %v3047
      %v3049 = vrot.slane %v2834, 1
      %v3050 = vrot.slane %v2835, 1
      %v3051 = vsel %vm837, %v3049, %v3050
      %v3052 = vrot.slane %v2837, 1
      %v3053 = vrot.slane %v2838, 1
      %v3054 = vsel %vm837, %v3052, %v3053
      %v3055 = vrot.slane %v2840, 1
      %v3056 = vrot.slane %v2841, 1
      %v3057 = vsel %vm837, %v3055, %v3056
      %v3058 = vrot.slane %v2843, 1
      %v3059 = vrot.slane %v2844, 1
      %v3060 = vsel %vm837, %v3058, %v3059
      %v3061 = vld [vmem:[%s4] sm:$0x1]
      %v3063 = vlaneseq
      %v3064 = vshrl.u32 %v3063, 7
      %v3065 = vsub.s32 0, %v3064
      %v3066 = vrot.slane %v3061, %v3065
      %vm3068 = vsmask.f32 256
      %v3070 = vshrl.u32 %v2791, 16
      %v3072 = vrot.slane %v3070, 7
      %v3073 = vrot.slane %v2849, 7
      %v3074 = vor.u32 %v3073, %v2846
      %v3075 = vsel %vm3068, %v3072, %v3074
      %v3077 = vshrl.u32 %v2848, 16
      %v3079 = vrot.slane %v3077, 7
      %v3081 = vshrl.u32 %v2851, 16
      %v3083 = vrot.slane %v3081, 7
      %v3084 = vshll.u32 %v2851, 16
      %v3086 = vor.u32 %v3083, %v3084
      %v3087 = vsel %vm3068, %v3079, %v3086
      %v3089 = vshrl.u32 %v3007, 16
      %v3091 = vrot.slane %v3089, 7
      %v3093 = vshrl.u32 %v3009, 16
      %v3095 = vrot.slane %v3093, 7
      %v3096 = vshll.u32 %v3009, 16
      %v3098 = vor.u32 %v3095, %v3096
      %v3099 = vsel %vm3068, %v3091, %v3098
      %v3101 = vshrl.u32 %v2794, 16
      %v3103 = vrot.slane %v3101, 7
      %v3104 = vrot.slane %v2856, 7
      %v3105 = vor.u32 %v3104, %v2853
      %v3106 = vsel %vm3068, %v3103, %v3105
      %v3108 = vshrl.u32 %v2855, 16
      %v3110 = vrot.slane %v3108, 7
      %v3112 = vshrl.u32 %v2858, 16
      %v3114 = vrot.slane %v3112, 7
      %v3115 = vshll.u32 %v2858, 16
      %v3117 = vor.u32 %v3114, %v3115
      %v3118 = vsel %vm3068, %v3110, %v3117
      %v3120 = vshrl.u32 %v3010, 16
      %v3122 = vrot.slane %v3120, 7
      %v3124 = vshrl.u32 %v3012, 16
      %v3126 = vrot.slane %v3124, 7
      %v3127 = vshll.u32 %v3012, 16
      %v3129 = vor.u32 %v3126, %v3127
      %v3130 = vsel %vm3068, %v3122, %v3129
      %v3132 = vshrl.u32 %v2797, 16
      %v3134 = vrot.slane %v3132, 7
      %v3135 = vrot.slane %v2863, 7
      %v3136 = vor.u32 %v3135, %v2860
      %v3137 = vsel %vm3068, %v3134, %v3136
      %v3139 = vshrl.u32 %v2862, 16
      %v3141 = vrot.slane %v3139, 7
      %v3143 = vshrl.u32 %v2865, 16
      %v3145 = vrot.slane %v3143, 7
      %v3146 = vshll.u32 %v2865, 16
      %v3148 = vor.u32 %v3145, %v3146
      %v3149 = vsel %vm3068, %v3141, %v3148
      %v3151 = vshrl.u32 %v3013, 16
      %v3153 = vrot.slane %v3151, 7
      %v3155 = vshrl.u32 %v3015, 16
      %v3157 = vrot.slane %v3155, 7
      %v3158 = vshll.u32 %v3015, 16
      %v3160 = vor.u32 %v3157, %v3158
      %v3161 = vsel %vm3068, %v3153, %v3160
      %v3163 = vshrl.u32 %v2800, 16
      %v3165 = vrot.slane %v3163, 7
      %v3166 = vrot.slane %v2870, 7
      %v3167 = vor.u32 %v3166, %v2867
      %v3168 = vsel %vm3068, %v3165, %v3167
      %v3170 = vshrl.u32 %v2869, 16
      %v3172 = vrot.slane %v3170, 7
      %v3174 = vshrl.u32 %v2872, 16
      %v3176 = vrot.slane %v3174, 7
      %v3177 = vshll.u32 %v2872, 16
      %v3179 = vor.u32 %v3176, %v3177
      %v3180 = vsel %vm3068, %v3172, %v3179
      %v3182 = vshrl.u32 %v3016, 16
      %v3184 = vrot.slane %v3182, 7
      %v3186 = vshrl.u32 %v3018, 16
      %v3188 = vrot.slane %v3186, 7
      %v3189 = vshll.u32 %v3018, 16
      %v3191 = vor.u32 %v3188, %v3189
      %v3192 = vsel %vm3068, %v3184, %v3191
      %v3194 = vshrl.u32 %v2803, 16
      %v3196 = vrot.slane %v3194, 7
      %v3197 = vrot.slane %v2877, 7
      %v3198 = vor.u32 %v3197, %v2874
      %v3199 = vsel %vm3068, %v3196, %v3198
      %v3201 = vshrl.u32 %v2876, 16
      %v3203 = vrot.slane %v3201, 7
      %v3205 = vshrl.u32 %v2879, 16
      %v3207 = vrot.slane %v3205, 7
      %v3208 = vshll.u32 %v2879, 16
      %v3210 = vor.u32 %v3207, %v3208
      %v3211 = vsel %vm3068, %v3203, %v3210
      %v3213 = vshrl.u32 %v3019, 16
      %v3215 = vrot.slane %v3213, 7
      %v3217 = vshrl.u32 %v3021, 16
      %v3219 = vrot.slane %v3217, 7
      %v3220 = vshll.u32 %v3021, 16
      %v3222 = vor.u32 %v3219, %v3220
      %v3223 = vsel %vm3068, %v3215, %v3222
      %v3225 = vshrl.u32 %v2806, 16
      %v3227 = vrot.slane %v3225, 7
      %v3228 = vrot.slane %v2884, 7
      %v3229 = vor.u32 %v3228, %v2881
      %v3230 = vsel %vm3068, %v3227, %v3229
      %v3232 = vshrl.u32 %v2883, 16
      %v3234 = vrot.slane %v3232, 7
      %v3236 = vshrl.u32 %v2886, 16
      %v3238 = vrot.slane %v3236, 7
      %v3239 = vshll.u32 %v2886, 16
      %v3241 = vor.u32 %v3238, %v3239
      %v3242 = vsel %vm3068, %v3234, %v3241
      %v3244 = vshrl.u32 %v3022, 16
      %v3246 = vrot.slane %v3244, 7
      %v3248 = vshrl.u32 %v3024, 16
      %v3250 = vrot.slane %v3248, 7
      %v3251 = vshll.u32 %v3024, 16
      %v3253 = vor.u32 %v3250, %v3251
      %v3254 = vsel %vm3068, %v3246, %v3253
      %v3256 = vshrl.u32 %v2809, 16
      %v3258 = vrot.slane %v3256, 7
      %v3259 = vrot.slane %v2891, 7
      %v3260 = vor.u32 %v3259, %v2888
      %v3261 = vsel %vm3068, %v3258, %v3260
      %v3263 = vshrl.u32 %v2890, 16
      %v3265 = vrot.slane %v3263, 7
      %v3267 = vshrl.u32 %v2893, 16
      %v3269 = vrot.slane %v3267, 7
      %v3270 = vshll.u32 %v2893, 16
      %v3272 = vor.u32 %v3269, %v3270
      %v3273 = vsel %vm3068, %v3265, %v3272
      %v3275 = vshrl.u32 %v3025, 16
      %v3277 = vrot.slane %v3275, 7
      %v3279 = vshrl.u32 %v3027, 16
      %v3281 = vrot.slane %v3279, 7
      %v3282 = vshll.u32 %v3027, 16
      %v3284 = vor.u32 %v3281, %v3282
      %v3285 = vsel %vm3068, %v3277, %v3284
      %v3287 = vshrl.u32 %v2812, 16
      %v3289 = vrot.slane %v3287, 7
      %v3290 = vrot.slane %v2898, 7
      %v3291 = vor.u32 %v3290, %v2895
      %v3292 = vsel %vm3068, %v3289, %v3291
      %v3294 = vshrl.u32 %v2897, 16
      %v3296 = vrot.slane %v3294, 7
      %v3298 = vshrl.u32 %v2900, 16
      %v3300 = vrot.slane %v3298, 7
      %v3301 = vshll.u32 %v2900, 16
      %v3303 = vor.u32 %v3300, %v3301
      %v3304 = vsel %vm3068, %v3296, %v3303
      %v3306 = vshrl.u32 %v3028, 16
      %v3308 = vrot.slane %v3306, 7
      %v3310 = vshrl.u32 %v3030, 16
      %v3312 = vrot.slane %v3310, 7
      %v3313 = vshll.u32 %v3030, 16
      %v3315 = vor.u32 %v3312, %v3313
      %v3316 = vsel %vm3068, %v3308, %v3315
      %v3318 = vshrl.u32 %v2815, 16
      %v3320 = vrot.slane %v3318, 7
      %v3321 = vrot.slane %v2905, 7
      %v3322 = vor.u32 %v3321, %v2902
      %v3323 = vsel %vm3068, %v3320, %v3322
      %v3325 = vshrl.u32 %v2904, 16
      %v3327 = vrot.slane %v3325, 7
      %v3329 = vshrl.u32 %v2907, 16
      %v3331 = vrot.slane %v3329, 7
      %v3332 = vshll.u32 %v2907, 16
      %v3334 = vor.u32 %v3331, %v3332
      %v3335 = vsel %vm3068, %v3327, %v3334
      %v3337 = vshrl.u32 %v3031, 16
      %v3339 = vrot.slane %v3337, 7
      %v3341 = vshrl.u32 %v3033, 16
      %v3343 = vrot.slane %v3341, 7
      %v3344 = vshll.u32 %v3033, 16
      %v3346 = vor.u32 %v3343, %v3344
      %v3347 = vsel %vm3068, %v3339, %v3346
      %v3349 = vshrl.u32 %v2818, 16
      %v3351 = vrot.slane %v3349, 7
      %v3352 = vrot.slane %v2912, 7
      %v3353 = vor.u32 %v3352, %v2909
      %v3354 = vsel %vm3068, %v3351, %v3353
      %v3356 = vshrl.u32 %v2911, 16
      %v3358 = vrot.slane %v3356, 7
      %v3360 = vshrl.u32 %v2914, 16
      %v3362 = vrot.slane %v3360, 7
      %v3363 = vshll.u32 %v2914, 16
      %v3365 = vor.u32 %v3362, %v3363
      %v3366 = vsel %vm3068, %v3358, %v3365
      %v3368 = vshrl.u32 %v3034, 16
      %v3370 = vrot.slane %v3368, 7
      %v3372 = vshrl.u32 %v3036, 16
      %v3374 = vrot.slane %v3372, 7
      %v3375 = vshll.u32 %v3036, 16
      %v3377 = vor.u32 %v3374, %v3375
      %v3378 = vsel %vm3068, %v3370, %v3377
      %v3380 = vshrl.u32 %v2821, 16
      %v3382 = vrot.slane %v3380, 7
      %v3383 = vrot.slane %v2919, 7
      %v3384 = vor.u32 %v3383, %v2916
      %v3385 = vsel %vm3068, %v3382, %v3384
      %v3387 = vshrl.u32 %v2918, 16
      %v3389 = vrot.slane %v3387, 7
      %v3391 = vshrl.u32 %v2921, 16
      %v3393 = vrot.slane %v3391, 7
      %v3394 = vshll.u32 %v2921, 16
      %v3396 = vor.u32 %v3393, %v3394
      %v3397 = vsel %vm3068, %v3389, %v3396
      %v3399 = vshrl.u32 %v3037, 16
      %v3401 = vrot.slane %v3399, 7
      %v3403 = vshrl.u32 %v3039, 16
      %v3405 = vrot.slane %v3403, 7
      %v3406 = vshll.u32 %v3039, 16
      %v3408 = vor.u32 %v3405, %v3406
      %v3409 = vsel %vm3068, %v3401, %v3408
      %v3411 = vshrl.u32 %v2824, 16
      %v3413 = vrot.slane %v3411, 7
      %v3414 = vrot.slane %v2926, 7
      %v3415 = vor.u32 %v3414, %v2923
      %v3416 = vsel %vm3068, %v3413, %v3415
      %v3418 = vshrl.u32 %v2925, 16
      %v3420 = vrot.slane %v3418, 7
      %v3422 = vshrl.u32 %v2928, 16
      %v3424 = vrot.slane %v3422, 7
      %v3425 = vshll.u32 %v2928, 16
      %v3427 = vor.u32 %v3424, %v3425
      %v3428 = vsel %vm3068, %v3420, %v3427
      %v3430 = vshrl.u32 %v3040, 16
      %v3432 = vrot.slane %v3430, 7
      %v3434 = vshrl.u32 %v3042, 16
      %v3436 = vrot.slane %v3434, 7
      %v3437 = vshll.u32 %v3042, 16
      %v3439 = vor.u32 %v3436, %v3437
      %v3440 = vsel %vm3068, %v3432, %v3439
      %v3442 = vshrl.u32 %v2827, 16
      %v3444 = vrot.slane %v3442, 7
      %v3445 = vrot.slane %v2933, 7
      %v3446 = vor.u32 %v3445, %v2930
      %v3447 = vsel %vm3068, %v3444, %v3446
      %v3449 = vshrl.u32 %v2932, 16
      %v3451 = vrot.slane %v3449, 7
      %v3453 = vshrl.u32 %v2935, 16
      %v3455 = vrot.slane %v3453, 7
      %v3456 = vshll.u32 %v2935, 16
      %v3458 = vor.u32 %v3455, %v3456
      %v3459 = vsel %vm3068, %v3451, %v3458
      %v3461 = vshrl.u32 %v3043, 16
      %v3463 = vrot.slane %v3461, 7
      %v3465 = vshrl.u32 %v3045, 16
      %v3467 = vrot.slane %v3465, 7
      %v3468 = vshll.u32 %v3045, 16
      %v3470 = vor.u32 %v3467, %v3468
      %v3471 = vsel %vm3068, %v3463, %v3470
      %v3473 = vshrl.u32 %v2830, 16
      %v3475 = vrot.slane %v3473, 7
      %v3476 = vrot.slane %v2940, 7
      %v3477 = vor.u32 %v3476, %v2937
      %v3478 = vsel %vm3068, %v3475, %v3477
      %v3480 = vshrl.u32 %v2939, 16
      %v3482 = vrot.slane %v3480, 7
      %v3484 = vshrl.u32 %v2942, 16
      %v3486 = vrot.slane %v3484, 7
      %v3487 = vshll.u32 %v2942, 16
      %v3489 = vor.u32 %v3486, %v3487
      %v3490 = vsel %vm3068, %v3482, %v3489
      %v3492 = vshrl.u32 %v3046, 16
      %v3494 = vrot.slane %v3492, 7
      %v3496 = vshrl.u32 %v3048, 16
      %v3498 = vrot.slane %v3496, 7
      %v3499 = vshll.u32 %v3048, 16
      %v3501 = vor.u32 %v3498, %v3499
      %v3502 = vsel %vm3068, %v3494, %v3501
      %v3504 = vshrl.u32 %v2833, 16
      %v3506 = vrot.slane %v3504, 7
      %v3507 = vrot.slane %v2947, 7
      %v3508 = vor.u32 %v3507, %v2944
      %v3509 = vsel %vm3068, %v3506, %v3508
      %v3511 = vshrl.u32 %v2946, 16
      %v3513 = vrot.slane %v3511, 7
      %v3515 = vshrl.u32 %v2949, 16
      %v3517 = vrot.slane %v3515, 7
      %v3518 = vshll.u32 %v2949, 16
      %v3520 = vor.u32 %v3517, %v3518
      %v3521 = vsel %vm3068, %v3513, %v3520
      %v3523 = vshrl.u32 %v3049, 16
      %v3525 = vrot.slane %v3523, 7
      %v3527 = vshrl.u32 %v3051, 16
      %v3529 = vrot.slane %v3527, 7
      %v3530 = vshll.u32 %v3051, 16
      %v3532 = vor.u32 %v3529, %v3530
      %v3533 = vsel %vm3068, %v3525, %v3532
      %v3535 = vshrl.u32 %v2836, 16
      %v3537 = vrot.slane %v3535, 7
      %v3538 = vrot.slane %v2954, 7
      %v3539 = vor.u32 %v3538, %v2951
      %v3540 = vsel %vm3068, %v3537, %v3539
      %v3542 = vshrl.u32 %v2953, 16
      %v3544 = vrot.slane %v3542, 7
      %v3546 = vshrl.u32 %v2956, 16
      %v3548 = vrot.slane %v3546, 7
      %v3549 = vshll.u32 %v2956, 16
      %v3551 = vor.u32 %v3548, %v3549
      %v3552 = vsel %vm3068, %v3544, %v3551
      %v3554 = vshrl.u32 %v3052, 16
      %v3556 = vrot.slane %v3554, 7
      %v3558 = vshrl.u32 %v3054, 16
      %v3560 = vrot.slane %v3558, 7
      %v3561 = vshll.u32 %v3054, 16
      %v3563 = vor.u32 %v3560, %v3561
      %v3564 = vsel %vm3068, %v3556, %v3563
      %v3613 = vld [vmem:[%s3] sm:$0xf]
      %v3614 = vld [vmem:[%s3 + $0x4] sm:$0xf]
      %v3615 = vld [vmem:[%s3 + $0x8] sm:$0xf]
      %v3616 = vld [vmem:[%s3 + $0xc] sm:$0xf]
      %v3617 = vld [vmem:[%s3 + $0x10] sm:$0xf]
      %v3618 = vld [vmem:[%s3 + $0x14] sm:$0xf]
      %v3619 = vld [vmem:[%s3 + $0x18] sm:$0xf]
      %v3620 = vld [vmem:[%s3 + $0x1c] sm:$0xf]
      %v3621 = vld [vmem:[%s3 + $0x20] sm:$0xf]
      %v3622 = vld [vmem:[%s3 + $0x24] sm:$0xf]
      %v3623 = vld [vmem:[%s3 + $0x28] sm:$0xf]
      %v3624 = vld [vmem:[%s3 + $0x2c] sm:$0xf]
      %v3625 = vld [vmem:[%s3 + $0x30] sm:$0xf]
      %v3626 = vld [vmem:[%s3 + $0x34] sm:$0xf]
      %v3627 = vld [vmem:[%s3 + $0x38] sm:$0xf]
      %v3628 = vld [vmem:[%s3 + $0x3c] sm:$0xf]
      %v3629 = vld [vmem:[%s3 + $0x40] sm:$0xf]
      %v3630 = vld [vmem:[%s3 + $0x44] sm:$0xf]
      %v3631 = vld [vmem:[%s3 + $0x48] sm:$0xf]
      %v3632 = vld [vmem:[%s3 + $0x4c] sm:$0xf]
      %v3633 = vld [vmem:[%s3 + $0x50] sm:$0xf]
      %v3634 = vld [vmem:[%s3 + $0x54] sm:$0xf]
      %v3635 = vld [vmem:[%s3 + $0x58] sm:$0xf]
      %v3636 = vld [vmem:[%s3 + $0x5c] sm:$0xf]
      %v3637 = vld [vmem:[%s3 + $0x60] sm:$0xf]
      %v3638 = vld [vmem:[%s3 + $0x64] sm:$0xf]
      %v3639 = vld [vmem:[%s3 + $0x68] sm:$0xf]
      %v3640 = vld [vmem:[%s3 + $0x6c] sm:$0xf]
      %v3641 = vld [vmem:[%s3 + $0x70] sm:$0xf]
      %v3642 = vld [vmem:[%s3 + $0x74] sm:$0xf]
      %v3643 = vld [vmem:[%s3 + $0x78] sm:$0xf]
      %v3644 = vld [vmem:[%s3 + $0x7c] sm:$0xf]
      %v3645 = vld [vmem:[%s3 + $0x80] sm:$0xf]
      %v3646 = vld [vmem:[%s3 + $0x84] sm:$0xf]
      %v3647 = vld [vmem:[%s3 + $0x88] sm:$0xf]
      %v3648 = vld [vmem:[%s3 + $0x8c] sm:$0xf]
      %v3649 = vld [vmem:[%s3 + $0x90] sm:$0xf]
      %v3650 = vld [vmem:[%s3 + $0x94] sm:$0xf]
      %v3651 = vld [vmem:[%s3 + $0x98] sm:$0xf]
      %v3652 = vld [vmem:[%s3 + $0x9c] sm:$0xf]
      %v3653 = vld [vmem:[%s3 + $0xa0] sm:$0xf]
      %v3654 = vld [vmem:[%s3 + $0xa4] sm:$0xf]
      %v3655 = vld [vmem:[%s3 + $0xa8] sm:$0xf]
      %v3656 = vld [vmem:[%s3 + $0xac] sm:$0xf]
      %v3657 = vld [vmem:[%s3 + $0xb0] sm:$0xf]
      %v3658 = vld [vmem:[%s3 + $0xb4] sm:$0xf]
      %v3659 = vld [vmem:[%s3 + $0xb8] sm:$0xf]
      %v3660 = vld [vmem:[%s3 + $0xbc] sm:$0xf]
      %v3709 = vunpack.c.l.b16 %v3613
      %v3710 = vunpack.c.l.b16 %v3614
      %v3711 = vunpack.c.l.b16 %v3615
      %v3712 = vunpack.c.l.b16 %v3616
      %v3713 = vunpack.c.l.b16 %v3617
      %v3714 = vunpack.c.l.b16 %v3618
      %v3715 = vunpack.c.l.b16 %v3619
      %v3716 = vunpack.c.l.b16 %v3620
      %v3717 = vunpack.c.l.b16 %v3621
      %v3718 = vunpack.c.l.b16 %v3622
      %v3719 = vunpack.c.l.b16 %v3623
      %v3720 = vunpack.c.l.b16 %v3624
      %v3721 = vunpack.c.l.b16 %v3625
      %v3722 = vunpack.c.l.b16 %v3626
      %v3723 = vunpack.c.l.b16 %v3627
      %v3724 = vunpack.c.l.b16 %v3628
      %v3725 = vunpack.c.l.b16 %v3629
      %v3726 = vunpack.c.l.b16 %v3630
      %v3727 = vunpack.c.l.b16 %v3631
      %v3728 = vunpack.c.l.b16 %v3632
      %v3729 = vunpack.c.l.b16 %v3633
      %v3730 = vunpack.c.l.b16 %v3634
      %v3731 = vunpack.c.l.b16 %v3635
      %v3732 = vunpack.c.l.b16 %v3636
      %v3733 = vunpack.c.l.b16 %v3637
      %v3734 = vunpack.c.l.b16 %v3638
      %v3735 = vunpack.c.l.b16 %v3639
      %v3736 = vunpack.c.l.b16 %v3640
      %v3737 = vunpack.c.l.b16 %v3641
      %v3738 = vunpack.c.l.b16 %v3642
      %v3739 = vunpack.c.l.b16 %v3643
      %v3740 = vunpack.c.l.b16 %v3644
      %v3741 = vunpack.c.l.b16 %v3645
      %v3742 = vunpack.c.l.b16 %v3646
      %v3743 = vunpack.c.l.b16 %v3647
      %v3744 = vunpack.c.l.b16 %v3648
      %v3745 = vunpack.c.l.b16 %v3649
      %v3746 = vunpack.c.l.b16 %v3650
      %v3747 = vunpack.c.l.b16 %v3651
      %v3748 = vunpack.c.l.b16 %v3652
      %v3749 = vunpack.c.l.b16 %v3653
      %v3750 = vunpack.c.l.b16 %v3654
      %v3751 = vunpack.c.l.b16 %v3655
      %v3752 = vunpack.c.l.b16 %v3656
      %v3753 = vunpack.c.l.b16 %v3657
      %v3754 = vunpack.c.l.b16 %v3658
      %v3755 = vunpack.c.l.b16 %v3659
      %v3756 = vunpack.c.l.b16 %v3660
      %v3757 = vpack.c.b16 %v3710, %v3709
      %v3758 = vpack.c.b16 %v3712, %v3711
      %v3759 = vpack.c.b16 %v3714, %v3713
      %v3760 = vpack.c.b16 %v3716, %v3715
      %v3761 = vpack.c.b16 %v3718, %v3717
      %v3762 = vpack.c.b16 %v3720, %v3719
      %v3763 = vpack.c.b16 %v3722, %v3721
      %v3764 = vpack.c.b16 %v3724, %v3723
      %v3765 = vpack.c.b16 %v3726, %v3725
      %v3766 = vpack.c.b16 %v3728, %v3727
      %v3767 = vpack.c.b16 %v3730, %v3729
      %v3768 = vpack.c.b16 %v3732, %v3731
      %v3769 = vpack.c.b16 %v3734, %v3733
      %v3770 = vpack.c.b16 %v3736, %v3735
      %v3771 = vpack.c.b16 %v3738, %v3737
      %v3772 = vpack.c.b16 %v3740, %v3739
      %v3773 = vpack.c.b16 %v3742, %v3741
      %v3774 = vpack.c.b16 %v3744, %v3743
      %v3775 = vpack.c.b16 %v3746, %v3745
      %v3776 = vpack.c.b16 %v3748, %v3747
      %v3777 = vpack.c.b16 %v3750, %v3749
      %v3778 = vpack.c.b16 %v3752, %v3751
      %v3779 = vpack.c.b16 %v3754, %v3753
      %v3780 = vpack.c.b16 %v3756, %v3755
      %3805 = vmatprep.subr.bf16.mxu0 0
      %3806 = vmatpush1.bf16.msra.mxu0 %v3757
      %3807 = vmatprep.subr.bf16.mxu0 0
      %3808 = vmatpush1.bf16.msra.mxu0 %v3758
      %3809 = vmatprep.subr.bf16.mxu0 0
      %3810 = vmatpush1.bf16.msra.mxu0 %v3759
      %3811 = vmatprep.subr.bf16.mxu0 0
      %3812 = vmatpush1.bf16.msra.mxu0 %v3760
      %3813 = vmatprep.subr.bf16.mxu0 0
      %3814 = vmatpush1.bf16.msra.mxu0 %v3761
      %3815 = vmatprep.subr.bf16.mxu0 0
      %3816 = vmatpush1.bf16.msra.mxu0 %v3762
      %3817 = vmatprep.subr.bf16.mxu0 0
      %3818 = vmatpush1.bf16.msra.mxu0 %v3763
      %3819 = vmatprep.subr.bf16.mxu0 0
      %3820 = vmatpush1.bf16.msra.mxu0 %v3764
      %3821 = vmatprep.subr.bf16.mxu0 0
      %3822 = vmatpush1.bf16.msra.mxu0 %v3765
      %3823 = vmatprep.subr.bf16.mxu0 0
      %3824 = vmatpush1.bf16.msra.mxu0 %v3766
      %3825 = vmatprep.subr.bf16.mxu0 0
      %3826 = vmatpush1.bf16.msra.mxu0 %v3767
      %3827 = vmatprep.subr.bf16.mxu0 0
      %3828 = vmatpush1.bf16.msra.mxu0 %v3768
      %3829 = vmatprep.subr.bf16.mxu0 0
      %3830 = vmatpush1.bf16.msra.mxu0 %v3769
      %3831 = vmatprep.subr.bf16.mxu0 0
      %3832 = vmatpush1.bf16.msra.mxu0 %v3770
      %3833 = vmatprep.subr.bf16.mxu0 0
      %3834 = vmatpush1.bf16.msra.mxu0 %v3771
      %3835 = vmatprep.subr.bf16.mxu0 0
      %3836 = vmatpush1.bf16.msra.mxu0 %v3772
      %3837 = vmatprep.mubr.bf16.mxu0 %v3087
      %3838 = vmatmul.mubr.bf16.gmra.mrb[0].mxu0 %v3075
      %v3839 = vpop.f32.mrb[0].mxu0
      %v3840 = vadd.f32 0.0, %v3839
      %v3841 = vpop.f32.mrb[0].mxu0
      %v3842 = vpop.f32.mrb[0].mxu0
      %v3843 = vadd.f32 0.0, %v3842
      %v3844 = vpop.f32.mrb[0].mxu0
      %3845 = vmatprep.mubr.bf16.mxu0 %v3118
      %3846 = vmatmul.mubr.bf16.gmra.mrb[0].mxu0 %v3106
      %v3847 = vpop.f32.mrb[0].mxu0
      %v3848 = vadd.f32 0.0, %v3847
      %v3849 = vpop.f32.mrb[0].mxu0
      %v3850 = vpop.f32.mrb[0].mxu0
      %v3851 = vadd.f32 0.0, %v3850
      %v3852 = vpop.f32.mrb[0].mxu0
      %3853 = vmatprep.mubr.bf16.mxu0 %v3149
      %3854 = vmatmul.mubr.bf16.gmra.mrb[0].mxu0 %v3137
      %v3855 = vpop.f32.mrb[0].mxu0
      %v3856 = vadd.f32 0.0, %v3855
      %v3857 = vpop.f32.mrb[0].mxu0
      %v3858 = vpop.f32.mrb[0].mxu0
      %v3859 = vadd.f32 0.0, %v3858
      %v3860 = vpop.f32.mrb[0].mxu0
      %3861 = vmatprep.mubr.bf16.mxu0 %v3180
      %3862 = vmatmul.mubr.bf16.gmra.mrb[0].mxu0 %v3168
      %v3863 = vpop.f32.mrb[0].mxu0
      %v3864 = vadd.f32 0.0, %v3863
      %v3865 = vpop.f32.mrb[0].mxu0
      %v3866 = vpop.f32.mrb[0].mxu0
      %v3867 = vadd.f32 0.0, %v3866
      %v3868 = vpop.f32.mrb[0].mxu0
      %3869 = vmatprep.mubr.bf16.mxu0 %v3211
      %3870 = vmatmul.mubr.bf16.gmra.mrb[0].mxu0 %v3199
      %v3871 = vpop.f32.mrb[0].mxu0
      %v3872 = vadd.f32 0.0, %v3871
      %v3873 = vpop.f32.mrb[0].mxu0
      %v3874 = vpop.f32.mrb[0].mxu0
      %v3875 = vadd.f32 0.0, %v3874
      %v3876 = vpop.f32.mrb[0].mxu0
      %3877 = vmatprep.mubr.bf16.mxu0 %v3242
      %3878 = vmatmul.mubr.bf16.gmra.mrb[0].mxu0 %v3230
      %v3879 = vpop.f32.mrb[0].mxu0
      %v3880 = vadd.f32 0.0, %v3879
      %v3881 = vpop.f32.mrb[0].mxu0
      %v3882 = vpop.f32.mrb[0].mxu0
      %v3883 = vadd.f32 0.0, %v3882
      %v3884 = vpop.f32.mrb[0].mxu0
      %3885 = vmatprep.mubr.bf16.mxu0 %v3273
      %3886 = vmatmul.mubr.bf16.gmra.mrb[0].mxu0 %v3261
      %v3887 = vpop.f32.mrb[0].mxu0
      %v3888 = vadd.f32 0.0, %v3887
      %v3889 = vpop.f32.mrb[0].mxu0
      %v3890 = vpop.f32.mrb[0].mxu0
      %v3891 = vadd.f32 0.0, %v3890
      %v3892 = vpop.f32.mrb[0].mxu0
      %3893 = vmatprep.mubr.bf16.mxu0 %v3304
      %3894 = vmatmul.mubr.bf16.gmra.mrb[0].mxu0 %v3292
      %v3895 = vpop.f32.mrb[0].mxu0
      %v3896 = vadd.f32 0.0, %v3895
      %v3897 = vpop.f32.mrb[0].mxu0
      %v3898 = vpop.f32.mrb[0].mxu0
      %v3899 = vadd.f32 0.0, %v3898
      %v3900 = vpop.f32.mrb[0].mxu0
      %3901 = vmatprep.mubr.bf16.mxu0 %v3335
      %3902 = vmatmul.mubr.bf16.gmra.mrb[0].mxu0 %v3323
      %v3903 = vpop.f32.mrb[0].mxu0
      %v3904 = vadd.f32 0.0, %v3903
      %v3905 = vpop.f32.mrb[0].mxu0
      %v3906 = vpop.f32.mrb[0].mxu0
      %v3907 = vadd.f32 0.0, %v3906
      %v3908 = vpop.f32.mrb[0].mxu0
      %3909 = vmatprep.mubr.bf16.mxu0 %v3366
      %3910 = vmatmul.mubr.bf16.gmra.mrb[0].mxu0 %v3354
      %v3911 = vpop.f32.mrb[0].mxu0
      %v3912 = vadd.f32 0.0, %v3911
      %v3913 = vpop.f32.mrb[0].mxu0
      %v3914 = vpop.f32.mrb[0].mxu0
      %v3915 = vadd.f32 0.0, %v3914
      %v3916 = vpop.f32.mrb[0].mxu0
      %3917 = vmatprep.mubr.bf16.mxu0 %v3397
      %3918 = vmatmul.mubr.bf16.gmra.mrb[0].mxu0 %v3385
      %v3919 = vpop.f32.mrb[0].mxu0
      %v3920 = vadd.f32 0.0, %v3919
      %v3921 = vpop.f32.mrb[0].mxu0
      %v3922 = vpop.f32.mrb[0].mxu0
      %v3923 = vadd.f32 0.0, %v3922
      %v3924 = vpop.f32.mrb[0].mxu0
      %3925 = vmatprep.mubr.bf16.mxu0 %v3428
      %3926 = vmatmul.mubr.bf16.gmra.mrb[0].mxu0 %v3416
      %v3927 = vpop.f32.mrb[0].mxu0
      %v3928 = vadd.f32 0.0, %v3927
      %v3929 = vpop.f32.mrb[0].mxu0
      %v3930 = vpop.f32.mrb[0].mxu0
      %v3931 = vadd.f32 0.0, %v3930
      %v3932 = vpop.f32.mrb[0].mxu0
      %3933 = vmatprep.mubr.bf16.mxu0 %v3459
      %3934 = vmatmul.mubr.bf16.gmra.mrb[0].mxu0 %v3447
      %v3935 = vpop.f32.mrb[0].mxu0
      %v3936 = vadd.f32 0.0, %v3935
      %v3937 = vpop.f32.mrb[0].mxu0
      %v3938 = vpop.f32.mrb[0].mxu0
      %v3939 = vadd.f32 0.0, %v3938
      %v3940 = vpop.f32.mrb[0].mxu0
      %3941 = vmatprep.mubr.bf16.mxu0 %v3490
      %3942 = vmatmul.mubr.bf16.gmra.mrb[0].mxu0 %v3478
      %v3943 = vpop.f32.mrb[0].mxu0
      %v3944 = vadd.f32 0.0, %v3943
      %v3945 = vpop.f32.mrb[0].mxu0
      %v3946 = vpop.f32.mrb[0].mxu0
      %v3947 = vadd.f32 0.0, %v3946
      %v3948 = vpop.f32.mrb[0].mxu0
      %3949 = vmatprep.mubr.bf16.mxu0 %v3521
      %3950 = vmatmul.mubr.bf16.gmra.mrb[0].mxu0 %v3509
      %v3951 = vpop.f32.mrb[0].mxu0
      %v3952 = vadd.f32 0.0, %v3951
      %v3953 = vpop.f32.mrb[0].mxu0
      %v3954 = vpop.f32.mrb[0].mxu0
      %v3955 = vadd.f32 0.0, %v3954
      %v3956 = vpop.f32.mrb[0].mxu0
      %3957 = vmatprep.mubr.bf16.mxu0 %v3552
      %3958 = vmatmul.mubr.bf16.gmra.mrb[0].mxu0 %v3540
      %v3959 = vpop.f32.mrb[0].mxu0
      %v3960 = vadd.f32 0.0, %v3959
      %v3961 = vpop.f32.mrb[0].mxu0
      %v3962 = vpop.f32.mrb[0].mxu0
      %v3963 = vadd.f32 0.0, %v3962
      %v3964 = vpop.f32.mrb[0].mxu0
      %3965 = vdwg.mxu0
      %3966 = vmatprep.subr.bf16.mxu0 0
      %3967 = vmatpush1.bf16.msra.mxu0 %v3773
      %3968 = vmatprep.subr.bf16.mxu0 0
      %3969 = vmatpush1.bf16.msra.mxu0 %v3774
      %3970 = vmatprep.subr.bf16.mxu0 0
      %3971 = vmatpush1.bf16.msra.mxu0 %v3775
      %3972 = vmatprep.subr.bf16.mxu0 0
      %3973 = vmatpush1.bf16.msra.mxu0 %v3776
      %3974 = vmatprep.subr.bf16.mxu0 0
      %3975 = vmatpush1.bf16.msra.mxu0 %v3777
      %3976 = vmatprep.subr.bf16.mxu0 0
      %3977 = vmatpush1.bf16.msra.mxu0 %v3778
      %3978 = vmatprep.subr.bf16.mxu0 0
      %3979 = vmatpush1.bf16.msra.mxu0 %v3779
      %3980 = vmatprep.subr.bf16.mxu0 0
      %3981 = vmatpush1.bf16.msra.mxu0 %v3780
      %3982 = vmatprep.subr.bf16.mxu0 0
      %3983 = vmatpush1.bf16.msra.mxu0 0
      %3984 = vmatprep.subr.bf16.mxu0 0
      %3985 = vmatpush1.bf16.msra.mxu0 0
      %3986 = vmatprep.subr.bf16.mxu0 0
      %3987 = vmatpush1.bf16.msra.mxu0 0
      %3988 = vmatprep.subr.bf16.mxu0 0
      %3989 = vmatpush1.bf16.msra.mxu0 0
      %3990 = vmatprep.subr.bf16.mxu0 0
      %3991 = vmatpush1.bf16.msra.mxu0 0
      %3992 = vmatprep.subr.bf16.mxu0 0
      %3993 = vmatpush1.bf16.msra.mxu0 0
      %3994 = vmatprep.subr.bf16.mxu0 0
      %3995 = vmatpush1.bf16.msra.mxu0 0
      %3996 = vmatprep.subr.bf16.mxu0 0
      %3997 = vmatpush1.bf16.msra.mxu0 0
      %3998 = vmatprep.mubr.bf16.mxu0 0
      %3999 = vmatmul.mubr.bf16.gmra.mrb[0].mxu0 %v3099
      %v4000 = vpop.f32.mrb[0].mxu0
      %v4001 = vadd.f32 %v3840, %v4000
      %v4002 = vpop.f32.mrb[0].mxu0
      %v4003 = vpop.f32.mrb[0].mxu0
      %v4004 = vadd.f32 %v3843, %v4003
      %v4005 = vpop.f32.mrb[0].mxu0
      %4006 = vmatprep.mubr.bf16.mxu0 0
      %4007 = vmatmul.mubr.bf16.gmra.mrb[0].mxu0 %v3130
      %v4008 = vpop.f32.mrb[0].mxu0
      %v4009 = vadd.f32 %v3848, %v4008
      %v4010 = vpop.f32.mrb[0].mxu0
      %v4011 = vpop.f32.mrb[0].mxu0
      %v4012 = vadd.f32 %v3851, %v4011
      %v4013 = vpop.f32.mrb[0].mxu0
      %4014 = vmatprep.mubr.bf16.mxu0 0
      %4015 = vmatmul.mubr.bf16.gmra.mrb[0].mxu0 %v3161
      %v4016 = vpop.f32.mrb[0].mxu0
      %v4017 = vadd.f32 %v3856, %v4016
      %v4018 = vpop.f32.mrb[0].mxu0
      %v4019 = vpop.f32.mrb[0].mxu0
      %v4020 = vadd.f32 %v3859, %v4019
      %v4021 = vpop.f32.mrb[0].mxu0
      %4022 = vmatprep.mubr.bf16.mxu0 0
      %4023 = vmatmul.mubr.bf16.gmra.mrb[0].mxu0 %v3192
      %v4024 = vpop.f32.mrb[0].mxu0
      %v4025 = vadd.f32 %v3864, %v4024
      %v4026 = vpop.f32.mrb[0].mxu0
      %v4027 = vpop.f32.mrb[0].mxu0
      %v4028 = vadd.f32 %v3867, %v4027
      %v4029 = vpop.f32.mrb[0].mxu0
      %4030 = vmatprep.mubr.bf16.mxu0 0
      %4031 = vmatmul.mubr.bf16.gmra.mrb[0].mxu0 %v3223
      %v4032 = vpop.f32.mrb[0].mxu0
      %v4033 = vadd.f32 %v3872, %v4032
      %v4034 = vpop.f32.mrb[0].mxu0
      %v4035 = vpop.f32.mrb[0].mxu0
      %v4036 = vadd.f32 %v3875, %v4035
      %v4037 = vpop.f32.mrb[0].mxu0
      %4038 = vmatprep.mubr.bf16.mxu0 0
      %4039 = vmatmul.mubr.bf16.gmra.mrb[0].mxu0 %v3254
      %v4040 = vpop.f32.mrb[0].mxu0
      %v4041 = vadd.f32 %v3880, %v4040
      %v4042 = vpop.f32.mrb[0].mxu0
      %v4043 = vpop.f32.mrb[0].mxu0
      %v4044 = vadd.f32 %v3883, %v4043
      %v4045 = vpop.f32.mrb[0].mxu0
      %4046 = vmatprep.mubr.bf16.mxu0 0
      %4047 = vmatmul.mubr.bf16.gmra.mrb[0].mxu0 %v3285
      %v4048 = vpop.f32.mrb[0].mxu0
      %v4049 = vadd.f32 %v3888, %v4048
      %v4050 = vpop.f32.mrb[0].mxu0
      %v4051 = vpop.f32.mrb[0].mxu0
      %v4052 = vadd.f32 %v3891, %v4051
      %v4053 = vpop.f32.mrb[0].mxu0
      %4054 = vmatprep.mubr.bf16.mxu0 0
      %4055 = vmatmul.mubr.bf16.gmra.mrb[0].mxu0 %v3316
      %v4056 = vpop.f32.mrb[0].mxu0
      %v4057 = vadd.f32 %v3896, %v4056
      %v4058 = vpop.f32.mrb[0].mxu0
      %v4059 = vpop.f32.mrb[0].mxu0
      %v4060 = vadd.f32 %v3899, %v4059
      %v4061 = vpop.f32.mrb[0].mxu0
      %4062 = vmatprep.mubr.bf16.mxu0 0
      %4063 = vmatmul.mubr.bf16.gmra.mrb[0].mxu0 %v3347
      %v4064 = vpop.f32.mrb[0].mxu0
      %v4065 = vadd.f32 %v3904, %v4064
      %v4066 = vpop.f32.mrb[0].mxu0
      %v4067 = vpop.f32.mrb[0].mxu0
      %v4068 = vadd.f32 %v3907, %v4067
      %v4069 = vpop.f32.mrb[0].mxu0
      %4070 = vmatprep.mubr.bf16.mxu0 0
      %4071 = vmatmul.mubr.bf16.gmra.mrb[0].mxu0 %v3378
      %v4072 = vpop.f32.mrb[0].mxu0
      %v4073 = vadd.f32 %v3912, %v4072
      %v4074 = vpop.f32.mrb[0].mxu0
      %v4075 = vpop.f32.mrb[0].mxu0
      %v4076 = vadd.f32 %v3915, %v4075
      %v4077 = vpop.f32.mrb[0].mxu0
      %4078 = vmatprep.mubr.bf16.mxu0 0
      %4079 = vmatmul.mubr.bf16.gmra.mrb[0].mxu0 %v3409
      %v4080 = vpop.f32.mrb[0].mxu0
      %v4081 = vadd.f32 %v3920, %v4080
      %v4082 = vpop.f32.mrb[0].mxu0
      %v4083 = vpop.f32.mrb[0].mxu0
      %v4084 = vadd.f32 %v3923, %v4083
      %v4085 = vpop.f32.mrb[0].mxu0
      %4086 = vmatprep.mubr.bf16.mxu0 0
      %4087 = vmatmul.mubr.bf16.gmra.mrb[0].mxu0 %v3440
      %v4088 = vpop.f32.mrb[0].mxu0
      %v4089 = vadd.f32 %v3928, %v4088
      %v4090 = vpop.f32.mrb[0].mxu0
      %v4091 = vpop.f32.mrb[0].mxu0
      %v4092 = vadd.f32 %v3931, %v4091
      %v4093 = vpop.f32.mrb[0].mxu0
      %4094 = vmatprep.mubr.bf16.mxu0 0
      %4095 = vmatmul.mubr.bf16.gmra.mrb[0].mxu0 %v3471
      %v4096 = vpop.f32.mrb[0].mxu0
      %v4097 = vadd.f32 %v3936, %v4096
      %v4098 = vpop.f32.mrb[0].mxu0
      %v4099 = vpop.f32.mrb[0].mxu0
      %v4100 = vadd.f32 %v3939, %v4099
      %v4101 = vpop.f32.mrb[0].mxu0
      %4102 = vmatprep.mubr.bf16.mxu0 0
      %4103 = vmatmul.mubr.bf16.gmra.mrb[0].mxu0 %v3502
      %v4104 = vpop.f32.mrb[0].mxu0
      %v4105 = vadd.f32 %v3944, %v4104
      %v4106 = vpop.f32.mrb[0].mxu0
      %v4107 = vpop.f32.mrb[0].mxu0
      %v4108 = vadd.f32 %v3947, %v4107
      %v4109 = vpop.f32.mrb[0].mxu0
      %4110 = vmatprep.mubr.bf16.mxu0 0
      %4111 = vmatmul.mubr.bf16.gmra.mrb[0].mxu0 %v3533
      %v4112 = vpop.f32.mrb[0].mxu0
      %v4113 = vadd.f32 %v3952, %v4112
      %v4114 = vpop.f32.mrb[0].mxu0
      %v4115 = vpop.f32.mrb[0].mxu0
      %v4116 = vadd.f32 %v3955, %v4115
      %v4117 = vpop.f32.mrb[0].mxu0
      %4118 = vmatprep.mubr.bf16.mxu0 0
      %4119 = vmatmul.mubr.bf16.gmra.mrb[0].mxu0 %v3564
      %v4120 = vpop.f32.mrb[0].mxu0
      %v4121 = vadd.f32 %v3960, %v4120
      %v4122 = vpop.f32.mrb[0].mxu0
      %v4123 = vpop.f32.mrb[0].mxu0
      %v4124 = vadd.f32 %v3963, %v4123
      %v4125 = vpop.f32.mrb[0].mxu0
      %4126 = vdwg.mxu0
      %v4127 = vadd.f32 %v3066, %v4001
      %v4128 = vadd.f32 %v3066, %v4004
      %v4129 = vadd.f32 %v3066, %v4009
      %v4130 = vadd.f32 %v3066, %v4012
      %v4131 = vadd.f32 %v3066, %v4017
      %v4132 = vadd.f32 %v3066, %v4020
      %v4133 = vadd.f32 %v3066, %v4025
      %v4134 = vadd.f32 %v3066, %v4028
      %v4135 = vadd.f32 %v3066, %v4033
      %v4136 = vadd.f32 %v3066, %v4036
      %v4137 = vadd.f32 %v3066, %v4041
      %v4138 = vadd.f32 %v3066, %v4044
      %v4139 = vadd.f32 %v3066, %v4049
      %v4140 = vadd.f32 %v3066, %v4052
      %v4141 = vadd.f32 %v3066, %v4057
      %v4142 = vadd.f32 %v3066, %v4060
      %v4143 = vadd.f32 %v3066, %v4065
      %v4144 = vadd.f32 %v3066, %v4068
      %v4145 = vadd.f32 %v3066, %v4073
      %v4146 = vadd.f32 %v3066, %v4076
      %v4147 = vadd.f32 %v3066, %v4081
      %v4148 = vadd.f32 %v3066, %v4084
      %v4149 = vadd.f32 %v3066, %v4089
      %v4150 = vadd.f32 %v3066, %v4092
      %v4151 = vadd.f32 %v3066, %v4097
      %v4152 = vadd.f32 %v3066, %v4100
      %v4153 = vadd.f32 %v3066, %v4105
      %v4154 = vadd.f32 %v3066, %v4108
      %v4155 = vadd.f32 %v3066, %v4113
      %v4156 = vadd.f32 %v3066, %v4116
      %v4157 = vadd.f32 %v3066, %v4121
      %v4158 = vadd.f32 %v3066, %v4124
      %v4160 = vshrl.u32 %v2839, 16
      %v4162 = vrot.slane %v4160, 7
      %v4163 = vrot.slane %v2961, 7
      %v4164 = vor.u32 %v4163, %v2958
      %v4165 = vsel %vm3068, %v4162, %v4164
      %v4167 = vshrl.u32 %v2960, 16
      %v4169 = vrot.slane %v4167, 7
      %v4171 = vshrl.u32 %v2963, 16
      %v4173 = vrot.slane %v4171, 7
      %v4174 = vshll.u32 %v2963, 16
      %v4176 = vor.u32 %v4173, %v4174
      %v4177 = vsel %vm3068, %v4169, %v4176
      %v4179 = vshrl.u32 %v3055, 16
      %v4181 = vrot.slane %v4179, 7
      %v4183 = vshrl.u32 %v3057, 16
      %v4185 = vrot.slane %v4183, 7
      %v4186 = vshll.u32 %v3057, 16
      %v4188 = vor.u32 %v4185, %v4186
      %v4189 = vsel %vm3068, %v4181, %v4188
      %s4193 = scalar_lea.vmem %s3, 192
      %v4194 = vld [vmem:[%s4193] sm:$0xf]
      %v4195 = vld [vmem:[%s4193 + $0x4] sm:$0xf]
      %v4196 = vld [vmem:[%s4193 + $0x8] sm:$0xf]
      %v4197 = vld [vmem:[%s4193 + $0xc] sm:$0xf]
      %v4198 = vld [vmem:[%s4193 + $0x10] sm:$0xf]
      %v4199 = vld [vmem:[%s4193 + $0x14] sm:$0xf]
      %v4200 = vld [vmem:[%s4193 + $0x18] sm:$0xf]
      %v4201 = vld [vmem:[%s4193 + $0x1c] sm:$0xf]
      %v4202 = vld [vmem:[%s4193 + $0x20] sm:$0xf]
      %v4203 = vld [vmem:[%s4193 + $0x24] sm:$0xf]
      %v4204 = vld [vmem:[%s4193 + $0x28] sm:$0xf]
      %v4205 = vld [vmem:[%s4193 + $0x2c] sm:$0xf]
      %v4206 = vld [vmem:[%s4193 + $0x30] sm:$0xf]
      %v4207 = vld [vmem:[%s4193 + $0x34] sm:$0xf]
      %v4208 = vld [vmem:[%s4193 + $0x38] sm:$0xf]
      %v4209 = vld [vmem:[%s4193 + $0x3c] sm:$0xf]
      %v4210 = vld [vmem:[%s4193 + $0x40] sm:$0xf]
      %v4211 = vld [vmem:[%s4193 + $0x44] sm:$0xf]
      %v4212 = vld [vmem:[%s4193 + $0x48] sm:$0xf]
      %v4213 = vld [vmem:[%s4193 + $0x4c] sm:$0xf]
      %v4214 = vld [vmem:[%s4193 + $0x50] sm:$0xf]
      %v4215 = vld [vmem:[%s4193 + $0x54] sm:$0xf]
      %v4216 = vld [vmem:[%s4193 + $0x58] sm:$0xf]
      %v4217 = vld [vmem:[%s4193 + $0x5c] sm:$0xf]
      %v4218 = vld [vmem:[%s4193 + $0x60] sm:$0xf]
      %v4219 = vld [vmem:[%s4193 + $0x64] sm:$0xf]
      %v4220 = vld [vmem:[%s4193 + $0x68] sm:$0xf]
      %v4221 = vld [vmem:[%s4193 + $0x6c] sm:$0xf]
      %v4222 = vld [vmem:[%s4193 + $0x70] sm:$0xf]
      %v4223 = vld [vmem:[%s4193 + $0x74] sm:$0xf]
      %v4224 = vld [vmem:[%s4193 + $0x78] sm:$0xf]
      %v4225 = vld [vmem:[%s4193 + $0x7c] sm:$0xf]
      %v4226 = vld [vmem:[%s4193 + $0x80] sm:$0xf]
      %v4227 = vld [vmem:[%s4193 + $0x84] sm:$0xf]
      %v4228 = vld [vmem:[%s4193 + $0x88] sm:$0xf]
      %v4229 = vld [vmem:[%s4193 + $0x8c] sm:$0xf]
      %v4230 = vld [vmem:[%s4193 + $0x90] sm:$0xf]
      %v4231 = vld [vmem:[%s4193 + $0x94] sm:$0xf]
      %v4232 = vld [vmem:[%s4193 + $0x98] sm:$0xf]
      %v4233 = vld [vmem:[%s4193 + $0x9c] sm:$0xf]
      %v4234 = vld [vmem:[%s4193 + $0xa0] sm:$0xf]
      %v4235 = vld [vmem:[%s4193 + $0xa4] sm:$0xf]
      %v4236 = vld [vmem:[%s4193 + $0xa8] sm:$0xf]
      %v4237 = vld [vmem:[%s4193 + $0xac] sm:$0xf]
      %v4238 = vld [vmem:[%s4193 + $0xb0] sm:$0xf]
      %v4239 = vld [vmem:[%s4193 + $0xb4] sm:$0xf]
      %v4240 = vld [vmem:[%s4193 + $0xb8] sm:$0xf]
      %v4241 = vld [vmem:[%s4193 + $0xbc] sm:$0xf]
      %v4290 = vunpack.c.l.b16 %v4194
      %v4291 = vunpack.c.l.b16 %v4195
      %v4292 = vunpack.c.l.b16 %v4196
      %v4293 = vunpack.c.l.b16 %v4197
      %v4294 = vunpack.c.l.b16 %v4198
      %v4295 = vunpack.c.l.b16 %v4199
      %v4296 = vunpack.c.l.b16 %v4200
      %v4297 = vunpack.c.l.b16 %v4201
      %v4298 = vunpack.c.l.b16 %v4202
      %v4299 = vunpack.c.l.b16 %v4203
      %v4300 = vunpack.c.l.b16 %v4204
      %v4301 = vunpack.c.l.b16 %v4205
      %v4302 = vunpack.c.l.b16 %v4206
      %v4303 = vunpack.c.l.b16 %v4207
      %v4304 = vunpack.c.l.b16 %v4208
      %v4305 = vunpack.c.l.b16 %v4209
      %v4306 = vunpack.c.l.b16 %v4210
      %v4307 = vunpack.c.l.b16 %v4211
      %v4308 = vunpack.c.l.b16 %v4212
      %v4309 = vunpack.c.l.b16 %v4213
      %v4310 = vunpack.c.l.b16 %v4214
      %v4311 = vunpack.c.l.b16 %v4215
      %v4312 = vunpack.c.l.b16 %v4216
      %v4313 = vunpack.c.l.b16 %v4217
      %v4314 = vunpack.c.l.b16 %v4218
      %v4315 = vunpack.c.l.b16 %v4219
      %v4316 = vunpack.c.l.b16 %v4220
      %v4317 = vunpack.c.l.b16 %v4221
      %v4318 = vunpack.c.l.b16 %v4222
      %v4319 = vunpack.c.l.b16 %v4223
      %v4320 = vunpack.c.l.b16 %v4224
      %v4321 = vunpack.c.l.b16 %v4225
      %v4322 = vunpack.c.l.b16 %v4226
      %v4323 = vunpack.c.l.b16 %v4227
      %v4324 = vunpack.c.l.b16 %v4228
      %v4325 = vunpack.c.l.b16 %v4229
      %v4326 = vunpack.c.l.b16 %v4230
      %v4327 = vunpack.c.l.b16 %v4231
      %v4328 = vunpack.c.l.b16 %v4232
      %v4329 = vunpack.c.l.b16 %v4233
      %v4330 = vunpack.c.l.b16 %v4234
      %v4331 = vunpack.c.l.b16 %v4235
      %v4332 = vunpack.c.l.b16 %v4236
      %v4333 = vunpack.c.l.b16 %v4237
      %v4334 = vunpack.c.l.b16 %v4238
      %v4335 = vunpack.c.l.b16 %v4239
      %v4336 = vunpack.c.l.b16 %v4240
      %v4337 = vunpack.c.l.b16 %v4241
      %v4338 = vpack.c.b16 %v4291, %v4290
      %v4339 = vpack.c.b16 %v4293, %v4292
      %v4340 = vpack.c.b16 %v4295, %v4294
      %v4341 = vpack.c.b16 %v4297, %v4296
      %v4342 = vpack.c.b16 %v4299, %v4298
      %v4343 = vpack.c.b16 %v4301, %v4300
      %v4344 = vpack.c.b16 %v4303, %v4302
      %v4345 = vpack.c.b16 %v4305, %v4304
      %v4346 = vpack.c.b16 %v4307, %v4306
      %v4347 = vpack.c.b16 %v4309, %v4308
      %v4348 = vpack.c.b16 %v4311, %v4310
      %v4349 = vpack.c.b16 %v4313, %v4312
      %v4350 = vpack.c.b16 %v4315, %v4314
      %v4351 = vpack.c.b16 %v4317, %v4316
      %v4352 = vpack.c.b16 %v4319, %v4318
      %v4353 = vpack.c.b16 %v4321, %v4320
      %v4354 = vpack.c.b16 %v4323, %v4322
      %v4355 = vpack.c.b16 %v4325, %v4324
      %v4356 = vpack.c.b16 %v4327, %v4326
      %v4357 = vpack.c.b16 %v4329, %v4328
      %v4358 = vpack.c.b16 %v4331, %v4330
      %v4359 = vpack.c.b16 %v4333, %v4332
      %v4360 = vpack.c.b16 %v4335, %v4334
      %v4361 = vpack.c.b16 %v4337, %v4336
      %4386 = vmatprep.subr.bf16.mxu0 0
      %4387 = vmatpush1.bf16.msra.mxu0 %v4338
      %4388 = vmatprep.subr.bf16.mxu0 0
      %4389 = vmatpush1.bf16.msra.mxu0 %v4339
      %4390 = vmatprep.subr.bf16.mxu0 0
      %4391 = vmatpush1.bf16.msra.mxu0 %v4340
      %4392 = vmatprep.subr.bf16.mxu0 0
      %4393 = vmatpush1.bf16.msra.mxu0 %v4341
      %4394 = vmatprep.subr.bf16.mxu0 0
      %4395 = vmatpush1.bf16.msra.mxu0 %v4342
      %4396 = vmatprep.subr.bf16.mxu0 0
      %4397 = vmatpush1.bf16.msra.mxu0 %v4343
      %4398 = vmatprep.subr.bf16.mxu0 0
      %4399 = vmatpush1.bf16.msra.mxu0 %v4344
      %4400 = vmatprep.subr.bf16.mxu0 0
      %4401 = vmatpush1.bf16.msra.mxu0 %v4345
      %4402 = vmatprep.subr.bf16.mxu0 0
      %4403 = vmatpush1.bf16.msra.mxu0 %v4346
      %4404 = vmatprep.subr.bf16.mxu0 0
      %4405 = vmatpush1.bf16.msra.mxu0 %v4347
      %4406 = vmatprep.subr.bf16.mxu0 0
      %4407 = vmatpush1.bf16.msra.mxu0 %v4348
      %4408 = vmatprep.subr.bf16.mxu0 0
      %4409 = vmatpush1.bf16.msra.mxu0 %v4349
      %4410 = vmatprep.subr.bf16.mxu0 0
      %4411 = vmatpush1.bf16.msra.mxu0 %v4350
      %4412 = vmatprep.subr.bf16.mxu0 0
      %4413 = vmatpush1.bf16.msra.mxu0 %v4351
      %4414 = vmatprep.subr.bf16.mxu0 0
      %4415 = vmatpush1.bf16.msra.mxu0 %v4352
      %4416 = vmatprep.subr.bf16.mxu0 0
      %4417 = vmatpush1.bf16.msra.mxu0 %v4353
      %4418 = vmatprep.mubr.bf16.mxu0 %v3118
      %4419 = vmatmul.mubr.bf16.gmra.mrb[0].mxu0 %v3106
      %v4420 = vpop.f32.mrb[0].mxu0
      %v4421 = vadd.f32 0.0, %v4420
      %v4422 = vpop.f32.mrb[0].mxu0
      %v4423 = vpop.f32.mrb[0].mxu0
      %v4424 = vadd.f32 0.0, %v4423
      %v4425 = vpop.f32.mrb[0].mxu0
      %4426 = vmatprep.mubr.bf16.mxu0 %v3149
      %4427 = vmatmul.mubr.bf16.gmra.mrb[0].mxu0 %v3137
      %v4428 = vpop.f32.mrb[0].mxu0
      %v4429 = vadd.f32 0.0, %v4428
      %v4430 = vpop.f32.mrb[0].mxu0
      %v4431 = vpop.f32.mrb[0].mxu0
      %v4432 = vadd.f32 0.0, %v4431
      %v4433 = vpop.f32.mrb[0].mxu0
      %4434 = vmatprep.mubr.bf16.mxu0 %v3180
      %4435 = vmatmul.mubr.bf16.gmra.mrb[0].mxu0 %v3168
      %v4436 = vpop.f32.mrb[0].mxu0
      %v4437 = vadd.f32 0.0, %v4436
      %v4438 = vpop.f32.mrb[0].mxu0
      %v4439 = vpop.f32.mrb[0].mxu0
      %v4440 = vadd.f32 0.0, %v4439
      %v4441 = vpop.f32.mrb[0].mxu0
      %4442 = vmatprep.mubr.bf16.mxu0 %v3211
      %4443 = vmatmul.mubr.bf16.gmra.mrb[0].mxu0 %v3199
      %v4444 = vpop.f32.mrb[0].mxu0
      %v4445 = vadd.f32 0.0, %v4444
      %v4446 = vpop.f32.mrb[0].mxu0
      %v4447 = vpop.f32.mrb[0].mxu0
      %v4448 = vadd.f32 0.0, %v4447
      %v4449 = vpop.f32.mrb[0].mxu0
      %4450 = vmatprep.mubr.bf16.mxu0 %v3242
      %4451 = vmatmul.mubr.bf16.gmra.mrb[0].mxu0 %v3230
      %v4452 = vpop.f32.mrb[0].mxu0
      %v4453 = vadd.f32 0.0, %v4452
      %v4454 = vpop.f32.mrb[0].mxu0
      %v4455 = vpop.f32.mrb[0].mxu0
      %v4456 = vadd.f32 0.0, %v4455
      %v4457 = vpop.f32.mrb[0].mxu0
      %4458 = vmatprep.mubr.bf16.mxu0 %v3273
      %4459 = vmatmul.mubr.bf16.gmra.mrb[0].mxu0 %v3261
      %v4460 = vpop.f32.mrb[0].mxu0
      %v4461 = vadd.f32 0.0, %v4460
      %v4462 = vpop.f32.mrb[0].mxu0
      %v4463 = vpop.f32.mrb[0].mxu0
      %v4464 = vadd.f32 0.0, %v4463
      %v4465 = vpop.f32.mrb[0].mxu0
      %4466 = vmatprep.mubr.bf16.mxu0 %v3304
      %4467 = vmatmul.mubr.bf16.gmra.mrb[0].mxu0 %v3292
      %v4468 = vpop.f32.mrb[0].mxu0
      %v4469 = vadd.f32 0.0, %v4468
      %v4470 = vpop.f32.mrb[0].mxu0
      %v4471 = vpop.f32.mrb[0].mxu0
      %v4472 = vadd.f32 0.0, %v4471
      %v4473 = vpop.f32.mrb[0].mxu0
      %4474 = vmatprep.mubr.bf16.mxu0 %v3335
      %4475 = vmatmul.mubr.bf16.gmra.mrb[0].mxu0 %v3323
      %v4476 = vpop.f32.mrb[0].mxu0
      %v4477 = vadd.f32 0.0, %v4476
      %v4478 = vpop.f32.mrb[0].mxu0
      %v4479 = vpop.f32.mrb[0].mxu0
      %v4480 = vadd.f32 0.0, %v4479
      %v4481 = vpop.f32.mrb[0].mxu0
      %4482 = vmatprep.mubr.bf16.mxu0 %v3366
      %4483 = vmatmul.mubr.bf16.gmra.mrb[0].mxu0 %v3354
      %v4484 = vpop.f32.mrb[0].mxu0
      %v4485 = vadd.f32 0.0, %v4484
      %v4486 = vpop.f32.mrb[0].mxu0
      %v4487 = vpop.f32.mrb[0].mxu0
      %v4488 = vadd.f32 0.0, %v4487
      %v4489 = vpop.f32.mrb[0].mxu0
      %4490 = vmatprep.mubr.bf16.mxu0 %v3397
      %4491 = vmatmul.mubr.bf16.gmra.mrb[0].mxu0 %v3385
      %v4492 = vpop.f32.mrb[0].mxu0
      %v4493 = vadd.f32 0.0, %v4492
      %v4494 = vpop.f32.mrb[0].mxu0
      %v4495 = vpop.f32.mrb[0].mxu0
      %v4496 = vadd.f32 0.0, %v4495
      %v4497 = vpop.f32.mrb[0].mxu0
      %4498 = vmatprep.mubr.bf16.mxu0 %v3428
      %4499 = vmatmul.mubr.bf16.gmra.mrb[0].mxu0 %v3416
      %v4500 = vpop.f32.mrb[0].mxu0
      %v4501 = vadd.f32 0.0, %v4500
      %v4502 = vpop.f32.mrb[0].mxu0
      %v4503 = vpop.f32.mrb[0].mxu0
      %v4504 = vadd.f32 0.0, %v4503
      %v4505 = vpop.f32.mrb[0].mxu0
      %4506 = vmatprep.mubr.bf16.mxu0 %v3459
      %4507 = vmatmul.mubr.bf16.gmra.mrb[0].mxu0 %v3447
      %v4508 = vpop.f32.mrb[0].mxu0
      %v4509 = vadd.f32 0.0, %v4508
      %v4510 = vpop.f32.mrb[0].mxu0
      %v4511 = vpop.f32.mrb[0].mxu0
      %v4512 = vadd.f32 0.0, %v4511
      %v4513 = vpop.f32.mrb[0].mxu0
      %4514 = vmatprep.mubr.bf16.mxu0 %v3490
      %4515 = vmatmul.mubr.bf16.gmra.mrb[0].mxu0 %v3478
      %v4516 = vpop.f32.mrb[0].mxu0
      %v4517 = vadd.f32 0.0, %v4516
      %v4518 = vpop.f32.mrb[0].mxu0
      %v4519 = vpop.f32.mrb[0].mxu0
      %v4520 = vadd.f32 0.0, %v4519
      %v4521 = vpop.f32.mrb[0].mxu0
      %4522 = vmatprep.mubr.bf16.mxu0 %v3521
      %4523 = vmatmul.mubr.bf16.gmra.mrb[0].mxu0 %v3509
      %v4524 = vpop.f32.mrb[0].mxu0
      %v4525 = vadd.f32 0.0, %v4524
      %v4526 = vpop.f32.mrb[0].mxu0
      %v4527 = vpop.f32.mrb[0].mxu0
      %v4528 = vadd.f32 0.0, %v4527
      %v4529 = vpop.f32.mrb[0].mxu0
      %4530 = vmatprep.mubr.bf16.mxu0 %v3552
      %4531 = vmatmul.mubr.bf16.gmra.mrb[0].mxu0 %v3540
      %v4532 = vpop.f32.mrb[0].mxu0
      %v4533 = vadd.f32 0.0, %v4532
      %v4534 = vpop.f32.mrb[0].mxu0
      %v4535 = vpop.f32.mrb[0].mxu0
      %v4536 = vadd.f32 0.0, %v4535
      %v4537 = vpop.f32.mrb[0].mxu0
      %4538 = vmatprep.mubr.bf16.mxu0 %v4177
      %4539 = vmatmul.mubr.bf16.gmra.mrb[0].mxu0 %v4165
      %v4540 = vpop.f32.mrb[0].mxu0
      %v4541 = vadd.f32 0.0, %v4540
      %v4542 = vpop.f32.mrb[0].mxu0
      %v4543 = vpop.f32.mrb[0].mxu0
      %v4544 = vadd.f32 0.0, %v4543
      %v4545 = vpop.f32.mrb[0].mxu0
      %4546 = vdwg.mxu0
      %4547 = vmatprep.subr.bf16.mxu0 0
      %4548 = vmatpush1.bf16.msra.mxu0 %v4354
      %4549 = vmatprep.subr.bf16.mxu0 0
      %4550 = vmatpush1.bf16.msra.mxu0 %v4355
      %4551 = vmatprep.subr.bf16.mxu0 0
      %4552 = vmatpush1.bf16.msra.mxu0 %v4356
      %4553 = vmatprep.subr.bf16.mxu0 0
      %4554 = vmatpush1.bf16.msra.mxu0 %v4357
      %4555 = vmatprep.subr.bf16.mxu0 0
      %4556 = vmatpush1.bf16.msra.mxu0 %v4358
      %4557 = vmatprep.subr.bf16.mxu0 0
      %4558 = vmatpush1.bf16.msra.mxu0 %v4359
      %4559 = vmatprep.subr.bf16.mxu0 0
      %4560 = vmatpush1.bf16.msra.mxu0 %v4360
      %4561 = vmatprep.subr.bf16.mxu0 0
      %4562 = vmatpush1.bf16.msra.mxu0 %v4361
      %4563 = vmatprep.subr.bf16.mxu0 0
      %4564 = vmatpush1.bf16.msra.mxu0 0
      %4565 = vmatprep.subr.bf16.mxu0 0
      %4566 = vmatpush1.bf16.msra.mxu0 0
      %4567 = vmatprep.subr.bf16.mxu0 0
      %4568 = vmatpush1.bf16.msra.mxu0 0
      %4569 = vmatprep.subr.bf16.mxu0 0
      %4570 = vmatpush1.bf16.msra.mxu0 0
      %4571 = vmatprep.subr.bf16.mxu0 0
      %4572 = vmatpush1.bf16.msra.mxu0 0
      %4573 = vmatprep.subr.bf16.mxu0 0
      %4574 = vmatpush1.bf16.msra.mxu0 0
      %4575 = vmatprep.subr.bf16.mxu0 0
      %4576 = vmatpush1.bf16.msra.mxu0 0
      %4577 = vmatprep.subr.bf16.mxu0 0
      %4578 = vmatpush1.bf16.msra.mxu0 0
      %4579 = vmatprep.mubr.bf16.mxu0 0
      %4580 = vmatmul.mubr.bf16.gmra.mrb[0].mxu0 %v3130
      %v4581 = vpop.f32.mrb[0].mxu0
      %v4582 = vadd.f32 %v4421, %v4581
      %v4583 = vpop.f32.mrb[0].mxu0
      %v4584 = vpop.f32.mrb[0].mxu0
      %v4585 = vadd.f32 %v4424, %v4584
      %v4586 = vpop.f32.mrb[0].mxu0
      %4587 = vmatprep.mubr.bf16.mxu0 0
      %4588 = vmatmul.mubr.bf16.gmra.mrb[0].mxu0 %v3161
      %v4589 = vpop.f32.mrb[0].mxu0
      %v4590 = vadd.f32 %v4429, %v4589
      %v4591 = vpop.f32.mrb[0].mxu0
      %v4592 = vpop.f32.mrb[0].mxu0
      %v4593 = vadd.f32 %v4432, %v4592
      %v4594 = vpop.f32.mrb[0].mxu0
      %4595 = vmatprep.mubr.bf16.mxu0 0
      %4596 = vmatmul.mubr.bf16.gmra.mrb[0].mxu0 %v3192
      %v4597 = vpop.f32.mrb[0].mxu0
      %v4598 = vadd.f32 %v4437, %v4597
      %v4599 = vpop.f32.mrb[0].mxu0
      %v4600 = vpop.f32.mrb[0].mxu0
      %v4601 = vadd.f32 %v4440, %v4600
      %v4602 = vpop.f32.mrb[0].mxu0
      %4603 = vmatprep.mubr.bf16.mxu0 0
      %4604 = vmatmul.mubr.bf16.gmra.mrb[0].mxu0 %v3223
      %v4605 = vpop.f32.mrb[0].mxu0
      %v4606 = vadd.f32 %v4445, %v4605
      %v4607 = vpop.f32.mrb[0].mxu0
      %v4608 = vpop.f32.mrb[0].mxu0
      %v4609 = vadd.f32 %v4448, %v4608
      %v4610 = vpop.f32.mrb[0].mxu0
      %4611 = vmatprep.mubr.bf16.mxu0 0
      %4612 = vmatmul.mubr.bf16.gmra.mrb[0].mxu0 %v3254
      %v4613 = vpop.f32.mrb[0].mxu0
      %v4614 = vadd.f32 %v4453, %v4613
      %v4615 = vpop.f32.mrb[0].mxu0
      %v4616 = vpop.f32.mrb[0].mxu0
      %v4617 = vadd.f32 %v4456, %v4616
      %v4618 = vpop.f32.mrb[0].mxu0
      %4619 = vmatprep.mubr.bf16.mxu0 0
      %4620 = vmatmul.mubr.bf16.gmra.mrb[0].mxu0 %v3285
      %v4621 = vpop.f32.mrb[0].mxu0
      %v4622 = vadd.f32 %v4461, %v4621
      %v4623 = vpop.f32.mrb[0].mxu0
      %v4624 = vpop.f32.mrb[0].mxu0
      %v4625 = vadd.f32 %v4464, %v4624
      %v4626 = vpop.f32.mrb[0].mxu0
      %4627 = vmatprep.mubr.bf16.mxu0 0
      %4628 = vmatmul.mubr.bf16.gmra.mrb[0].mxu0 %v3316
      %v4629 = vpop.f32.mrb[0].mxu0
      %v4630 = vadd.f32 %v4469, %v4629
      %v4631 = vpop.f32.mrb[0].mxu0
      %v4632 = vpop.f32.mrb[0].mxu0
      %v4633 = vadd.f32 %v4472, %v4632
      %v4634 = vpop.f32.mrb[0].mxu0
      %4635 = vmatprep.mubr.bf16.mxu0 0
      %4636 = vmatmul.mubr.bf16.gmra.mrb[0].mxu0 %v3347
      %v4637 = vpop.f32.mrb[0].mxu0
      %v4638 = vadd.f32 %v4477, %v4637
      %v4639 = vpop.f32.mrb[0].mxu0
      %v4640 = vpop.f32.mrb[0].mxu0
      %v4641 = vadd.f32 %v4480, %v4640
      %v4642 = vpop.f32.mrb[0].mxu0
      %4643 = vmatprep.mubr.bf16.mxu0 0
      %4644 = vmatmul.mubr.bf16.gmra.mrb[0].mxu0 %v3378
      %v4645 = vpop.f32.mrb[0].mxu0
      %v4646 = vadd.f32 %v4485, %v4645
      %v4647 = vpop.f32.mrb[0].mxu0
      %v4648 = vpop.f32.mrb[0].mxu0
      %v4649 = vadd.f32 %v4488, %v4648
      %v4650 = vpop.f32.mrb[0].mxu0
      %4651 = vmatprep.mubr.bf16.mxu0 0
      %4652 = vmatmul.mubr.bf16.gmra.mrb[0].mxu0 %v3409
      %v4653 = vpop.f32.mrb[0].mxu0
      %v4654 = vadd.f32 %v4493, %v4653
      %v4655 = vpop.f32.mrb[0].mxu0
      %v4656 = vpop.f32.mrb[0].mxu0
      %v4657 = vadd.f32 %v4496, %v4656
      %v4658 = vpop.f32.mrb[0].mxu0
      %4659 = vmatprep.mubr.bf16.mxu0 0
      %4660 = vmatmul.mubr.bf16.gmra.mrb[0].mxu0 %v3440
      %v4661 = vpop.f32.mrb[0].mxu0
      %v4662 = vadd.f32 %v4501, %v4661
      %v4663 = vpop.f32.mrb[0].mxu0
      %v4664 = vpop.f32.mrb[0].mxu0
      %v4665 = vadd.f32 %v4504, %v4664
      %v4666 = vpop.f32.mrb[0].mxu0
      %4667 = vmatprep.mubr.bf16.mxu0 0
      %4668 = vmatmul.mubr.bf16.gmra.mrb[0].mxu0 %v3471
      %v4669 = vpop.f32.mrb[0].mxu0
      %v4670 = vadd.f32 %v4509, %v4669
      %v4671 = vpop.f32.mrb[0].mxu0
      %v4672 = vpop.f32.mrb[0].mxu0
      %v4673 = vadd.f32 %v4512, %v4672
      %v4674 = vpop.f32.mrb[0].mxu0
      %4675 = vmatprep.mubr.bf16.mxu0 0
      %4676 = vmatmul.mubr.bf16.gmra.mrb[0].mxu0 %v3502
      %v4677 = vpop.f32.mrb[0].mxu0
      %v4678 = vadd.f32 %v4517, %v4677
      %v4679 = vpop.f32.mrb[0].mxu0
      %v4680 = vpop.f32.mrb[0].mxu0
      %v4681 = vadd.f32 %v4520, %v4680
      %v4682 = vpop.f32.mrb[0].mxu0
      %4683 = vmatprep.mubr.bf16.mxu0 0
      %4684 = vmatmul.mubr.bf16.gmra.mrb[0].mxu0 %v3533
      %v4685 = vpop.f32.mrb[0].mxu0
      %v4686 = vadd.f32 %v4525, %v4685
      %v4687 = vpop.f32.mrb[0].mxu0
      %v4688 = vpop.f32.mrb[0].mxu0
      %v4689 = vadd.f32 %v4528, %v4688
      %v4690 = vpop.f32.mrb[0].mxu0
      %4691 = vmatprep.mubr.bf16.mxu0 0
      %4692 = vmatmul.mubr.bf16.gmra.mrb[0].mxu0 %v3564
      %v4693 = vpop.f32.mrb[0].mxu0
      %v4694 = vadd.f32 %v4533, %v4693
      %v4695 = vpop.f32.mrb[0].mxu0
      %v4696 = vpop.f32.mrb[0].mxu0
      %v4697 = vadd.f32 %v4536, %v4696
      %v4698 = vpop.f32.mrb[0].mxu0
      %4699 = vmatprep.mubr.bf16.mxu0 0
      %4700 = vmatmul.mubr.bf16.gmra.mrb[0].mxu0 %v4189
      %v4701 = vpop.f32.mrb[0].mxu0
      %v4702 = vadd.f32 %v4541, %v4701
      %v4703 = vpop.f32.mrb[0].mxu0
      %v4704 = vpop.f32.mrb[0].mxu0
      %v4705 = vadd.f32 %v4544, %v4704
      %v4706 = vpop.f32.mrb[0].mxu0
      %4707 = vdwg.mxu0
      %v4708 = vadd.f32 %v4127, %v4582
      %v4709 = vadd.f32 %v4128, %v4585
      %v4710 = vadd.f32 %v4129, %v4590
      %v4711 = vadd.f32 %v4130, %v4593
      %v4712 = vadd.f32 %v4131, %v4598
      %v4713 = vadd.f32 %v4132, %v4601
      %v4714 = vadd.f32 %v4133, %v4606
      %v4715 = vadd.f32 %v4134, %v4609
      %v4716 = vadd.f32 %v4135, %v4614
      %v4717 = vadd.f32 %v4136, %v4617
      %v4718 = vadd.f32 %v4137, %v4622
      %v4719 = vadd.f32 %v4138, %v4625
      %v4720 = vadd.f32 %v4139, %v4630
      %v4721 = vadd.f32 %v4140, %v4633
      %v4722 = vadd.f32 %v4141, %v4638
      %v4723 = vadd.f32 %v4142, %v4641
      %v4724 = vadd.f32 %v4143, %v4646
      %v4725 = vadd.f32 %v4144, %v4649
      %v4726 = vadd.f32 %v4145, %v4654
      %v4727 = vadd.f32 %v4146, %v4657
      %v4728 = vadd.f32 %v4147, %v4662
      %v4729 = vadd.f32 %v4148, %v4665
      %v4730 = vadd.f32 %v4149, %v4670
      %v4731 = vadd.f32 %v4150, %v4673
      %v4732 = vadd.f32 %v4151, %v4678
      %v4733 = vadd.f32 %v4152, %v4681
      %v4734 = vadd.f32 %v4153, %v4686
      %v4735 = vadd.f32 %v4154, %v4689
      %v4736 = vadd.f32 %v4155, %v4694
      %v4737 = vadd.f32 %v4156, %v4697
      %v4738 = vadd.f32 %v4157, %v4702
      %v4739 = vadd.f32 %v4158, %v4705
      %v4741 = vshrl.u32 %v2842, 16
      %v4743 = vrot.slane %v4741, 7
      %v4744 = vrot.slane %v2968, 7
      %v4745 = vor.u32 %v4744, %v2965
      %v4746 = vsel %vm3068, %v4743, %v4745
      %v4748 = vshrl.u32 %v2967, 16
      %v4750 = vrot.slane %v4748, 7
      %v4752 = vshrl.u32 %v2970, 16
      %v4754 = vrot.slane %v4752, 7
      %v4755 = vshll.u32 %v2970, 16
      %v4757 = vor.u32 %v4754, %v4755
      %v4758 = vsel %vm3068, %v4750, %v4757
      %v4760 = vshrl.u32 %v3058, 16
      %v4762 = vrot.slane %v4760, 7
      %v4764 = vshrl.u32 %v3060, 16
      %v4766 = vrot.slane %v4764, 7
      %v4767 = vshll.u32 %v3060, 16
      %v4769 = vor.u32 %v4766, %v4767
      %v4770 = vsel %vm3068, %v4762, %v4769
      %s4774 = scalar_lea.vmem %s3, 384
      %v4775 = vld [vmem:[%s4774] sm:$0xf]
      %v4776 = vld [vmem:[%s4774 + $0x4] sm:$0xf]
      %v4777 = vld [vmem:[%s4774 + $0x8] sm:$0xf]
      %v4778 = vld [vmem:[%s4774 + $0xc] sm:$0xf]
      %v4779 = vld [vmem:[%s4774 + $0x10] sm:$0xf]
      %v4780 = vld [vmem:[%s4774 + $0x14] sm:$0xf]
      %v4781 = vld [vmem:[%s4774 + $0x18] sm:$0xf]
      %v4782 = vld [vmem:[%s4774 + $0x1c] sm:$0xf]
      %v4783 = vld [vmem:[%s4774 + $0x20] sm:$0xf]
      %v4784 = vld [vmem:[%s4774 + $0x24] sm:$0xf]
      %v4785 = vld [vmem:[%s4774 + $0x28] sm:$0xf]
      %v4786 = vld [vmem:[%s4774 + $0x2c] sm:$0xf]
      %v4787 = vld [vmem:[%s4774 + $0x30] sm:$0xf]
      %v4788 = vld [vmem:[%s4774 + $0x34] sm:$0xf]
      %v4789 = vld [vmem:[%s4774 + $0x38] sm:$0xf]
      %v4790 = vld [vmem:[%s4774 + $0x3c] sm:$0xf]
      %v4791 = vld [vmem:[%s4774 + $0x40] sm:$0xf]
      %v4792 = vld [vmem:[%s4774 + $0x44] sm:$0xf]
      %v4793 = vld [vmem:[%s4774 + $0x48] sm:$0xf]
      %v4794 = vld [vmem:[%s4774 + $0x4c] sm:$0xf]
      %v4795 = vld [vmem:[%s4774 + $0x50] sm:$0xf]
      %v4796 = vld [vmem:[%s4774 + $0x54] sm:$0xf]
      %v4797 = vld [vmem:[%s4774 + $0x58] sm:$0xf]
      %v4798 = vld [vmem:[%s4774 + $0x5c] sm:$0xf]
      %v4799 = vld [vmem:[%s4774 + $0x60] sm:$0xf]
      %v4800 = vld [vmem:[%s4774 + $0x64] sm:$0xf]
      %v4801 = vld [vmem:[%s4774 + $0x68] sm:$0xf]
      %v4802 = vld [vmem:[%s4774 + $0x6c] sm:$0xf]
      %v4803 = vld [vmem:[%s4774 + $0x70] sm:$0xf]
      %v4804 = vld [vmem:[%s4774 + $0x74] sm:$0xf]
      %v4805 = vld [vmem:[%s4774 + $0x78] sm:$0xf]
      %v4806 = vld [vmem:[%s4774 + $0x7c] sm:$0xf]
      %v4807 = vld [vmem:[%s4774 + $0x80] sm:$0xf]
      %v4808 = vld [vmem:[%s4774 + $0x84] sm:$0xf]
      %v4809 = vld [vmem:[%s4774 + $0x88] sm:$0xf]
      %v4810 = vld [vmem:[%s4774 + $0x8c] sm:$0xf]
      %v4811 = vld [vmem:[%s4774 + $0x90] sm:$0xf]
      %v4812 = vld [vmem:[%s4774 + $0x94] sm:$0xf]
      %v4813 = vld [vmem:[%s4774 + $0x98] sm:$0xf]
      %v4814 = vld [vmem:[%s4774 + $0x9c] sm:$0xf]
      %v4815 = vld [vmem:[%s4774 + $0xa0] sm:$0xf]
      %v4816 = vld [vmem:[%s4774 + $0xa4] sm:$0xf]
      %v4817 = vld [vmem:[%s4774 + $0xa8] sm:$0xf]
      %v4818 = vld [vmem:[%s4774 + $0xac] sm:$0xf]
      %v4819 = vld [vmem:[%s4774 + $0xb0] sm:$0xf]
      %v4820 = vld [vmem:[%s4774 + $0xb4] sm:$0xf]
      %v4821 = vld [vmem:[%s4774 + $0xb8] sm:$0xf]
      %v4822 = vld [vmem:[%s4774 + $0xbc] sm:$0xf]
      %v4871 = vunpack.c.l.b16 %v4775
      %v4872 = vunpack.c.l.b16 %v4776
      %v4873 = vunpack.c.l.b16 %v4777
      %v4874 = vunpack.c.l.b16 %v4778
      %v4875 = vunpack.c.l.b16 %v4779
      %v4876 = vunpack.c.l.b16 %v4780
      %v4877 = vunpack.c.l.b16 %v4781
      %v4878 = vunpack.c.l.b16 %v4782
      %v4879 = vunpack.c.l.b16 %v4783
      %v4880 = vunpack.c.l.b16 %v4784
      %v4881 = vunpack.c.l.b16 %v4785
      %v4882 = vunpack.c.l.b16 %v4786
      %v4883 = vunpack.c.l.b16 %v4787
      %v4884 = vunpack.c.l.b16 %v4788
      %v4885 = vunpack.c.l.b16 %v4789
      %v4886 = vunpack.c.l.b16 %v4790
      %v4887 = vunpack.c.l.b16 %v4791
      %v4888 = vunpack.c.l.b16 %v4792
      %v4889 = vunpack.c.l.b16 %v4793
      %v4890 = vunpack.c.l.b16 %v4794
      %v4891 = vunpack.c.l.b16 %v4795
      %v4892 = vunpack.c.l.b16 %v4796
      %v4893 = vunpack.c.l.b16 %v4797
      %v4894 = vunpack.c.l.b16 %v4798
      %v4895 = vunpack.c.l.b16 %v4799
      %v4896 = vunpack.c.l.b16 %v4800
      %v4897 = vunpack.c.l.b16 %v4801
      %v4898 = vunpack.c.l.b16 %v4802
      %v4899 = vunpack.c.l.b16 %v4803
      %v4900 = vunpack.c.l.b16 %v4804
      %v4901 = vunpack.c.l.b16 %v4805
      %v4902 = vunpack.c.l.b16 %v4806
      %v4903 = vunpack.c.l.b16 %v4807
      %v4904 = vunpack.c.l.b16 %v4808
      %v4905 = vunpack.c.l.b16 %v4809
      %v4906 = vunpack.c.l.b16 %v4810
      %v4907 = vunpack.c.l.b16 %v4811
      %v4908 = vunpack.c.l.b16 %v4812
      %v4909 = vunpack.c.l.b16 %v4813
      %v4910 = vunpack.c.l.b16 %v4814
      %v4911 = vunpack.c.l.b16 %v4815
      %v4912 = vunpack.c.l.b16 %v4816
      %v4913 = vunpack.c.l.b16 %v4817
      %v4914 = vunpack.c.l.b16 %v4818
      %v4915 = vunpack.c.l.b16 %v4819
      %v4916 = vunpack.c.l.b16 %v4820
      %v4917 = vunpack.c.l.b16 %v4821
      %v4918 = vunpack.c.l.b16 %v4822
      %v4919 = vpack.c.b16 %v4872, %v4871
      %v4920 = vpack.c.b16 %v4874, %v4873
      %v4921 = vpack.c.b16 %v4876, %v4875
      %v4922 = vpack.c.b16 %v4878, %v4877
      %v4923 = vpack.c.b16 %v4880, %v4879
      %v4924 = vpack.c.b16 %v4882, %v4881
      %v4925 = vpack.c.b16 %v4884, %v4883
      %v4926 = vpack.c.b16 %v4886, %v4885
      %v4927 = vpack.c.b16 %v4888, %v4887
      %v4928 = vpack.c.b16 %v4890, %v4889
      %v4929 = vpack.c.b16 %v4892, %v4891
      %v4930 = vpack.c.b16 %v4894, %v4893
      %v4931 = vpack.c.b16 %v4896, %v4895
      %v4932 = vpack.c.b16 %v4898, %v4897
      %v4933 = vpack.c.b16 %v4900, %v4899
      %v4934 = vpack.c.b16 %v4902, %v4901
      %v4935 = vpack.c.b16 %v4904, %v4903
      %v4936 = vpack.c.b16 %v4906, %v4905
      %v4937 = vpack.c.b16 %v4908, %v4907
      %v4938 = vpack.c.b16 %v4910, %v4909
      %v4939 = vpack.c.b16 %v4912, %v4911
      %v4940 = vpack.c.b16 %v4914, %v4913
      %v4941 = vpack.c.b16 %v4916, %v4915
      %v4942 = vpack.c.b16 %v4918, %v4917
      %4967 = vmatprep.subr.bf16.mxu0 0
      %4968 = vmatpush1.bf16.msra.mxu0 %v4919
      %4969 = vmatprep.subr.bf16.mxu0 0
      %4970 = vmatpush1.bf16.msra.mxu0 %v4920
      %4971 = vmatprep.subr.bf16.mxu0 0
      %4972 = vmatpush1.bf16.msra.mxu0 %v4921
      %4973 = vmatprep.subr.bf16.mxu0 0
      %4974 = vmatpush1.bf16.msra.mxu0 %v4922
      %4975 = vmatprep.subr.bf16.mxu0 0
      %4976 = vmatpush1.bf16.msra.mxu0 %v4923
      %4977 = vmatprep.subr.bf16.mxu0 0
      %4978 = vmatpush1.bf16.msra.mxu0 %v4924
      %4979 = vmatprep.subr.bf16.mxu0 0
      %4980 = vmatpush1.bf16.msra.mxu0 %v4925
      %4981 = vmatprep.subr.bf16.mxu0 0
      %4982 = vmatpush1.bf16.msra.mxu0 %v4926
      %4983 = vmatprep.subr.bf16.mxu0 0
      %4984 = vmatpush1.bf16.msra.mxu0 %v4927
      %4985 = vmatprep.subr.bf16.mxu0 0
      %4986 = vmatpush1.bf16.msra.mxu0 %v4928
      %4987 = vmatprep.subr.bf16.mxu0 0
      %4988 = vmatpush1.bf16.msra.mxu0 %v4929
      %4989 = vmatprep.subr.bf16.mxu0 0
      %4990 = vmatpush1.bf16.msra.mxu0 %v4930
      %4991 = vmatprep.subr.bf16.mxu0 0
      %4992 = vmatpush1.bf16.msra.mxu0 %v4931
      %4993 = vmatprep.subr.bf16.mxu0 0
      %4994 = vmatpush1.bf16.msra.mxu0 %v4932
      %4995 = vmatprep.subr.bf16.mxu0 0
      %4996 = vmatpush1.bf16.msra.mxu0 %v4933
      %4997 = vmatprep.subr.bf16.mxu0 0
      %4998 = vmatpush1.bf16.msra.mxu0 %v4934
      %4999 = vmatprep.mubr.bf16.mxu0 %v3149
      %5000 = vmatmul.mubr.bf16.gmra.mrb[0].mxu0 %v3137
      %v5001 = vpop.f32.mrb[0].mxu0
      %v5002 = vadd.f32 0.0, %v5001
      %v5003 = vpop.f32.mrb[0].mxu0
      %v5004 = vpop.f32.mrb[0].mxu0
      %v5005 = vadd.f32 0.0, %v5004
      %v5006 = vpop.f32.mrb[0].mxu0
      %5007 = vmatprep.mubr.bf16.mxu0 %v3180
      %5008 = vmatmul.mubr.bf16.gmra.mrb[0].mxu0 %v3168
      %v5009 = vpop.f32.mrb[0].mxu0
      %v5010 = vadd.f32 0.0, %v5009
      %v5011 = vpop.f32.mrb[0].mxu0
      %v5012 = vpop.f32.mrb[0].mxu0
      %v5013 = vadd.f32 0.0, %v5012
      %v5014 = vpop.f32.mrb[0].mxu0
      %5015 = vmatprep.mubr.bf16.mxu0 %v3211
      %5016 = vmatmul.mubr.bf16.gmra.mrb[0].mxu0 %v3199
      %v5017 = vpop.f32.mrb[0].mxu0
      %v5018 = vadd.f32 0.0, %v5017
      %v5019 = vpop.f32.mrb[0].mxu0
      %v5020 = vpop.f32.mrb[0].mxu0
      %v5021 = vadd.f32 0.0, %v5020
      %v5022 = vpop.f32.mrb[0].mxu0
      %5023 = vmatprep.mubr.bf16.mxu0 %v3242
      %5024 = vmatmul.mubr.bf16.gmra.mrb[0].mxu0 %v3230
      %v5025 = vpop.f32.mrb[0].mxu0
      %v5026 = vadd.f32 0.0, %v5025
      %v5027 = vpop.f32.mrb[0].mxu0
      %v5028 = vpop.f32.mrb[0].mxu0
      %v5029 = vadd.f32 0.0, %v5028
      %v5030 = vpop.f32.mrb[0].mxu0
      %5031 = vmatprep.mubr.bf16.mxu0 %v3273
      %5032 = vmatmul.mubr.bf16.gmra.mrb[0].mxu0 %v3261
      %v5033 = vpop.f32.mrb[0].mxu0
      %v5034 = vadd.f32 0.0, %v5033
      %v5035 = vpop.f32.mrb[0].mxu0
      %v5036 = vpop.f32.mrb[0].mxu0
      %v5037 = vadd.f32 0.0, %v5036
      %v5038 = vpop.f32.mrb[0].mxu0
      %5039 = vmatprep.mubr.bf16.mxu0 %v3304
      %5040 = vmatmul.mubr.bf16.gmra.mrb[0].mxu0 %v3292
      %v5041 = vpop.f32.mrb[0].mxu0
      %v5042 = vadd.f32 0.0, %v5041
      %v5043 = vpop.f32.mrb[0].mxu0
      %v5044 = vpop.f32.mrb[0].mxu0
      %v5045 = vadd.f32 0.0, %v5044
      %v5046 = vpop.f32.mrb[0].mxu0
      %5047 = vmatprep.mubr.bf16.mxu0 %v3335
      %5048 = vmatmul.mubr.bf16.gmra.mrb[0].mxu0 %v3323
      %v5049 = vpop.f32.mrb[0].mxu0
      %v5050 = vadd.f32 0.0, %v5049
      %v5051 = vpop.f32.mrb[0].mxu0
      %v5052 = vpop.f32.mrb[0].mxu0
      %v5053 = vadd.f32 0.0, %v5052
      %v5054 = vpop.f32.mrb[0].mxu0
      %5055 = vmatprep.mubr.bf16.mxu0 %v3366
      %5056 = vmatmul.mubr.bf16.gmra.mrb[0].mxu0 %v3354
      %v5057 = vpop.f32.mrb[0].mxu0
      %v5058 = vadd.f32 0.0, %v5057
      %v5059 = vpop.f32.mrb[0].mxu0
      %v5060 = vpop.f32.mrb[0].mxu0
      %v5061 = vadd.f32 0.0, %v5060
      %v5062 = vpop.f32.mrb[0].mxu0
      %5063 = vmatprep.mubr.bf16.mxu0 %v3397
      %5064 = vmatmul.mubr.bf16.gmra.mrb[0].mxu0 %v3385
      %v5065 = vpop.f32.mrb[0].mxu0
      %v5066 = vadd.f32 0.0, %v5065
      %v5067 = vpop.f32.mrb[0].mxu0
      %v5068 = vpop.f32.mrb[0].mxu0
      %v5069 = vadd.f32 0.0, %v5068
      %v5070 = vpop.f32.mrb[0].mxu0
      %5071 = vmatprep.mubr.bf16.mxu0 %v3428
      %5072 = vmatmul.mubr.bf16.gmra.mrb[0].mxu0 %v3416
      %v5073 = vpop.f32.mrb[0].mxu0
      %v5074 = vadd.f32 0.0, %v5073
      %v5075 = vpop.f32.mrb[0].mxu0
      %v5076 = vpop.f32.mrb[0].mxu0
      %v5077 = vadd.f32 0.0, %v5076
      %v5078 = vpop.f32.mrb[0].mxu0
      %5079 = vmatprep.mubr.bf16.mxu0 %v3459
      %5080 = vmatmul.mubr.bf16.gmra.mrb[0].mxu0 %v3447
      %v5081 = vpop.f32.mrb[0].mxu0
      %v5082 = vadd.f32 0.0, %v5081
      %v5083 = vpop.f32.mrb[0].mxu0
      %v5084 = vpop.f32.mrb[0].mxu0
      %v5085 = vadd.f32 0.0, %v5084
      %v5086 = vpop.f32.mrb[0].mxu0
      %5087 = vmatprep.mubr.bf16.mxu0 %v3490
      %5088 = vmatmul.mubr.bf16.gmra.mrb[0].mxu0 %v3478
      %v5089 = vpop.f32.mrb[0].mxu0
      %v5090 = vadd.f32 0.0, %v5089
      %v5091 = vpop.f32.mrb[0].mxu0
      %v5092 = vpop.f32.mrb[0].mxu0
      %v5093 = vadd.f32 0.0, %v5092
      %v5094 = vpop.f32.mrb[0].mxu0
      %5095 = vmatprep.mubr.bf16.mxu0 %v3521
      %5096 = vmatmul.mubr.bf16.gmra.mrb[0].mxu0 %v3509
      %v5097 = vpop.f32.mrb[0].mxu0
      %v5098 = vadd.f32 0.0, %v5097
      %v5099 = vpop.f32.mrb[0].mxu0
      %v5100 = vpop.f32.mrb[0].mxu0
      %v5101 = vadd.f32 0.0, %v5100
      %v5102 = vpop.f32.mrb[0].mxu0
      %5103 = vmatprep.mubr.bf16.mxu0 %v3552
      %5104 = vmatmul.mubr.bf16.gmra.mrb[0].mxu0 %v3540
      %v5105 = vpop.f32.mrb[0].mxu0
      %v5106 = vadd.f32 0.0, %v5105
      %v5107 = vpop.f32.mrb[0].mxu0
      %v5108 = vpop.f32.mrb[0].mxu0
      %v5109 = vadd.f32 0.0, %v5108
      %v5110 = vpop.f32.mrb[0].mxu0
      %5111 = vmatprep.mubr.bf16.mxu0 %v4177
      %5112 = vmatmul.mubr.bf16.gmra.mrb[0].mxu0 %v4165
      %v5113 = vpop.f32.mrb[0].mxu0
      %v5114 = vadd.f32 0.0, %v5113
      %v5115 = vpop.f32.mrb[0].mxu0
      %v5116 = vpop.f32.mrb[0].mxu0
      %v5117 = vadd.f32 0.0, %v5116
      %v5118 = vpop.f32.mrb[0].mxu0
      %5119 = vmatprep.mubr.bf16.mxu0 %v4758
      %5120 = vmatmul.mubr.bf16.gmra.mrb[0].mxu0 %v4746
      %v5121 = vpop.f32.mrb[0].mxu0
      %v5122 = vadd.f32 0.0, %v5121
      %v5123 = vpop.f32.mrb[0].mxu0
      %v5124 = vpop.f32.mrb[0].mxu0
      %v5125 = vadd.f32 0.0, %v5124
      %v5126 = vpop.f32.mrb[0].mxu0
      %5127 = vdwg.mxu0
      %5128 = vmatprep.subr.bf16.mxu0 0
      %5129 = vmatpush1.bf16.msra.mxu0 %v4935
      %5130 = vmatprep.subr.bf16.mxu0 0
      %5131 = vmatpush1.bf16.msra.mxu0 %v4936
      %5132 = vmatprep.subr.bf16.mxu0 0
      %5133 = vmatpush1.bf16.msra.mxu0 %v4937
      %5134 = vmatprep.subr.bf16.mxu0 0
      %5135 = vmatpush1.bf16.msra.mxu0 %v4938
      %5136 = vmatprep.subr.bf16.mxu0 0
      %5137 = vmatpush1.bf16.msra.mxu0 %v4939
      %5138 = vmatprep.subr.bf16.mxu0 0
      %5139 = vmatpush1.bf16.msra.mxu0 %v4940
      %5140 = vmatprep.subr.bf16.mxu0 0
      %5141 = vmatpush1.bf16.msra.mxu0 %v4941
      %5142 = vmatprep.subr.bf16.mxu0 0
      %5143 = vmatpush1.bf16.msra.mxu0 %v4942
      %5144 = vmatprep.subr.bf16.mxu0 0
      %5145 = vmatpush1.bf16.msra.mxu0 0
      %5146 = vmatprep.subr.bf16.mxu0 0
      %5147 = vmatpush1.bf16.msra.mxu0 0
      %5148 = vmatprep.subr.bf16.mxu0 0
      %5149 = vmatpush1.bf16.msra.mxu0 0
      %5150 = vmatprep.subr.bf16.mxu0 0
      %5151 = vmatpush1.bf16.msra.mxu0 0
      %5152 = vmatprep.subr.bf16.mxu0 0
      %5153 = vmatpush1.bf16.msra.mxu0 0
      %5154 = vmatprep.subr.bf16.mxu0 0
      %5155 = vmatpush1.bf16.msra.mxu0 0
      %5156 = vmatprep.subr.bf16.mxu0 0
      %5157 = vmatpush1.bf16.msra.mxu0 0
      %5158 = vmatprep.subr.bf16.mxu0 0
      %5159 = vmatpush1.bf16.msra.mxu0 0
      %5160 = vmatprep.mubr.bf16.mxu0 0
      %5161 = vmatmul.mubr.bf16.gmra.mrb[0].mxu0 %v3161
      %v5162 = vpop.f32.mrb[0].mxu0
      %v5163 = vadd.f32 %v5002, %v5162
      %v5164 = vpop.f32.mrb[0].mxu0
      %v5165 = vpop.f32.mrb[0].mxu0
      %v5166 = vadd.f32 %v5005, %v5165
      %v5167 = vpop.f32.mrb[0].mxu0
      %5168 = vmatprep.mubr.bf16.mxu0 0
      %5169 = vmatmul.mubr.bf16.gmra.mrb[0].mxu0 %v3192
      %v5170 = vpop.f32.mrb[0].mxu0
      %v5171 = vadd.f32 %v5010, %v5170
      %v5172 = vpop.f32.mrb[0].mxu0
      %v5173 = vpop.f32.mrb[0].mxu0
      %v5174 = vadd.f32 %v5013, %v5173
      %v5175 = vpop.f32.mrb[0].mxu0
      %5176 = vmatprep.mubr.bf16.mxu0 0
      %5177 = vmatmul.mubr.bf16.gmra.mrb[0].mxu0 %v3223
      %v5178 = vpop.f32.mrb[0].mxu0
      %v5179 = vadd.f32 %v5018, %v5178
      %v5180 = vpop.f32.mrb[0].mxu0
      %v5181 = vpop.f32.mrb[0].mxu0
      %v5182 = vadd.f32 %v5021, %v5181
      %v5183 = vpop.f32.mrb[0].mxu0
      %5184 = vmatprep.mubr.bf16.mxu0 0
      %5185 = vmatmul.mubr.bf16.gmra.mrb[0].mxu0 %v3254
      %v5186 = vpop.f32.mrb[0].mxu0
      %v5187 = vadd.f32 %v5026, %v5186
      %v5188 = vpop.f32.mrb[0].mxu0
      %v5189 = vpop.f32.mrb[0].mxu0
      %v5190 = vadd.f32 %v5029, %v5189
      %v5191 = vpop.f32.mrb[0].mxu0
      %5192 = vmatprep.mubr.bf16.mxu0 0
      %5193 = vmatmul.mubr.bf16.gmra.mrb[0].mxu0 %v3285
      %v5194 = vpop.f32.mrb[0].mxu0
      %v5195 = vadd.f32 %v5034, %v5194
      %v5196 = vpop.f32.mrb[0].mxu0
      %v5197 = vpop.f32.mrb[0].mxu0
      %v5198 = vadd.f32 %v5037, %v5197
      %v5199 = vpop.f32.mrb[0].mxu0
      %5200 = vmatprep.mubr.bf16.mxu0 0
      %5201 = vmatmul.mubr.bf16.gmra.mrb[0].mxu0 %v3316
      %v5202 = vpop.f32.mrb[0].mxu0
      %v5203 = vadd.f32 %v5042, %v5202
      %v5204 = vpop.f32.mrb[0].mxu0
      %v5205 = vpop.f32.mrb[0].mxu0
      %v5206 = vadd.f32 %v5045, %v5205
      %v5207 = vpop.f32.mrb[0].mxu0
      %5208 = vmatprep.mubr.bf16.mxu0 0
      %5209 = vmatmul.mubr.bf16.gmra.mrb[0].mxu0 %v3347
      %v5210 = vpop.f32.mrb[0].mxu0
      %v5211 = vadd.f32 %v5050, %v5210
      %v5212 = vpop.f32.mrb[0].mxu0
      %v5213 = vpop.f32.mrb[0].mxu0
      %v5214 = vadd.f32 %v5053, %v5213
      %v5215 = vpop.f32.mrb[0].mxu0
      %5216 = vmatprep.mubr.bf16.mxu0 0
      %5217 = vmatmul.mubr.bf16.gmra.mrb[0].mxu0 %v3378
      %v5218 = vpop.f32.mrb[0].mxu0
      %v5219 = vadd.f32 %v5058, %v5218
      %v5220 = vpop.f32.mrb[0].mxu0
      %v5221 = vpop.f32.mrb[0].mxu0
      %v5222 = vadd.f32 %v5061, %v5221
      %v5223 = vpop.f32.mrb[0].mxu0
      %5224 = vmatprep.mubr.bf16.mxu0 0
      %5225 = vmatmul.mubr.bf16.gmra.mrb[0].mxu0 %v3409
      %v5226 = vpop.f32.mrb[0].mxu0
      %v5227 = vadd.f32 %v5066, %v5226
      %v5228 = vpop.f32.mrb[0].mxu0
      %v5229 = vpop.f32.mrb[0].mxu0
      %v5230 = vadd.f32 %v5069, %v5229
      %v5231 = vpop.f32.mrb[0].mxu0
      %5232 = vmatprep.mubr.bf16.mxu0 0
      %5233 = vmatmul.mubr.bf16.gmra.mrb[0].mxu0 %v3440
      %v5234 = vpop.f32.mrb[0].mxu0
      %v5235 = vadd.f32 %v5074, %v5234
      %v5236 = vpop.f32.mrb[0].mxu0
      %v5237 = vpop.f32.mrb[0].mxu0
      %v5238 = vadd.f32 %v5077, %v5237
      %v5239 = vpop.f32.mrb[0].mxu0
      %5240 = vmatprep.mubr.bf16.mxu0 0
      %5241 = vmatmul.mubr.bf16.gmra.mrb[0].mxu0 %v3471
      %v5242 = vpop.f32.mrb[0].mxu0
      %v5243 = vadd.f32 %v5082, %v5242
      %v5244 = vpop.f32.mrb[0].mxu0
      %v5245 = vpop.f32.mrb[0].mxu0
      %v5246 = vadd.f32 %v5085, %v5245
      %v5247 = vpop.f32.mrb[0].mxu0
      %5248 = vmatprep.mubr.bf16.mxu0 0
      %5249 = vmatmul.mubr.bf16.gmra.mrb[0].mxu0 %v3502
      %v5250 = vpop.f32.mrb[0].mxu0
      %v5251 = vadd.f32 %v5090, %v5250
      %v5252 = vpop.f32.mrb[0].mxu0
      %v5253 = vpop.f32.mrb[0].mxu0
      %v5254 = vadd.f32 %v5093, %v5253
      %v5255 = vpop.f32.mrb[0].mxu0
      %5256 = vmatprep.mubr.bf16.mxu0 0
      %5257 = vmatmul.mubr.bf16.gmra.mrb[0].mxu0 %v3533
      %v5258 = vpop.f32.mrb[0].mxu0
      %v5259 = vadd.f32 %v5098, %v5258
      %v5260 = vpop.f32.mrb[0].mxu0
      %v5261 = vpop.f32.mrb[0].mxu0
      %v5262 = vadd.f32 %v5101, %v5261
      %v5263 = vpop.f32.mrb[0].mxu0
      %5264 = vmatprep.mubr.bf16.mxu0 0
      %5265 = vmatmul.mubr.bf16.gmra.mrb[0].mxu0 %v3564
      %v5266 = vpop.f32.mrb[0].mxu0
      %v5267 = vadd.f32 %v5106, %v5266
      %v5268 = vpop.f32.mrb[0].mxu0
      %v5269 = vpop.f32.mrb[0].mxu0
      %v5270 = vadd.f32 %v5109, %v5269
      %v5271 = vpop.f32.mrb[0].mxu0
      %5272 = vmatprep.mubr.bf16.mxu0 0
      %5273 = vmatmul.mubr.bf16.gmra.mrb[0].mxu0 %v4189
      %v5274 = vpop.f32.mrb[0].mxu0
      %v5275 = vadd.f32 %v5114, %v5274
      %v5276 = vpop.f32.mrb[0].mxu0
      %v5277 = vpop.f32.mrb[0].mxu0
      %v5278 = vadd.f32 %v5117, %v5277
      %v5279 = vpop.f32.mrb[0].mxu0
      %5280 = vmatprep.mubr.bf16.mxu0 0
      %5281 = vmatmul.mubr.bf16.gmra.mrb[0].mxu0 %v4770
      %v5282 = vpop.f32.mrb[0].mxu0
      %v5283 = vadd.f32 %v5122, %v5282
      %v5284 = vpop.f32.mrb[0].mxu0
      %v5285 = vpop.f32.mrb[0].mxu0
      %v5286 = vadd.f32 %v5125, %v5285
      %v5287 = vpop.f32.mrb[0].mxu0
      %5288 = vdwg.mxu0
      %v5289 = vadd.f32 %v4708, %v5163
      %v5290 = vadd.f32 %v4709, %v5166
      %v5291 = vadd.f32 %v4710, %v5171
      %v5292 = vadd.f32 %v4711, %v5174
      %v5293 = vadd.f32 %v4712, %v5179
      %v5294 = vadd.f32 %v4713, %v5182
      %v5295 = vadd.f32 %v4714, %v5187
      %v5296 = vadd.f32 %v4715, %v5190
      %v5297 = vadd.f32 %v4716, %v5195
      %v5298 = vadd.f32 %v4717, %v5198
      %v5299 = vadd.f32 %v4718, %v5203
      %v5300 = vadd.f32 %v4719, %v5206
      %v5301 = vadd.f32 %v4720, %v5211
      %v5302 = vadd.f32 %v4721, %v5214
      %v5303 = vadd.f32 %v4722, %v5219
      %v5304 = vadd.f32 %v4723, %v5222
      %v5305 = vadd.f32 %v4724, %v5227
      %v5306 = vadd.f32 %v4725, %v5230
      %v5307 = vadd.f32 %v4726, %v5235
      %v5308 = vadd.f32 %v4727, %v5238
      %v5309 = vadd.f32 %v4728, %v5243
      %v5310 = vadd.f32 %v4729, %v5246
      %v5311 = vadd.f32 %v4730, %v5251
      %v5312 = vadd.f32 %v4731, %v5254
      %v5313 = vadd.f32 %v4732, %v5259
      %v5314 = vadd.f32 %v4733, %v5262
      %v5315 = vadd.f32 %v4734, %v5267
      %v5316 = vadd.f32 %v4735, %v5270
      %v5317 = vadd.f32 %v4736, %v5275
      %v5318 = vadd.f32 %v4737, %v5278
      %v5319 = vadd.f32 %v4738, %v5283
      %v5320 = vadd.f32 %v4739, %v5286
      %v5321 = vmax.f32 %v5289, 0.0
      %v5322 = vmax.f32 %v5290, 0.0
      %v5323 = vmax.f32 %v5291, 0.0
      %v5324 = vmax.f32 %v5292, 0.0
      %v5325 = vmax.f32 %v5293, 0.0
      %v5326 = vmax.f32 %v5294, 0.0
      %v5327 = vmax.f32 %v5295, 0.0
      %v5328 = vmax.f32 %v5296, 0.0
      %v5329 = vmax.f32 %v5297, 0.0
      %v5330 = vmax.f32 %v5298, 0.0
      %v5331 = vmax.f32 %v5299, 0.0
      %v5332 = vmax.f32 %v5300, 0.0
      %v5333 = vmax.f32 %v5301, 0.0
      %v5334 = vmax.f32 %v5302, 0.0
      %v5335 = vmax.f32 %v5303, 0.0
      %v5336 = vmax.f32 %v5304, 0.0
      %v5337 = vmax.f32 %v5305, 0.0
      %v5338 = vmax.f32 %v5306, 0.0
      %v5339 = vmax.f32 %v5307, 0.0
      %v5340 = vmax.f32 %v5308, 0.0
      %v5341 = vmax.f32 %v5309, 0.0
      %v5342 = vmax.f32 %v5310, 0.0
      %v5343 = vmax.f32 %v5311, 0.0
      %v5344 = vmax.f32 %v5312, 0.0
      %v5345 = vmax.f32 %v5313, 0.0
      %v5346 = vmax.f32 %v5314, 0.0
      %v5347 = vmax.f32 %v5315, 0.0
      %v5348 = vmax.f32 %v5316, 0.0
      %v5349 = vmax.f32 %v5317, 0.0
      %v5350 = vmax.f32 %v5318, 0.0
      %v5351 = vmax.f32 %v5319, 0.0
      %v5352 = vmax.f32 %v5320, 0.0
      %v5353 = vpack.c.bf16 %v5322, %v5321
      %v5354 = vpack.c.bf16 %v5324, %v5323
      %v5355 = vpack.c.bf16 %v5326, %v5325
      %v5356 = vpack.c.bf16 %v5328, %v5327
      %v5357 = vpack.c.bf16 %v5330, %v5329
      %v5358 = vpack.c.bf16 %v5332, %v5331
      %v5359 = vpack.c.bf16 %v5334, %v5333
      %v5360 = vpack.c.bf16 %v5336, %v5335
      %v5361 = vpack.c.bf16 %v5338, %v5337
      %v5362 = vpack.c.bf16 %v5340, %v5339
      %v5363 = vpack.c.bf16 %v5342, %v5341
      %v5364 = vpack.c.bf16 %v5344, %v5343
      %v5365 = vpack.c.bf16 %v5346, %v5345
      %v5366 = vpack.c.bf16 %v5348, %v5347
      %v5367 = vpack.c.bf16 %v5350, %v5349
      %v5368 = vpack.c.bf16 %v5352, %v5351
      %v5385 = vunpack.c.l.b16 %v5353
      %v5386 = vunpack.c.h.b16 %v5353
      %v5387 = vunpack.c.l.b16 %v5354
      %v5388 = vunpack.c.h.b16 %v5354
      %v5389 = vunpack.c.l.b16 %v5355
      %v5390 = vunpack.c.h.b16 %v5355
      %v5391 = vunpack.c.l.b16 %v5356
      %v5392 = vunpack.c.h.b16 %v5356
      %v5393 = vunpack.c.l.b16 %v5357
      %v5394 = vunpack.c.h.b16 %v5357
      %v5395 = vunpack.c.l.b16 %v5358
      %v5396 = vunpack.c.h.b16 %v5358
      %v5397 = vunpack.c.l.b16 %v5359
      %v5398 = vunpack.c.h.b16 %v5359
      %v5399 = vunpack.c.l.b16 %v5360
      %v5400 = vunpack.c.h.b16 %v5360
      %v5401 = vunpack.c.l.b16 %v5361
      %v5402 = vunpack.c.h.b16 %v5361
      %v5403 = vunpack.c.l.b16 %v5362
      %v5404 = vunpack.c.h.b16 %v5362
      %v5405 = vunpack.c.l.b16 %v5363
      %v5406 = vunpack.c.h.b16 %v5363
      %v5407 = vunpack.c.l.b16 %v5364
      %v5408 = vunpack.c.h.b16 %v5364
      %v5409 = vunpack.c.l.b16 %v5365
      %v5410 = vunpack.c.h.b16 %v5365
      %v5411 = vunpack.c.l.b16 %v5366
      %v5412 = vunpack.c.h.b16 %v5366
      %v5413 = vunpack.c.l.b16 %v5367
      %v5414 = vunpack.c.h.b16 %v5367
      %v5415 = vunpack.c.l.b16 %v5368
      %v5416 = vunpack.c.h.b16 %v5368
      %v5417 = vpack.c.b16 %v5385, %v5385
      %v5418 = vpack.c.b16 %v5386, %v5386
      %v5419 = vpack.c.b16 %v5387, %v5387
      %v5420 = vpack.c.b16 %v5388, %v5388
      %v5421 = vpack.c.b16 %v5389, %v5389
      %v5422 = vpack.c.b16 %v5390, %v5390
      %v5423 = vpack.c.b16 %v5391, %v5391
      %v5424 = vpack.c.b16 %v5392, %v5392
      %v5425 = vpack.c.b16 %v5393, %v5393
      %v5426 = vpack.c.b16 %v5394, %v5394
      %v5427 = vpack.c.b16 %v5395, %v5395
      %v5428 = vpack.c.b16 %v5396, %v5396
      %v5429 = vpack.c.b16 %v5397, %v5397
      %v5430 = vpack.c.b16 %v5398, %v5398
      %v5431 = vpack.c.b16 %v5399, %v5399
      %v5432 = vpack.c.b16 %v5400, %v5400
      %v5433 = vpack.c.b16 %v5401, %v5401
      %v5434 = vpack.c.b16 %v5402, %v5402
      %v5435 = vpack.c.b16 %v5403, %v5403
      %v5436 = vpack.c.b16 %v5404, %v5404
      %v5437 = vpack.c.b16 %v5405, %v5405
      %v5438 = vpack.c.b16 %v5406, %v5406
      %v5439 = vpack.c.b16 %v5407, %v5407
      %v5440 = vpack.c.b16 %v5408, %v5408
      %v5441 = vpack.c.b16 %v5409, %v5409
      %v5442 = vpack.c.b16 %v5410, %v5410
      %v5443 = vpack.c.b16 %v5411, %v5411
      %v5444 = vpack.c.b16 %v5412, %v5412
      %v5445 = vpack.c.b16 %v5413, %v5413
      %v5446 = vpack.c.b16 %v5414, %v5414
      %v5447 = vpack.c.b16 %v5415, %v5415
      %v5448 = vpack.c.b16 %v5416, %v5416
      %5481 = vst [vmem:[%s202] sm:$0xf] %v5417
      %5482 = vst [vmem:[%s202 + $0x4] sm:$0xf] %v5418
      %5483 = vst [vmem:[%s202 + $0x8] sm:$0xf] %v5419
      %5484 = vst [vmem:[%s202 + $0xc] sm:$0xf] %v5420
      %5485 = vst [vmem:[%s202 + $0x10] sm:$0xf] %v5421
      %5486 = vst [vmem:[%s202 + $0x14] sm:$0xf] %v5422
      %5487 = vst [vmem:[%s202 + $0x18] sm:$0xf] %v5423
      %5488 = vst [vmem:[%s202 + $0x1c] sm:$0xf] %v5424
      %5489 = vst [vmem:[%s202 + $0x20] sm:$0xf] %v5425
      %5490 = vst [vmem:[%s202 + $0x24] sm:$0xf] %v5426
      %5491 = vst [vmem:[%s202 + $0x28] sm:$0xf] %v5427
      %5492 = vst [vmem:[%s202 + $0x2c] sm:$0xf] %v5428
      %5493 = vst [vmem:[%s202 + $0x30] sm:$0xf] %v5429
      %5494 = vst [vmem:[%s202 + $0x34] sm:$0xf] %v5430
      %5495 = vst [vmem:[%s202 + $0x38] sm:$0xf] %v5431
      %5496 = vst [vmem:[%s202 + $0x3c] sm:$0xf] %v5432
      %5497 = vst [vmem:[%s202 + $0x40] sm:$0xf] %v5433
      %5498 = vst [vmem:[%s202 + $0x44] sm:$0xf] %v5434
      %5499 = vst [vmem:[%s202 + $0x48] sm:$0xf] %v5435
      %5500 = vst [vmem:[%s202 + $0x4c] sm:$0xf] %v5436
      %5501 = vst [vmem:[%s202 + $0x50] sm:$0xf] %v5437
      %5502 = vst [vmem:[%s202 + $0x54] sm:$0xf] %v5438
      %5503 = vst [vmem:[%s202 + $0x58] sm:$0xf] %v5439
      %5504 = vst [vmem:[%s202 + $0x5c] sm:$0xf] %v5440
      %5505 = vst [vmem:[%s202 + $0x60] sm:$0xf] %v5441
      %5506 = vst [vmem:[%s202 + $0x64] sm:$0xf] %v5442
      %5507 = vst [vmem:[%s202 + $0x68] sm:$0xf] %v5443
      %5508 = vst [vmem:[%s202 + $0x6c] sm:$0xf] %v5444
      %5509 = vst [vmem:[%s202 + $0x70] sm:$0xf] %v5445
      %5510 = vst [vmem:[%s202 + $0x74] sm:$0xf] %v5446
      %5511 = vst [vmem:[%s202 + $0x78] sm:$0xf] %v5447
      %5512 = vst [vmem:[%s202 + $0x7c] sm:$0xf] %v5448
      %s5513 = smul.u32 16, %s21
      %p5514 = scmp.lt.s32.totalorder %s20, 1
      %s5515 = scalar_select %p5514, %s20, 1
      %p5516 = scmp.lt.s32.totalorder %s5513, 15
      %s5517 = scalar_select %p5516, %s5513, 15
      %s5518 = smul.addr %s5517, 2
      %s5519 = smul.addr %s5515, 32
      %s5520 = sadd.s32 %s5518, %s5519
      %s5521 = smul.addr %s5520, 4
      %s5522 = scalar_lea.vmem %s5, %s5521
      // Predicated region
      $region117: #{double_conv.1} parent=35 // pred_check
        %p5523 = pneg %p132
      $region118: #{double_conv.1} parent=35 // pred_check_branch
        %5525 = sbr.rel (%p5523) target = $region120
      $region119: #{double_conv.1} parent=35 // pred_region
        %s5526 = smul.u32 16, %s21
      $region120: #{double_conv.1} parent=35 // pred_fallthru
        _
    $region36: #{double_conv.1} parent=5 // pred_fallthru
      _
    %p5527 = scmp.le.s32.totalorder 2, %s11
    // Predicated region
    $region121: #{double_conv.1} parent=5 // pred_check
      %p5528 = pneg %p5527
    $region122: #{double_conv.1} parent=5 // pred_check_branch
      %5530 = sbr.rel (%p5528) target = $region124
    $region123: #{double_conv.1} parent=5 // pred_region
      %s5531 = ssub.s32 %s11, 2
      // Predicated region
      $region125: #{double_conv.1} parent=123 // pred_check
        %p5532 = pneg %p138
      $region126: #{double_conv.1} parent=123 // pred_check_branch
        %5534 = sbr.rel (%p5532) target = $region128
      $region127: #{double_conv.1} parent=123 // pred_region
        %s5535 = smul.u32 16, %s23
        %p5536 = scmp.lt.s32.totalorder %s22, 1
        %s5537 = scalar_select %p5536, %s22, 1
        %p5538 = scmp.lt.s32.totalorder %s5535, 15
        %s5539 = scalar_select %p5538, %s5535, 15
        %s5540 = smul.addr %s5539, 2
        %s5541 = smul.addr %s5537, 32
        %s5542 = sadd.s32 %s5540, %s5541
        %s5543 = smul.addr %s5542, 4
        %s5544 = scalar_lea.vmem %s5, %s5543
      $region128: #{double_conv.1} parent=123 // pred_fallthru
        _
    $region124: #{double_conv.1} parent=5 // pred_fallthru
      _
  $region6: #{double_conv.1} parent=0 // loop_footer
    %s15 = sadd.s32 1, %s11
  $region7: #{double_conv.1} parent=0 // loop_footer_branch
    %10 = sbr.rel target = $region3
  $region8: #{double_conv.1} parent=0 // loop_exit
    _
  %5545 = vsyncmov [#allocation4]
  %s5546 = vpop.sfrf %5545
  %p5547 = scmp.eq.s32.totalorder %s5546, 0
  %p5548 = pneg %p5547
  %5550 = shalt.err (%p5548)
  %s5551 = scalar_lea.sflag [#allocation4], 1
  %5552 = vsyncmov %s5551
  %s5553 = vpop.sfrf %5552
  %p5554 = scmp.eq.s32.totalorder %s5553, 0
  %p5555 = pneg %p5554
  %5557 = shalt.err (%p5555)

</llo_original>
